<compile_context>
chip_gen: v6e
topology: v6e:2x2x1
jax: 0.10.0
libtpu: 0.0.40
codegen_flags: <defaults>
</compile_context>

<pallas_src>
import functools

import jax
import jax.numpy as jnp
from jax.experimental import pallas as pl
from jax.experimental.pallas import tpu as pltpu

_TILE_M = 256
_VMEM_LIMIT = 32 * 1024 * 1024


def _round_up(x, m):
    return ((x + m - 1) // m) * m


# ----------------------------- Pallas kernels -----------------------------

def _matmul_bias_act_kernel(a_ref, w_ref, b_ref, o_ref, *, apply_relu):
    # bf16 x bf16 -> f32 accumulate on the MXU; bias/ReLU epilogue in f32.
    acc = jnp.dot(a_ref[...], w_ref[...], preferred_element_type=jnp.float32)
    acc = acc + b_ref[...]                     # (1, Np) broadcast over (tile_m, Np)
    if apply_relu:
        acc = jnp.maximum(acc, 0.0)
    o_ref[...] = acc.astype(o_ref.dtype)


def matmul_bias_act(a, w_packed, b_packed, *, apply_relu, out_dtype=jnp.bfloat16):
    """Fused (M,K)@(Kp,Np) + bias (+ReLU). Weights/bias are pre-packed & padded.

    Returns the PADDED (Mp, Np) result; the caller slices [:M, :N].
    """
    M, K = a.shape
    Kp, Np = w_packed.shape
    if K != Kp:                                 # zero-pad K to packed (multiple of 8)
        a = jnp.pad(a, ((0, 0), (0, Kp - K)))
    a = a.astype(jnp.bfloat16)

    if M > _TILE_M:
        Mp = _round_up(M, _TILE_M)
        tile_m = _TILE_M
    else:
        Mp = _round_up(M, 8)
        tile_m = Mp
    if Mp != M:
        a = jnp.pad(a, ((0, Mp - M), (0, 0)))
    grid_m = Mp // tile_m

    kernel = functools.partial(_matmul_bias_act_kernel, apply_relu=apply_relu)
    out_bytes = jnp.dtype(out_dtype).itemsize
    return pl.pallas_call(
        kernel,
        out_shape=jax.ShapeDtypeStruct((Mp, Np), out_dtype),
        grid=(grid_m,),
        in_specs=[
            pl.BlockSpec((tile_m, Kp), lambda i: (i, 0)),
            pl.BlockSpec((Kp, Np), lambda i: (0, 0)),
            pl.BlockSpec((1, Np), lambda i: (0, 0)),
        ],
        out_specs=pl.BlockSpec((tile_m, Np), lambda i: (i, 0)),
        compiler_params=pltpu.CompilerParams(
            dimension_semantics=("parallel",),
            vmem_limit_bytes=_VMEM_LIMIT),
        cost_estimate=pl.CostEstimate(
            flops=2 * Mp * Np * Kp,
            transcendentals=0,
            bytes_accessed=Mp * Kp * 2 + Kp * Np * 2 + Np * 4 + Mp * Np * out_bytes),
    )(a, w_packed, b_packed)


def _latent_kernel(flat_ref, wh_ref, bh_ref, eps_ref, w2_ref, b2_ref,
                   mu_ref, logvar_ref, dec_ref, *, lp):
    # [mu | log_var] = flat @ [W1 | Wlv] + [b1 | blv]
    h = jnp.dot(flat_ref[...], wh_ref[...], preferred_element_type=jnp.float32)
    h = h + bh_ref[...]
    mu = h[:, :lp]
    logvar = h[:, lp:]
    # reparameterize: z = mu + eps * exp(0.5 * log_var)
    z = mu + eps_ref[...] * jnp.exp(0.5 * logvar)
    # fc2: dec = z @ W2 + b2   (padded rows of W2 are zero, so padding is inert)
    dec = jnp.dot(z.astype(jnp.bfloat16), w2_ref[...],
                  preferred_element_type=jnp.float32)
    dec = dec + b2_ref[...]
    mu_ref[...] = mu
    logvar_ref[...] = logvar
    dec_ref[...] = dec.astype(dec_ref.dtype)


def latent_fused(flat, heads_packed, eps_padded, fc2_packed, lp):
    """Fused fc1 + fc_log_var + reparameterize + fc2 in a single Pallas call."""
    wh, bh = heads_packed        # (K, 2*lp) bf16, (1, 2*lp) f32
    w2, b2 = fc2_packed          # (lp, Fp) bf16, (1, Fp) f32
    B, K = flat.shape
    Fp = w2.shape[1]
    kernel = functools.partial(_latent_kernel, lp=lp)
    return pl.pallas_call(
        kernel,
        out_shape=(jax.ShapeDtypeStruct((B, lp), jnp.float32),
                   jax.ShapeDtypeStruct((B, lp), jnp.float32),
                   jax.ShapeDtypeStruct((B, Fp), jnp.bfloat16)),
        grid=(1,),
        in_specs=[
            pl.BlockSpec((B, K), lambda i: (0, 0)),
            pl.BlockSpec((K, 2 * lp), lambda i: (0, 0)),
            pl.BlockSpec((1, 2 * lp), lambda i: (0, 0)),
            pl.BlockSpec((B, lp), lambda i: (0, 0)),
            pl.BlockSpec((lp, Fp), lambda i: (0, 0)),
            pl.BlockSpec((1, Fp), lambda i: (0, 0)),
        ],
        out_specs=(pl.BlockSpec((B, lp), lambda i: (0, 0)),
                   pl.BlockSpec((B, lp), lambda i: (0, 0)),
                   pl.BlockSpec((B, Fp), lambda i: (0, 0))),
        compiler_params=pltpu.CompilerParams(
            dimension_semantics=("arbitrary",),
            vmem_limit_bytes=_VMEM_LIMIT),
        cost_estimate=pl.CostEstimate(
            flops=2 * B * (2 * lp) * K + 2 * B * Fp * lp,
            transcendentals=B * lp,
            bytes_accessed=B * K * 2 + K * 2 * lp * 2 + lp * Fp * 2
                           + B * (2 * lp + lp + Fp) * 4),
    )(flat.astype(jnp.bfloat16), wh, bh, eps_padded, w2, b2)


# ---------------------- conv layers (JAX glue + kernel) ---------------------

def _im2col(x, kh, kw, stride):
    # x: (B, H, W, C) already padded
    B, H, W, C = x.shape
    oh = (H - kh) // stride + 1
    ow = (W - kw) // stride + 1
    cols = []
    for i in range(kh):
        for j in range(kw):
            cols.append(x[:, i:i + stride * oh:stride, j:j + stride * ow:stride, :])
    cols = jnp.stack(cols, axis=3)                   # (B, oh, ow, kh*kw, C)
    return cols.reshape(B * oh * ow, kh * kw * C), oh, ow


def conv2d_nhwc(x, w_packed, b_packed, *, kh, kw, cout, stride, padding,
                apply_relu, out_dtype):
    B = x.shape[0]
    xp = jnp.pad(x, ((0, 0), (padding, padding), (padding, padding), (0, 0)))
    cols, oh, ow = _im2col(xp, kh, kw, stride)
    out = matmul_bias_act(cols, w_packed, b_packed,
                          apply_relu=apply_relu, out_dtype=out_dtype)
    out = out[:B * oh * ow, :cout]
    return out.reshape(B, oh, ow, cout)


def conv_transpose2d_nhwc(x, w_packed, b_packed, *, cout, apply_relu, out_dtype):
    """ConvTranspose2d(k=3, stride=2, padding=1, output_padding=1) via the
    sub-pixel decomposition: 4 output-parity groups x 4 input taps fused into
    one lane-dense matmul (no zero-dilation, no structural-zero MXU work)."""
    B, H, W, cin = x.shape
    xp = jnp.pad(x, ((0, 0), (0, 1), (0, 1), (0, 0)))     # high-edge zero tap
    c00 = xp[:, :H, :W, :]          # in[a, b]
    c01 = xp[:, :H, 1:H + 1, :] if False else xp[:, :H, 1:W + 1, :]  # in[a, b+1]
    c10 = xp[:, 1:H + 1, :W, :]     # in[a+1, b]
    c11 = xp[:, 1:H + 1, 1:W + 1, :]  # in[a+1, b+1]
    cols = jnp.concatenate([c00, c01, c10, c11], axis=-1).reshape(B * H * W, 4 * cin)
    out = matmul_bias_act(cols, w_packed, b_packed,
                          apply_relu=apply_relu, out_dtype=out_dtype)
    out = out[:B * H * W, :4 * cout].reshape(B, H, W, 2, 2, cout)
    # groups ordered [ee, eo, oe, oo] = (dy, dx); interleave into (2H, 2W)
    out = out.transpose(0, 1, 3, 2, 4, 5).reshape(B, 2 * H, 2 * W, cout)
    return out


# ------------------------------- weight packing ------------------------------

def _pack_matmul(wmat, bias):
    """(K,N) f32 weight + (N,) bias -> (Kp,Np) bf16 weight, (1,Np) f32 bias."""
    K, N = wmat.shape
    Kp = _round_up(K, 8)
    Np = _round_up(N, 128)
    wp = jnp.zeros((Kp, Np), jnp.bfloat16).at[:K, :N].set(wmat.astype(jnp.bfloat16))
    bp = jnp.zeros((1, Np), jnp.float32).at[0, :N].set(bias.astype(jnp.float32))
    return wp, bp


def pack_conv(w, b):
    # w: (Cout, Cin, KH, KW) PyTorch Conv2d layout
    cout, cin, kh, kw = w.shape
    wmat = jnp.transpose(w, (2, 3, 1, 0)).reshape(kh * kw * cin, cout)
    return _pack_matmul(wmat, b)


def pack_conv_transpose(w, b):
    # w: (Cin, Cout, 3, 3) PyTorch ConvTranspose2d layout; stride=2, p=1, op=1
    cin, cout, kh, kw = w.shape
    assert kh == 3 and kw == 3
    wkk = jnp.transpose(w, (2, 3, 0, 1))          # (ky, kx, Cin, Cout)
    Z = jnp.zeros((cin, cout), w.dtype)
    # rows: input taps [in[a,b], in[a,b+1], in[a+1,b], in[a+1,b+1]]
    # cols: output parities [ee, eo, oe, oo]
    wbig = jnp.block([
        [wkk[1, 1], wkk[1, 2], wkk[2, 1], wkk[2, 2]],
        [Z,         wkk[1, 0], Z,         wkk[2, 0]],
        [Z,         Z,         wkk[0, 1], wkk[0, 2]],
        [Z,         Z,         Z,         wkk[0, 0]],
    ])                                             # (4*Cin, 4*Cout)
    return _pack_matmul(wbig, jnp.tile(b, 4))


def pack_params(params, latent_pad):
    packed = {}
    packed["encoder"] = [pack_conv(w, b) for (w, b) in params["encoder"]]
    packed["decoder"] = [pack_conv_transpose(w, b) for (w, b) in params["decoder"]]

    w1, b1 = params["fc1"]                         # (F, L)
    wv, bv = params["fc_log_var"]
    F, L = w1.shape
    wh = jnp.zeros((F, 2 * latent_pad), jnp.bfloat16)
    wh = wh.at[:, :L].set(w1.astype(jnp.bfloat16))
    wh = wh.at[:, latent_pad:latent_pad + L].set(wv.astype(jnp.bfloat16))
    bh = jnp.zeros((1, 2 * latent_pad), jnp.float32)
    bh = bh.at[0, :L].set(b1)
    bh = bh.at[0, latent_pad:latent_pad + L].set(bv)
    packed["heads"] = (wh, bh)

    w2, b2 = params["fc2"]                         # (L, F)
    Fp = _round_up(F, 128)
    w2p = jnp.zeros((latent_pad, Fp), jnp.bfloat16).at[:L, :F].set(w2.astype(jnp.bfloat16))
    b2p = jnp.zeros((1, Fp), jnp.float32).at[0, :F].set(b2)
    packed["fc2"] = (w2p, b2p)
    return packed


# ------------------------------- parameters ----------------------------------

def init_params(key, layers_encoder, latent_dim, flattened_size, k=3):
    keys = iter(jax.random.split(key, 64))
    params = {}

    enc = []
    for cin, cout in layers_encoder:
        s = 1.0 / jnp.sqrt(cin * k * k)
        w = jax.random.uniform(next(keys), (cout, cin, k, k), jnp.float32, -s, s)
        b = jax.random.uniform(next(keys), (cout,), jnp.float32, -s, s)
        enc.append((w, b))
    params["encoder"] = enc

    def linear(din, dout):
        s = 1.0 / jnp.sqrt(din)
        w = jax.random.uniform(next(keys), (din, dout), jnp.float32, -s, s)
        b = jax.random.uniform(next(keys), (dout,), jnp.float32, -s, s)
        return (w, b)

    params["fc1"] = linear(flattened_size, latent_dim)
    params["fc_log_var"] = linear(flattened_size, latent_dim)
    params["fc2"] = linear(latent_dim, flattened_size)

    dec = []
    for in_ch, out_ch in layers_encoder[::-1]:
        ct_in, ct_out = out_ch, in_ch               # ConvTranspose2d(out_ch, in_ch)
        s = 1.0 / jnp.sqrt(ct_in * k * k)
        w = jax.random.uniform(next(keys), (ct_in, ct_out, k, k), jnp.float32, -s, s)
        b = jax.random.uniform(next(keys), (ct_out,), jnp.float32, -s, s)
        dec.append((w, b))
    params["decoder"] = dec
    return params


# ------------------------------- VAE forward ---------------------------------

def vae_forward(packed, x_nchw, eps_padded, *, layers_encoder, a_ch, spatial,
                latent_dim, latent_pad):
    B = x_nchw.shape[0]
    x = jnp.transpose(x_nchw, (0, 2, 3, 1)).astype(jnp.bfloat16)   # NCHW -> NHWC

    # encoder: Conv2d (+ ReLU, Dropout=identity) except after the last conv
    n_enc = len(layers_encoder)
    for i, ((_, cout), (wp, bp)) in enumerate(zip(layers_encoder, packed["encoder"])):
        x = conv2d_nhwc(x, wp, bp, kh=3, kw=3, cout=cout, stride=2, padding=1,
                        apply_relu=(i != n_enc - 1), out_dtype=jnp.bfloat16)

    # flatten with PyTorch NCHW ordering
    flat = jnp.transpose(x, (0, 3, 1, 2)).reshape(B, -1)
    flattened = a_ch * spatial * spatial

    mu_p, logvar_p, dec_p = latent_fused(flat, packed["heads"], eps_padded,
                                         packed["fc2"], latent_pad)
    mu = mu_p[:, :latent_dim]
    log_var = logvar_p[:, :latent_dim]

    y = dec_p[:, :flattened].reshape(B, a_ch, spatial, spatial)
    y = jnp.transpose(y, (0, 2, 3, 1))                               # NCHW -> NHWC

    dec_layers = layers_encoder[::-1]
    n_dec = len(dec_layers)
    for i, ((in_ch, _), (wp, bp)) in enumerate(zip(dec_layers, packed["decoder"])):
        last = (i == n_dec - 1)
        y = conv_transpose2d_nhwc(
            y, wp, bp, cout=in_ch, apply_relu=not last,
            out_dtype=jnp.float32 if last else jnp.bfloat16)

    decoded = jnp.transpose(y, (0, 3, 1, 2))                         # NHWC -> NCHW
    return decoded, mu, log_var


# ---------------------------------- main --------------------------------------

if __name__ == "__main__":
    key = jax.random.PRNGKey(0)
    layers_encoder = [(3, 16), (16, 32), (32, 64), (64, 128)]
    input_dim = 32            # small, but 4 stride-2 convs as in the spec
    latent_dim = 6
    B = 2

    a_ch = layers_encoder[-1][1]                        # 128
    b_div = layers_encoder[0][1]                        # 16
    spatial = input_dim // b_div                        # PyTorch formula
    assert spatial == input_dim // (2 ** len(layers_encoder)), \
        "flattened-size formula only matches for this channel list"
    flattened = a_ch * spatial * spatial                # 512
    latent_pad = _round_up(latent_dim, 128)             # 128

    kp, kx, keps = jax.random.split(key, 3)
    params = init_params(kp, layers_encoder, latent_dim, flattened)
    packed = pack_params(params, latent_pad)            # pre-pack once, outside jit

    x = jax.random.normal(kx, (B, layers_encoder[0][0], input_dim, input_dim),
                          jnp.float32)
    eps = jax.random.normal(keps, (B, latent_dim), jnp.float32)   # randn_like(std)
    eps_padded = jnp.zeros((B, latent_pad), jnp.float32).at[:, :latent_dim].set(eps)

    fwd = jax.jit(functools.partial(
        vae_forward, layers_encoder=tuple(layers_encoder), a_ch=a_ch,
        spatial=spatial, latent_dim=latent_dim, latent_pad=latent_pad))

    decoded, mu, log_var = fwd(packed, x, eps_padded)
    jax.block_until_ready((decoded, mu, log_var))

    assert decoded.shape == (B, layers_encoder[0][0], input_dim, input_dim)
    assert mu.shape == (B, latent_dim) and log_var.shape == (B, latent_dim)
    assert bool(jnp.all(jnp.isfinite(decoded)))
    print("KERNEL_OK")
</pallas_src>

<mosaic_0001>
module attributes {stable_mosaic.version = 11 : i64} {
  func.func @_matmul_bias_act_kernel(%arg0: i32, %arg1: memref<256x32xbf16, #tpu.memory_space<vmem>>, %arg2: memref<32x128xbf16, #tpu.memory_space<vmem>>, %arg3: memref<1x128xf32, #tpu.memory_space<vmem>>, %arg4: memref<256x128xbf16, #tpu.memory_space<vmem>>) attributes {dimension_semantics = [#tpu.dimension_semantics<parallel>], iteration_bounds = array<i64: 2>, scalar_prefetch = 0 : i64, scratch_operands = 0 : i64, tpu.core_type = #tpu.core_type<tc>, window_params = [{transform_indices = @transform_0, window_bounds = array<i64: 256, 32>}, {pipeline_mode = #tpu.pipeline_mode<synchronous>, transform_indices = @transform_1, window_bounds = array<i64: 32, 128>}, {pipeline_mode = #tpu.pipeline_mode<synchronous>, transform_indices = @transform_2, window_bounds = array<i64: 1, 128>}, {transform_indices = @transform_3, window_bounds = array<i64: 256, 128>}]} {
    %c0 = arith.constant 0 : index
    %c0_0 = arith.constant 0 : index
    %0 = vector.load %arg1[%c0, %c0_0] : memref<256x32xbf16, #tpu.memory_space<vmem>>, vector<256x32xbf16>
    %c0_1 = arith.constant 0 : index
    %c0_2 = arith.constant 0 : index
    %1 = vector.load %arg2[%c0_1, %c0_2] : memref<32x128xbf16, #tpu.memory_space<vmem>>, vector<32x128xbf16>
    %cst = arith.constant dense<0.000000e+00> : vector<256x128xf32>
    %2 = tpu.matmul %0, %1, %cst {dimension_numbers = #tpu.dot_dimension_numbers<[1], [0], [0], [1], [0, 0, 1, 1], [], []>} : vector<256x32xbf16>, vector<32x128xbf16>, vector<256x128xf32> -> vector<256x128xf32>
    %c0_3 = arith.constant 0 : index
    %c0_4 = arith.constant 0 : index
    %3 = vector.load %arg3[%c0_3, %c0_4] : memref<1x128xf32, #tpu.memory_space<vmem>>, vector<1x128xf32>
    %4 = vector.broadcast %3 : vector<1x128xf32> to vector<256x128xf32>
    %5 = arith.addf %2, %4 : vector<256x128xf32>
    %cst_5 = arith.constant 0.000000e+00 : f32
    %6 = vector.broadcast %cst_5 : f32 to vector<256x128xf32>
    %7 = arith.maximumf %5, %6 : vector<256x128xf32>
    %8 = arith.truncf %7 : vector<256x128xf32> to vector<256x128xbf16>
    %c0_6 = arith.constant 0 : index
    %c0_7 = arith.constant 0 : index
    %9 = vector.load %arg4[%c0_6, %c0_7] : memref<256x128xbf16, #tpu.memory_space<vmem>>, vector<256x128xbf16>
    tpu.vector_store %arg4[%c0_6, %c0_7], %8 {strides = array<i32>} : memref<256x128xbf16, #tpu.memory_space<vmem>>, vector<256x128xbf16>,
    return
  }
  func.func @transform_0(%arg0: i32) -> (i32, i32) {
    %c0_i32 = arith.constant 0 : i32
    %c0_i32_0 = arith.constant 0 : i32
    return %arg0, %c0_i32 : i32, i32
  }
  func.func @transform_1(%arg0: i32) -> (i32, i32) {
    %c0_i32 = arith.constant 0 : i32
    %c0_i32_0 = arith.constant 0 : i32
    %c0_i32_1 = arith.constant 0 : i32
    return %c0_i32, %c0_i32_0 : i32, i32
  }
  func.func @transform_2(%arg0: i32) -> (i32, i32) {
    %c0_i32 = arith.constant 0 : i32
    %c0_i32_0 = arith.constant 0 : i32
    %c0_i32_1 = arith.constant 0 : i32
    return %c0_i32, %c0_i32_0 : i32, i32
  }
  func.func @transform_3(%arg0: i32) -> (i32, i32) {
    %c0_i32 = arith.constant 0 : i32
    %c0_i32_0 = arith.constant 0 : i32
    return %arg0, %c0_i32 : i32, i32
  }
}

module attributes {stable_mosaic.version = 11 : i64} {
  func.func @_matmul_bias_act_kernel(%arg0: i32, %arg1: memref<128x144xbf16, #tpu.memory_space<vmem>>, %arg2: memref<144x128xbf16, #tpu.memory_space<vmem>>, %arg3: memref<1x128xf32, #tpu.memory_space<vmem>>, %arg4: memref<128x128xbf16, #tpu.memory_space<vmem>>) attributes {dimension_semantics = [#tpu.dimension_semantics<parallel>], iteration_bounds = array<i64: 1>, scalar_prefetch = 0 : i64, scratch_operands = 0 : i64, tpu.core_type = #tpu.core_type<tc>, window_params = [{transform_indices = @transform_0, window_bounds = array<i64: 128, 144>}, {pipeline_mode = #tpu.pipeline_mode<synchronous>, transform_indices = @transform_1, window_bounds = array<i64: 144, 128>}, {pipeline_mode = #tpu.pipeline_mode<synchronous>, transform_indices = @transform_2, window_bounds = array<i64: 1, 128>}, {transform_indices = @transform_3, window_bounds = array<i64: 128, 128>}]} {
    %c0 = arith.constant 0 : index
    %c0_0 = arith.constant 0 : index
    %0 = vector.load %arg1[%c0, %c0_0] : memref<128x144xbf16, #tpu.memory_space<vmem>>, vector<128x144xbf16>
    %c0_1 = arith.constant 0 : index
    %c0_2 = arith.constant 0 : index
    %1 = vector.load %arg2[%c0_1, %c0_2] : memref<144x128xbf16, #tpu.memory_space<vmem>>, vector<144x128xbf16>
    %cst = arith.constant dense<0.000000e+00> : vector<128x128xf32>
    %2 = tpu.matmul %0, %1, %cst {dimension_numbers = #tpu.dot_dimension_numbers<[1], [0], [0], [1], [0, 0, 1, 1], [], []>} : vector<128x144xbf16>, vector<144x128xbf16>, vector<128x128xf32> -> vector<128x128xf32>
    %c0_3 = arith.constant 0 : index
    %c0_4 = arith.constant 0 : index
    %3 = vector.load %arg3[%c0_3, %c0_4] : memref<1x128xf32, #tpu.memory_space<vmem>>, vector<1x128xf32>
    %4 = vector.broadcast %3 : vector<1x128xf32> to vector<128x128xf32>
    %5 = arith.addf %2, %4 : vector<128x128xf32>
    %cst_5 = arith.constant 0.000000e+00 : f32
    %6 = vector.broadcast %cst_5 : f32 to vector<128x128xf32>
    %7 = arith.maximumf %5, %6 : vector<128x128xf32>
    %8 = arith.truncf %7 : vector<128x128xf32> to vector<128x128xbf16>
    %c0_6 = arith.constant 0 : index
    %c0_7 = arith.constant 0 : index
    %9 = vector.load %arg4[%c0_6, %c0_7] : memref<128x128xbf16, #tpu.memory_space<vmem>>, vector<128x128xbf16>
    tpu.vector_store %arg4[%c0_6, %c0_7], %8 {strides = array<i32>} : memref<128x128xbf16, #tpu.memory_space<vmem>>, vector<128x128xbf16>,
    return
  }
  func.func @transform_0(%arg0: i32) -> (i32, i32) {
    %c0_i32 = arith.constant 0 : i32
    %c0_i32_0 = arith.constant 0 : i32
    return %arg0, %c0_i32 : i32, i32
  }
  func.func @transform_1(%arg0: i32) -> (i32, i32) {
    %c0_i32 = arith.constant 0 : i32
    %c0_i32_0 = arith.constant 0 : i32
    %c0_i32_1 = arith.constant 0 : i32
    return %c0_i32, %c0_i32_0 : i32, i32
  }
  func.func @transform_2(%arg0: i32) -> (i32, i32) {
    %c0_i32 = arith.constant 0 : i32
    %c0_i32_0 = arith.constant 0 : i32
    %c0_i32_1 = arith.constant 0 : i32
    return %c0_i32, %c0_i32_0 : i32, i32
  }
  func.func @transform_3(%arg0: i32) -> (i32, i32) {
    %c0_i32 = arith.constant 0 : i32
    %c0_i32_0 = arith.constant 0 : i32
    return %arg0, %c0_i32 : i32, i32
  }
}

module attributes {stable_mosaic.version = 11 : i64} {
  func.func @_matmul_bias_act_kernel(%arg0: i32, %arg1: memref<32x288xbf16, #tpu.memory_space<vmem>>, %arg2: memref<288x128xbf16, #tpu.memory_space<vmem>>, %arg3: memref<1x128xf32, #tpu.memory_space<vmem>>, %arg4: memref<32x128xbf16, #tpu.memory_space<vmem>>) attributes {dimension_semantics = [#tpu.dimension_semantics<parallel>], iteration_bounds = array<i64: 1>, scalar_prefetch = 0 : i64, scratch_operands = 0 : i64, tpu.core_type = #tpu.core_type<tc>, window_params = [{transform_indices = @transform_0, window_bounds = array<i64: 32, 288>}, {pipeline_mode = #tpu.pipeline_mode<synchronous>, transform_indices = @transform_1, window_bounds = array<i64: 288, 128>}, {pipeline_mode = #tpu.pipeline_mode<synchronous>, transform_indices = @transform_2, window_bounds = array<i64: 1, 128>}, {transform_indices = @transform_3, window_bounds = array<i64: 32, 128>}]} {
    %c0 = arith.constant 0 : index
    %c0_0 = arith.constant 0 : index
    %0 = vector.load %arg1[%c0, %c0_0] : memref<32x288xbf16, #tpu.memory_space<vmem>>, vector<32x288xbf16>
    %c0_1 = arith.constant 0 : index
    %c0_2 = arith.constant 0 : index
    %1 = vector.load %arg2[%c0_1, %c0_2] : memref<288x128xbf16, #tpu.memory_space<vmem>>, vector<288x128xbf16>
    %cst = arith.constant dense<0.000000e+00> : vector<32x128xf32>
    %2 = tpu.matmul %0, %1, %cst {dimension_numbers = #tpu.dot_dimension_numbers<[1], [0], [0], [1], [0, 0, 1, 1], [], []>} : vector<32x288xbf16>, vector<288x128xbf16>, vector<32x128xf32> -> vector<32x128xf32>
    %c0_3 = arith.constant 0 : index
    %c0_4 = arith.constant 0 : index
    %3 = vector.load %arg3[%c0_3, %c0_4] : memref<1x128xf32, #tpu.memory_space<vmem>>, vector<1x128xf32>
    %4 = vector.broadcast %3 : vector<1x128xf32> to vector<32x128xf32>
    %5 = arith.addf %2, %4 : vector<32x128xf32>
    %cst_5 = arith.constant 0.000000e+00 : f32
    %6 = vector.broadcast %cst_5 : f32 to vector<32x128xf32>
    %7 = arith.maximumf %5, %6 : vector<32x128xf32>
    %8 = arith.truncf %7 : vector<32x128xf32> to vector<32x128xbf16>
    %c0_6 = arith.constant 0 : index
    %c0_7 = arith.constant 0 : index
    %9 = vector.load %arg4[%c0_6, %c0_7] : memref<32x128xbf16, #tpu.memory_space<vmem>>, vector<32x128xbf16>
    tpu.vector_store %arg4[%c0_6, %c0_7], %8 {strides = array<i32>} : memref<32x128xbf16, #tpu.memory_space<vmem>>, vector<32x128xbf16>,
    return
  }
  func.func @transform_0(%arg0: i32) -> (i32, i32) {
    %c0_i32 = arith.constant 0 : i32
    %c0_i32_0 = arith.constant 0 : i32
    return %arg0, %c0_i32 : i32, i32
  }
  func.func @transform_1(%arg0: i32) -> (i32, i32) {
    %c0_i32 = arith.constant 0 : i32
    %c0_i32_0 = arith.constant 0 : i32
    %c0_i32_1 = arith.constant 0 : i32
    return %c0_i32, %c0_i32_0 : i32, i32
  }
  func.func @transform_2(%arg0: i32) -> (i32, i32) {
    %c0_i32 = arith.constant 0 : i32
    %c0_i32_0 = arith.constant 0 : i32
    %c0_i32_1 = arith.constant 0 : i32
    return %c0_i32, %c0_i32_0 : i32, i32
  }
  func.func @transform_3(%arg0: i32) -> (i32, i32) {
    %c0_i32 = arith.constant 0 : i32
    %c0_i32_0 = arith.constant 0 : i32
    return %arg0, %c0_i32 : i32, i32
  }
}

module attributes {stable_mosaic.version = 11 : i64} {
  func.func @_matmul_bias_act_kernel(%arg0: i32, %arg1: memref<8x576xbf16, #tpu.memory_space<vmem>>, %arg2: memref<576x128xbf16, #tpu.memory_space<vmem>>, %arg3: memref<1x128xf32, #tpu.memory_space<vmem>>, %arg4: memref<8x128xbf16, #tpu.memory_space<vmem>>) attributes {dimension_semantics = [#tpu.dimension_semantics<parallel>], iteration_bounds = array<i64: 1>, scalar_prefetch = 0 : i64, scratch_operands = 0 : i64, tpu.core_type = #tpu.core_type<tc>, window_params = [{transform_indices = @transform_0, window_bounds = array<i64: 8, 576>}, {pipeline_mode = #tpu.pipeline_mode<synchronous>, transform_indices = @transform_1, window_bounds = array<i64: 576, 128>}, {pipeline_mode = #tpu.pipeline_mode<synchronous>, transform_indices = @transform_2, window_bounds = array<i64: 1, 128>}, {transform_indices = @transform_3, window_bounds = array<i64: 8, 128>}]} {
    %c0 = arith.constant 0 : index
    %c0_0 = arith.constant 0 : index
    %0 = vector.load %arg1[%c0, %c0_0] : memref<8x576xbf16, #tpu.memory_space<vmem>>, vector<8x576xbf16>
    %c0_1 = arith.constant 0 : index
    %c0_2 = arith.constant 0 : index
    %1 = vector.load %arg2[%c0_1, %c0_2] : memref<576x128xbf16, #tpu.memory_space<vmem>>, vector<576x128xbf16>
    %cst = arith.constant dense<0.000000e+00> : vector<8x128xf32>
    %2 = tpu.matmul %0, %1, %cst {dimension_numbers = #tpu.dot_dimension_numbers<[1], [0], [0], [1], [0, 0, 1, 1], [], []>} : vector<8x576xbf16>, vector<576x128xbf16>, vector<8x128xf32> -> vector<8x128xf32>
    %c0_3 = arith.constant 0 : index
    %c0_4 = arith.constant 0 : index
    %3 = vector.load %arg3[%c0_3, %c0_4] : memref<1x128xf32, #tpu.memory_space<vmem>>, vector<1x128xf32>
    %4 = vector.broadcast %3 : vector<1x128xf32> to vector<8x128xf32>
    %5 = arith.addf %2, %4 : vector<8x128xf32>
    %6 = arith.truncf %5 : vector<8x128xf32> to vector<8x128xbf16>
    %c0_5 = arith.constant 0 : index
    %c0_6 = arith.constant 0 : index
    %7 = vector.load %arg4[%c0_5, %c0_6] : memref<8x128xbf16, #tpu.memory_space<vmem>>, vector<8x128xbf16>
    tpu.vector_store %arg4[%c0_5, %c0_6], %6 {strides = array<i32>} : memref<8x128xbf16, #tpu.memory_space<vmem>>, vector<8x128xbf16>,
    return
  }
  func.func @transform_0(%arg0: i32) -> (i32, i32) {
    %c0_i32 = arith.constant 0 : i32
    %c0_i32_0 = arith.constant 0 : i32
    return %arg0, %c0_i32 : i32, i32
  }
  func.func @transform_1(%arg0: i32) -> (i32, i32) {
    %c0_i32 = arith.constant 0 : i32
    %c0_i32_0 = arith.constant 0 : i32
    %c0_i32_1 = arith.constant 0 : i32
    return %c0_i32, %c0_i32_0 : i32, i32
  }
  func.func @transform_2(%arg0: i32) -> (i32, i32) {
    %c0_i32 = arith.constant 0 : i32
    %c0_i32_0 = arith.constant 0 : i32
    %c0_i32_1 = arith.constant 0 : i32
    return %c0_i32, %c0_i32_0 : i32, i32
  }
  func.func @transform_3(%arg0: i32) -> (i32, i32) {
    %c0_i32 = arith.constant 0 : i32
    %c0_i32_0 = arith.constant 0 : i32
    return %arg0, %c0_i32 : i32, i32
  }
}

module attributes {stable_mosaic.version = 11 : i64} {
  func.func @_latent_kernel(%arg0: i32, %arg1: memref<2x512xbf16, #tpu.memory_space<vmem>>, %arg2: memref<512x256xbf16, #tpu.memory_space<vmem>>, %arg3: memref<1x256xf32, #tpu.memory_space<vmem>>, %arg4: memref<2x128xf32, #tpu.memory_space<vmem>>, %arg5: memref<128x512xbf16, #tpu.memory_space<vmem>>, %arg6: memref<1x512xf32, #tpu.memory_space<vmem>>, %arg7: memref<2x128xf32, #tpu.memory_space<vmem>>, %arg8: memref<2x128xf32, #tpu.memory_space<vmem>>, %arg9: memref<2x512xbf16, #tpu.memory_space<vmem>>) attributes {dimension_semantics = [#tpu.dimension_semantics<arbitrary>], iteration_bounds = array<i64: 1>, scalar_prefetch = 0 : i64, scratch_operands = 0 : i64, tpu.core_type = #tpu.core_type<tc>, window_params = [{pipeline_mode = #tpu.pipeline_mode<synchronous>, transform_indices = @transform_0, window_bounds = array<i64: 2, 512>}, {pipeline_mode = #tpu.pipeline_mode<synchronous>, transform_indices = @transform_1, window_bounds = array<i64: 512, 256>}, {pipeline_mode = #tpu.pipeline_mode<synchronous>, transform_indices = @transform_2, window_bounds = array<i64: 1, 256>}, {pipeline_mode = #tpu.pipeline_mode<synchronous>, transform_indices = @transform_3, window_bounds = array<i64: 2, 128>}, {pipeline_mode = #tpu.pipeline_mode<synchronous>, transform_indices = @transform_4, window_bounds = array<i64: 128, 512>}, {pipeline_mode = #tpu.pipeline_mode<synchronous>, transform_indices = @transform_5, window_bounds = array<i64: 1, 512>}, {pipeline_mode = #tpu.pipeline_mode<synchronous>, transform_indices = @transform_6, window_bounds = array<i64: 2, 128>}, {pipeline_mode = #tpu.pipeline_mode<synchronous>, transform_indices = @transform_7, window_bounds = array<i64: 2, 128>}, {pipeline_mode = #tpu.pipeline_mode<synchronous>, transform_indices = @transform_8, window_bounds = array<i64: 2, 512>}]} {
    %c0 = arith.constant 0 : index
    %c0_0 = arith.constant 0 : index
    %0 = vector.load %arg1[%c0, %c0_0] : memref<2x512xbf16, #tpu.memory_space<vmem>>, vector<2x512xbf16>
    %c0_1 = arith.constant 0 : index
    %c0_2 = arith.constant 0 : index
    %1 = vector.load %arg2[%c0_1, %c0_2] : memref<512x256xbf16, #tpu.memory_space<vmem>>, vector<512x256xbf16>
    %cst = arith.constant dense<0.000000e+00> : vector<2x256xf32>
    %2 = tpu.matmul %0, %1, %cst {dimension_numbers = #tpu.dot_dimension_numbers<[1], [0], [0], [1], [0, 0, 1, 1], [], []>} : vector<2x512xbf16>, vector<512x256xbf16>, vector<2x256xf32> -> vector<2x256xf32>
    %c0_3 = arith.constant 0 : index
    %c0_4 = arith.constant 0 : index
    %3 = vector.load %arg3[%c0_3, %c0_4] : memref<1x256xf32, #tpu.memory_space<vmem>>, vector<1x256xf32>
    %4 = vector.broadcast %3 : vector<1x256xf32> to vector<2x256xf32>
    %5 = arith.addf %2, %4 : vector<2x256xf32>
    %6 = vector.extract_strided_slice %5 {offsets = [0, 0], sizes = [2, 128], strides = [1, 1]} : vector<2x256xf32> to vector<2x128xf32>
    %7 = vector.extract_strided_slice %5 {offsets = [0, 128], sizes = [2, 128], strides = [1, 1]} : vector<2x256xf32> to vector<2x128xf32>
    %c0_5 = arith.constant 0 : index
    %c0_6 = arith.constant 0 : index
    %8 = vector.load %arg4[%c0_5, %c0_6] : memref<2x128xf32, #tpu.memory_space<vmem>>, vector<2x128xf32>
    %cst_7 = arith.constant 5.000000e-01 : f32
    %9 = vector.broadcast %cst_7 : f32 to vector<2x128xf32>
    %10 = arith.mulf %9, %7 : vector<2x128xf32>
    %11 = math.exp %10 : vector<2x128xf32>
    %12 = arith.mulf %8, %11 : vector<2x128xf32>
    %13 = arith.addf %6, %12 : vector<2x128xf32>
    %14 = arith.truncf %13 : vector<2x128xf32> to vector<2x128xbf16>
    %c0_8 = arith.constant 0 : index
    %c0_9 = arith.constant 0 : index
    %15 = vector.load %arg5[%c0_8, %c0_9] : memref<128x512xbf16, #tpu.memory_space<vmem>>, vector<128x512xbf16>
    %cst_10 = arith.constant dense<0.000000e+00> : vector<2x512xf32>
    %16 = tpu.matmul %14, %15, %cst_10 {dimension_numbers = #tpu.dot_dimension_numbers<[1], [0], [0], [1], [0, 0, 1, 1], [], []>} : vector<2x128xbf16>, vector<128x512xbf16>, vector<2x512xf32> -> vector<2x512xf32>
    %c0_11 = arith.constant 0 : index
    %c0_12 = arith.constant 0 : index
    %17 = vector.load %arg6[%c0_11, %c0_12] : memref<1x512xf32, #tpu.memory_space<vmem>>, vector<1x512xf32>
    %18 = vector.broadcast %17 : vector<1x512xf32> to vector<2x512xf32>
    %19 = arith.addf %16, %18 : vector<2x512xf32>
    %c0_13 = arith.constant 0 : index
    %c0_14 = arith.constant 0 : index
    %20 = vector.load %arg7[%c0_13, %c0_14] : memref<2x128xf32, #tpu.memory_space<vmem>>, vector<2x128xf32>
    tpu.vector_store %arg7[%c0_13, %c0_14], %6 {strides = array<i32>} : memref<2x128xf32, #tpu.memory_space<vmem>>, vector<2x128xf32>,
    %c0_15 = arith.constant 0 : index
    %c0_16 = arith.constant 0 : index
    %21 = vector.load %arg8[%c0_15, %c0_16] : memref<2x128xf32, #tpu.memory_space<vmem>>, vector<2x128xf32>
    tpu.vector_store %arg8[%c0_15, %c0_16], %7 {strides = array<i32>} : memref<2x128xf32, #tpu.memory_space<vmem>>, vector<2x128xf32>,
    %22 = arith.truncf %19 : vector<2x512xf32> to vector<2x512xbf16>
    %c0_17 = arith.constant 0 : index
    %c0_18 = arith.constant 0 : index
    %23 = vector.load %arg9[%c0_17, %c0_18] : memref<2x512xbf16, #tpu.memory_space<vmem>>, vector<2x512xbf16>
    tpu.vector_store %arg9[%c0_17, %c0_18], %22 {strides = array<i32>} : memref<2x512xbf16, #tpu.memory_space<vmem>>, vector<2x512xbf16>,
    return
  }
  func.func @transform_0(%arg0: i32) -> (i32, i32) {
    %c0_i32 = arith.constant 0 : i32
    %c0_i32_0 = arith.constant 0 : i32
    %c0_i32_1 = arith.constant 0 : i32
    return %c0_i32, %c0_i32_0 : i32, i32
  }
  func.func @transform_1(%arg0: i32) -> (i32, i32) {
    %c0_i32 = arith.constant 0 : i32
    %c0_i32_0 = arith.constant 0 : i32
    %c0_i32_1 = arith.constant 0 : i32
    return %c0_i32, %c0_i32_0 : i32, i32
  }
  func.func @transform_2(%arg0: i32) -> (i32, i32) {
    %c0_i32 = arith.constant 0 : i32
    %c0_i32_0 = arith.constant 0 : i32
    %c0_i32_1 = arith.constant 0 : i32
    return %c0_i32, %c0_i32_0 : i32, i32
  }
  func.func @transform_3(%arg0: i32) -> (i32, i32) {
    %c0_i32 = arith.constant 0 : i32
    %c0_i32_0 = arith.constant 0 : i32
    %c0_i32_1 = arith.constant 0 : i32
    return %c0_i32, %c0_i32_0 : i32, i32
  }
  func.func @transform_4(%arg0: i32) -> (i32, i32) {
    %c0_i32 = arith.constant 0 : i32
    %c0_i32_0 = arith.constant 0 : i32
    %c0_i32_1 = arith.constant 0 : i32
    return %c0_i32, %c0_i32_0 : i32, i32
  }
  func.func @transform_5(%arg0: i32) -> (i32, i32) {
    %c0_i32 = arith.constant 0 : i32
    %c0_i32_0 = arith.constant 0 : i32
    %c0_i32_1 = arith.constant 0 : i32
    return %c0_i32, %c0_i32_0 : i32, i32
  }
  func.func @transform_6(%arg0: i32) -> (i32, i32) {
    %c0_i32 = arith.constant 0 : i32
    %c0_i32_0 = arith.constant 0 : i32
    %c0_i32_1 = arith.constant 0 : i32
    return %c0_i32, %c0_i32_0 : i32, i32
  }
  func.func @transform_7(%arg0: i32) -> (i32, i32) {
    %c0_i32 = arith.constant 0 : i32
    %c0_i32_0 = arith.constant 0 : i32
    %c0_i32_1 = arith.constant 0 : i32
    return %c0_i32, %c0_i32_0 : i32, i32
  }
  func.func @transform_8(%arg0: i32) -> (i32, i32) {
    %c0_i32 = arith.constant 0 : i32
    %c0_i32_0 = arith.constant 0 : i32
    %c0_i32_1 = arith.constant 0 : i32
    return %c0_i32, %c0_i32_0 : i32, i32
  }
}

module attributes {stable_mosaic.version = 11 : i64} {
  func.func @_matmul_bias_act_kernel(%arg0: i32, %arg1: memref<8x512xbf16, #tpu.memory_space<vmem>>, %arg2: memref<512x256xbf16, #tpu.memory_space<vmem>>, %arg3: memref<1x256xf32, #tpu.memory_space<vmem>>, %arg4: memref<8x256xbf16, #tpu.memory_space<vmem>>) attributes {dimension_semantics = [#tpu.dimension_semantics<parallel>], iteration_bounds = array<i64: 1>, scalar_prefetch = 0 : i64, scratch_operands = 0 : i64, tpu.core_type = #tpu.core_type<tc>, window_params = [{transform_indices = @transform_0, window_bounds = array<i64: 8, 512>}, {pipeline_mode = #tpu.pipeline_mode<synchronous>, transform_indices = @transform_1, window_bounds = array<i64: 512, 256>}, {pipeline_mode = #tpu.pipeline_mode<synchronous>, transform_indices = @transform_2, window_bounds = array<i64: 1, 256>}, {transform_indices = @transform_3, window_bounds = array<i64: 8, 256>}]} {
    %c0 = arith.constant 0 : index
    %c0_0 = arith.constant 0 : index
    %0 = vector.load %arg1[%c0, %c0_0] : memref<8x512xbf16, #tpu.memory_space<vmem>>, vector<8x512xbf16>
    %c0_1 = arith.constant 0 : index
    %c0_2 = arith.constant 0 : index
    %1 = vector.load %arg2[%c0_1, %c0_2] : memref<512x256xbf16, #tpu.memory_space<vmem>>, vector<512x256xbf16>
    %cst = arith.constant dense<0.000000e+00> : vector<8x256xf32>
    %2 = tpu.matmul %0, %1, %cst {dimension_numbers = #tpu.dot_dimension_numbers<[1], [0], [0], [1], [0, 0, 1, 1], [], []>} : vector<8x512xbf16>, vector<512x256xbf16>, vector<8x256xf32> -> vector<8x256xf32>
    %c0_3 = arith.constant 0 : index
    %c0_4 = arith.constant 0 : index
    %3 = vector.load %arg3[%c0_3, %c0_4] : memref<1x256xf32, #tpu.memory_space<vmem>>, vector<1x256xf32>
    %4 = vector.broadcast %3 : vector<1x256xf32> to vector<8x256xf32>
    %5 = arith.addf %2, %4 : vector<8x256xf32>
    %cst_5 = arith.constant 0.000000e+00 : f32
    %6 = vector.broadcast %cst_5 : f32 to vector<8x256xf32>
    %7 = arith.maximumf %5, %6 : vector<8x256xf32>
    %8 = arith.truncf %7 : vector<8x256xf32> to vector<8x256xbf16>
    %c0_6 = arith.constant 0 : index
    %c0_7 = arith.constant 0 : index
    %9 = vector.load %arg4[%c0_6, %c0_7] : memref<8x256xbf16, #tpu.memory_space<vmem>>, vector<8x256xbf16>
    tpu.vector_store %arg4[%c0_6, %c0_7], %8 {strides = array<i32>} : memref<8x256xbf16, #tpu.memory_space<vmem>>, vector<8x256xbf16>,
    return
  }
  func.func @transform_0(%arg0: i32) -> (i32, i32) {
    %c0_i32 = arith.constant 0 : i32
    %c0_i32_0 = arith.constant 0 : i32
    return %arg0, %c0_i32 : i32, i32
  }
  func.func @transform_1(%arg0: i32) -> (i32, i32) {
    %c0_i32 = arith.constant 0 : i32
    %c0_i32_0 = arith.constant 0 : i32
    %c0_i32_1 = arith.constant 0 : i32
    return %c0_i32, %c0_i32_0 : i32, i32
  }
  func.func @transform_2(%arg0: i32) -> (i32, i32) {
    %c0_i32 = arith.constant 0 : i32
    %c0_i32_0 = arith.constant 0 : i32
    %c0_i32_1 = arith.constant 0 : i32
    return %c0_i32, %c0_i32_0 : i32, i32
  }
  func.func @transform_3(%arg0: i32) -> (i32, i32) {
    %c0_i32 = arith.constant 0 : i32
    %c0_i32_0 = arith.constant 0 : i32
    return %arg0, %c0_i32 : i32, i32
  }
}

module attributes {stable_mosaic.version = 11 : i64} {
  func.func @_matmul_bias_act_kernel(%arg0: i32, %arg1: memref<32x256xbf16, #tpu.memory_space<vmem>>, %arg2: memref<256x128xbf16, #tpu.memory_space<vmem>>, %arg3: memref<1x128xf32, #tpu.memory_space<vmem>>, %arg4: memref<32x128xbf16, #tpu.memory_space<vmem>>) attributes {dimension_semantics = [#tpu.dimension_semantics<parallel>], iteration_bounds = array<i64: 1>, scalar_prefetch = 0 : i64, scratch_operands = 0 : i64, tpu.core_type = #tpu.core_type<tc>, window_params = [{transform_indices = @transform_0, window_bounds = array<i64: 32, 256>}, {pipeline_mode = #tpu.pipeline_mode<synchronous>, transform_indices = @transform_1, window_bounds = array<i64: 256, 128>}, {pipeline_mode = #tpu.pipeline_mode<synchronous>, transform_indices = @transform_2, window_bounds = array<i64: 1, 128>}, {transform_indices = @transform_3, window_bounds = array<i64: 32, 128>}]} {
    %c0 = arith.constant 0 : index
    %c0_0 = arith.constant 0 : index
    %0 = vector.load %arg1[%c0, %c0_0] : memref<32x256xbf16, #tpu.memory_space<vmem>>, vector<32x256xbf16>
    %c0_1 = arith.constant 0 : index
    %c0_2 = arith.constant 0 : index
    %1 = vector.load %arg2[%c0_1, %c0_2] : memref<256x128xbf16, #tpu.memory_space<vmem>>, vector<256x128xbf16>
    %cst = arith.constant dense<0.000000e+00> : vector<32x128xf32>
    %2 = tpu.matmul %0, %1, %cst {dimension_numbers = #tpu.dot_dimension_numbers<[1], [0], [0], [1], [0, 0, 1, 1], [], []>} : vector<32x256xbf16>, vector<256x128xbf16>, vector<32x128xf32> -> vector<32x128xf32>
    %c0_3 = arith.constant 0 : index
    %c0_4 = arith.constant 0 : index
    %3 = vector.load %arg3[%c0_3, %c0_4] : memref<1x128xf32, #tpu.memory_space<vmem>>, vector<1x128xf32>
    %4 = vector.broadcast %3 : vector<1x128xf32> to vector<32x128xf32>
    %5 = arith.addf %2, %4 : vector<32x128xf32>
    %cst_5 = arith.constant 0.000000e+00 : f32
    %6 = vector.broadcast %cst_5 : f32 to vector<32x128xf32>
    %7 = arith.maximumf %5, %6 : vector<32x128xf32>
    %8 = arith.truncf %7 : vector<32x128xf32> to vector<32x128xbf16>
    %c0_6 = arith.constant 0 : index
    %c0_7 = arith.constant 0 : index
    %9 = vector.load %arg4[%c0_6, %c0_7] : memref<32x128xbf16, #tpu.memory_space<vmem>>, vector<32x128xbf16>
    tpu.vector_store %arg4[%c0_6, %c0_7], %8 {strides = array<i32>} : memref<32x128xbf16, #tpu.memory_space<vmem>>, vector<32x128xbf16>,
    return
  }
  func.func @transform_0(%arg0: i32) -> (i32, i32) {
    %c0_i32 = arith.constant 0 : i32
    %c0_i32_0 = arith.constant 0 : i32
    return %arg0, %c0_i32 : i32, i32
  }
  func.func @transform_1(%arg0: i32) -> (i32, i32) {
    %c0_i32 = arith.constant 0 : i32
    %c0_i32_0 = arith.constant 0 : i32
    %c0_i32_1 = arith.constant 0 : i32
    return %c0_i32, %c0_i32_0 : i32, i32
  }
  func.func @transform_2(%arg0: i32) -> (i32, i32) {
    %c0_i32 = arith.constant 0 : i32
    %c0_i32_0 = arith.constant 0 : i32
    %c0_i32_1 = arith.constant 0 : i32
    return %c0_i32, %c0_i32_0 : i32, i32
  }
  func.func @transform_3(%arg0: i32) -> (i32, i32) {
    %c0_i32 = arith.constant 0 : i32
    %c0_i32_0 = arith.constant 0 : i32
    return %arg0, %c0_i32 : i32, i32
  }
}

module attributes {stable_mosaic.version = 11 : i64} {
  func.func @_matmul_bias_act_kernel(%arg0: i32, %arg1: memref<128x128xbf16, #tpu.memory_space<vmem>>, %arg2: memref<128x128xbf16, #tpu.memory_space<vmem>>, %arg3: memref<1x128xf32, #tpu.memory_space<vmem>>, %arg4: memref<128x128xbf16, #tpu.memory_space<vmem>>) attributes {dimension_semantics = [#tpu.dimension_semantics<parallel>], iteration_bounds = array<i64: 1>, scalar_prefetch = 0 : i64, scratch_operands = 0 : i64, tpu.core_type = #tpu.core_type<tc>, window_params = [{transform_indices = @transform_0, window_bounds = array<i64: 128, 128>}, {pipeline_mode = #tpu.pipeline_mode<synchronous>, transform_indices = @transform_1, window_bounds = array<i64: 128, 128>}, {pipeline_mode = #tpu.pipeline_mode<synchronous>, transform_indices = @transform_2, window_bounds = array<i64: 1, 128>}, {transform_indices = @transform_3, window_bounds = array<i64: 128, 128>}]} {
    %c0 = arith.constant 0 : index
    %c0_0 = arith.constant 0 : index
    %0 = vector.load %arg1[%c0, %c0_0] : memref<128x128xbf16, #tpu.memory_space<vmem>>, vector<128x128xbf16>
    %c0_1 = arith.constant 0 : index
    %c0_2 = arith.constant 0 : index
    %1 = vector.load %arg2[%c0_1, %c0_2] : memref<128x128xbf16, #tpu.memory_space<vmem>>, vector<128x128xbf16>
    %cst = arith.constant dense<0.000000e+00> : vector<128x128xf32>
    %2 = tpu.matmul %0, %1, %cst {dimension_numbers = #tpu.dot_dimension_numbers<[1], [0], [0], [1], [0, 0, 1, 1], [], []>} : vector<128x128xbf16>, vector<128x128xbf16>, vector<128x128xf32> -> vector<128x128xf32>
    %c0_3 = arith.constant 0 : index
    %c0_4 = arith.constant 0 : index
    %3 = vector.load %arg3[%c0_3, %c0_4] : memref<1x128xf32, #tpu.memory_space<vmem>>, vector<1x128xf32>
    %4 = vector.broadcast %3 : vector<1x128xf32> to vector<128x128xf32>
    %5 = arith.addf %2, %4 : vector<128x128xf32>
    %cst_5 = arith.constant 0.000000e+00 : f32
    %6 = vector.broadcast %cst_5 : f32 to vector<128x128xf32>
    %7 = arith.maximumf %5, %6 : vector<128x128xf32>
    %8 = arith.truncf %7 : vector<128x128xf32> to vector<128x128xbf16>
    %c0_6 = arith.constant 0 : index
    %c0_7 = arith.constant 0 : index
    %9 = vector.load %arg4[%c0_6, %c0_7] : memref<128x128xbf16, #tpu.memory_space<vmem>>, vector<128x128xbf16>
    tpu.vector_store %arg4[%c0_6, %c0_7], %8 {strides = array<i32>} : memref<128x128xbf16, #tpu.memory_space<vmem>>, vector<128x128xbf16>,
    return
  }
  func.func @transform_0(%arg0: i32) -> (i32, i32) {
    %c0_i32 = arith.constant 0 : i32
    %c0_i32_0 = arith.constant 0 : i32
    return %arg0, %c0_i32 : i32, i32
  }
  func.func @transform_1(%arg0: i32) -> (i32, i32) {
    %c0_i32 = arith.constant 0 : i32
    %c0_i32_0 = arith.constant 0 : i32
    %c0_i32_1 = arith.constant 0 : i32
    return %c0_i32, %c0_i32_0 : i32, i32
  }
  func.func @transform_2(%arg0: i32) -> (i32, i32) {
    %c0_i32 = arith.constant 0 : i32
    %c0_i32_0 = arith.constant 0 : i32
    %c0_i32_1 = arith.constant 0 : i32
    return %c0_i32, %c0_i32_0 : i32, i32
  }
  func.func @transform_3(%arg0: i32) -> (i32, i32) {
    %c0_i32 = arith.constant 0 : i32
    %c0_i32_0 = arith.constant 0 : i32
    return %arg0, %c0_i32 : i32, i32
  }
}

module attributes {stable_mosaic.version = 11 : i64} {
  func.func @_matmul_bias_act_kernel(%arg0: i32, %arg1: memref<256x64xbf16, #tpu.memory_space<vmem>>, %arg2: memref<64x128xbf16, #tpu.memory_space<vmem>>, %arg3: memref<1x128xf32, #tpu.memory_space<vmem>>, %arg4: memref<256x128xf32, #tpu.memory_space<vmem>>) attributes {dimension_semantics = [#tpu.dimension_semantics<parallel>], iteration_bounds = array<i64: 2>, scalar_prefetch = 0 : i64, scratch_operands = 0 : i64, tpu.core_type = #tpu.core_type<tc>, window_params = [{transform_indices = @transform_0, window_bounds = array<i64: 256, 64>}, {pipeline_mode = #tpu.pipeline_mode<synchronous>, transform_indices = @transform_1, window_bounds = array<i64: 64, 128>}, {pipeline_mode = #tpu.pipeline_mode<synchronous>, transform_indices = @transform_2, window_bounds = array<i64: 1, 128>}, {transform_indices = @transform_3, window_bounds = array<i64: 256, 128>}]} {
    %c0 = arith.constant 0 : index
    %c0_0 = arith.constant 0 : index
    %0 = vector.load %arg1[%c0, %c0_0] : memref<256x64xbf16, #tpu.memory_space<vmem>>, vector<256x64xbf16>
    %c0_1 = arith.constant 0 : index
    %c0_2 = arith.constant 0 : index
    %1 = vector.load %arg2[%c0_1, %c0_2] : memref<64x128xbf16, #tpu.memory_space<vmem>>, vector<64x128xbf16>
    %cst = arith.constant dense<0.000000e+00> : vector<256x128xf32>
    %2 = tpu.matmul %0, %1, %cst {dimension_numbers = #tpu.dot_dimension_numbers<[1], [0], [0], [1], [0, 0, 1, 1], [], []>} : vector<256x64xbf16>, vector<64x128xbf16>, vector<256x128xf32> -> vector<256x128xf32>
    %c0_3 = arith.constant 0 : index
    %c0_4 = arith.constant 0 : index
    %3 = vector.load %arg3[%c0_3, %c0_4] : memref<1x128xf32, #tpu.memory_space<vmem>>, vector<1x128xf32>
    %4 = vector.broadcast %3 : vector<1x128xf32> to vector<256x128xf32>
    %5 = arith.addf %2, %4 : vector<256x128xf32>
    %c0_5 = arith.constant 0 : index
    %c0_6 = arith.constant 0 : index
    %6 = vector.load %arg4[%c0_5, %c0_6] : memref<256x128xf32, #tpu.memory_space<vmem>>, vector<256x128xf32>
    tpu.vector_store %arg4[%c0_5, %c0_6], %5 {strides = array<i32>} : memref<256x128xf32, #tpu.memory_space<vmem>>, vector<256x128xf32>,
    return
  }
  func.func @transform_0(%arg0: i32) -> (i32, i32) {
    %c0_i32 = arith.constant 0 : i32
    %c0_i32_0 = arith.constant 0 : i32
    return %arg0, %c0_i32 : i32, i32
  }
  func.func @transform_1(%arg0: i32) -> (i32, i32) {
    %c0_i32 = arith.constant 0 : i32
    %c0_i32_0 = arith.constant 0 : i32
    %c0_i32_1 = arith.constant 0 : i32
    return %c0_i32, %c0_i32_0 : i32, i32
  }
  func.func @transform_2(%arg0: i32) -> (i32, i32) {
    %c0_i32 = arith.constant 0 : i32
    %c0_i32_0 = arith.constant 0 : i32
    %c0_i32_1 = arith.constant 0 : i32
    return %c0_i32, %c0_i32_0 : i32, i32
  }
  func.func @transform_3(%arg0: i32) -> (i32, i32) {
    %c0_i32 = arith.constant 0 : i32
    %c0_i32_0 = arith.constant 0 : i32
    return %arg0, %c0_i32 : i32, i32
  }
}

</mosaic_0001>

<llo_original>
// kernel: vae_forward.9
$region0: #{vae_forward.9}
  #allocation0 [shape = 'u32[]', space=smem, size = 0x4, offset = 0x4, fixed_abs, tag = 'smem constant byte address 0x4 - core index']
  #allocation1 [shape = 'u32[144,128]{1,0:T(1,128)}', space=vmem, size = 0x12000, scoped, tag = 'internal scratch']
  %s0 = inlined_call_operand.vmem [shape: bf16[512,32], index: 0, kind: input, shape index: {}]
  %s1 = inlined_call_operand.vmem [shape: bf16[32,128], index: 1, kind: input, shape index: {}]
  %s2 = inlined_call_operand.vmem [shape: f32[1,128], index: 2, kind: input, shape index: {}]
  %s3 = inlined_call_operand.vmem [shape: bf16[512,128], index: 3, kind: output, shape index: {}]
  %s4 = sld [smem:[#allocation0]]
  $region45: #{vae_forward.9} parent=0
    _
  %s6 = ssub.s32 1, %s4
  %s7 = scalar_select 0, %s6, %s4
  loop: start=0, step=1, limit=4
  $region2: #{vae_forward.9} parent=0 // loop_pre_header
    _
  $region3: #{vae_forward.9} parent=0 // loop_header
    %s9 = sphi 0, %s13
    %p10 = scmp.ge.s32.totalorder %s9, 4
    %s19 = sphi 0, %s21
    %s22 = sphi 0, %s19
    %s23 = sphi 0, %s22
    %s39 = sphi 0, %s23
    %s43 = sphi 0, %s43
    %s45 = sphi 0, %s43
    %s46 = sphi 0, %s45
    %s60 = sphi 0, %s46
    %s64 = sphi 0, %s64
    %s66 = sphi 0, %s64
    %s67 = sphi 0, %s66
    %s81 = sphi 0, %s67
    %s87 = sphi 0, %s89
    %s90 = sphi 0, %s87
    %s91 = sphi 0, %s90
    %s107 = sphi 0, %s91
  $region4: #{vae_forward.9} parent=0 // loop_header_branch
    %12 = sbr.rel (%p10) target = $region8
  $region5: #{vae_forward.9} parent=0 // loop_body
    %s14 = ssub.s32 %s9, 1
    %s15 = ssub.s32 %s9, 2
    %s16 = sadd.s32 %s9, 1
    %s17 = ssub.s32 %s9, %s16
    %p18 = scmp.eq.s32.totalorder %s17, 0
    %s20 = sadd.s32 %s19, 1
    %s21 = scalar_select %p18, %s19, %s20
    %p24 = pneg %p18
    %p25 = scmp.eq.s32.totalorder %s9, 1
    %p26 = por %p24, %p25
    %p27 = scmp.ne.s32.totalorder %s19, %s22
    %p28 = scmp.eq.s32.totalorder %s9, 0
    %p29 = por %p27, %p28
    %p30 = scmp.ne.s32.totalorder %s19, %s22
    %p31 = scmp.eq.s32.totalorder %s14, 1
    %p32 = por %p30, %p31
    %p33 = scmp.ne.s32.totalorder %s22, %s23
    %p34 = scmp.eq.s32.totalorder %s14, 0
    %p35 = por %p33, %p34
    %p36 = scmp.ne.s32.totalorder %s22, %s23
    %p37 = scmp.eq.s32.totalorder %s15, 1
    %p38 = por %p36, %p37
    %p40 = scmp.ne.s32.totalorder %s23, %s39
    %p41 = scmp.eq.s32.totalorder %s15, 0
    %p42 = por %p40, %p41
    %s44 = sadd.s32 %s43, 1
    %p47 = scmp.eq.s32.totalorder %s9, 1
    %p48 = scmp.ne.s32.totalorder %s43, %s45
    %p49 = scmp.eq.s32.totalorder %s9, 0
    %p50 = por %p48, %p49
    %p51 = scmp.ne.s32.totalorder %s43, %s45
    %p52 = scmp.eq.s32.totalorder %s14, 1
    %p53 = por %p51, %p52
    %p54 = scmp.ne.s32.totalorder %s45, %s46
    %p55 = scmp.eq.s32.totalorder %s14, 0
    %p56 = por %p54, %p55
    %p57 = scmp.ne.s32.totalorder %s45, %s46
    %p58 = scmp.eq.s32.totalorder %s15, 1
    %p59 = por %p57, %p58
    %p61 = scmp.ne.s32.totalorder %s46, %s60
    %p62 = scmp.eq.s32.totalorder %s15, 0
    %p63 = por %p61, %p62
    %s65 = sadd.s32 %s64, 1
    %p68 = scmp.eq.s32.totalorder %s9, 1
    %p69 = scmp.ne.s32.totalorder %s64, %s66
    %p70 = scmp.eq.s32.totalorder %s9, 0
    %p71 = por %p69, %p70
    %p72 = scmp.ne.s32.totalorder %s64, %s66
    %p73 = scmp.eq.s32.totalorder %s14, 1
    %p74 = por %p72, %p73
    %p75 = scmp.ne.s32.totalorder %s66, %s67
    %p76 = scmp.eq.s32.totalorder %s14, 0
    %p77 = por %p75, %p76
    %p78 = scmp.ne.s32.totalorder %s66, %s67
    %p79 = scmp.eq.s32.totalorder %s15, 1
    %p80 = por %p78, %p79
    %p82 = scmp.ne.s32.totalorder %s67, %s81
    %p83 = scmp.eq.s32.totalorder %s15, 0
    %p84 = por %p82, %p83
    %s85 = ssub.s32 %s9, %s16
    %p86 = scmp.eq.s32.totalorder %s85, 0
    %s88 = sadd.s32 %s87, 1
    %s89 = scalar_select %p86, %s87, %s88
    %p92 = pneg %p86
    %p93 = scmp.eq.s32.totalorder %s9, 1
    %p94 = por %p92, %p93
    %p95 = scmp.ne.s32.totalorder %s87, %s90
    %p96 = scmp.eq.s32.totalorder %s9, 0
    %p97 = por %p95, %p96
    %p98 = scmp.ne.s32.totalorder %s87, %s90
    %p99 = scmp.eq.s32.totalorder %s14, 1
    %p100 = por %p98, %p99
    %p101 = scmp.ne.s32.totalorder %s90, %s91
    %p102 = scmp.eq.s32.totalorder %s14, 0
    %p103 = por %p101, %p102
    %p104 = scmp.ne.s32.totalorder %s90, %s91
    %p105 = scmp.eq.s32.totalorder %s15, 1
    %p106 = por %p104, %p105
    %p108 = scmp.ne.s32.totalorder %s91, %s107
    %p109 = scmp.eq.s32.totalorder %s15, 0
    %p110 = por %p108, %p109
    %p111 = scmp.le.s32.totalorder 1, %s9
    %p112 = scmp.lt.s32.totalorder %s9, 3
    %p113 = pnand %p111, %p112
    %p114 = pneg %p113
    // Predicated region
    $region9: #{vae_forward.9} parent=5 // pred_check
      _
    $region10: #{vae_forward.9} parent=5 // pred_check_branch
      %116 = sbr.rel (%p113) target = $region12
    $region11: #{vae_forward.9} parent=5 // pred_region
      %s117 = ssub.s32 %s9, 1
      // Predicated region
      $region13: #{vae_forward.9} parent=11 // pred_check
        %p118 = pneg %p56
      $region14: #{vae_forward.9} parent=11 // pred_check_branch
        %120 = sbr.rel (%p118) target = $region16
      $region15: #{vae_forward.9} parent=11 // pred_region
        _
      $region16: #{vae_forward.9} parent=11 // pred_fallthru
        _
      // Predicated region
      $region17: #{vae_forward.9} parent=11 // pred_check
        %p121 = pneg %p77
      $region18: #{vae_forward.9} parent=11 // pred_check_branch
        %123 = sbr.rel (%p121) target = $region20
      $region19: #{vae_forward.9} parent=11 // pred_region
        _
      $region20: #{vae_forward.9} parent=11 // pred_fallthru
        _
    $region12: #{vae_forward.9} parent=5 // pred_fallthru
      _
    %p124 = scmp.lt.s32.totalorder %s9, 2
    // Predicated region
    $region21: #{vae_forward.9} parent=5 // pred_check
      %p125 = pneg %p124
    $region22: #{vae_forward.9} parent=5 // pred_check_branch
      %127 = sbr.rel (%p125) target = $region24
    $region23: #{vae_forward.9} parent=5 // pred_region
      // Predicated region
      $region25: #{vae_forward.9} parent=23 // pred_check
        %p128 = pneg %p29
      $region26: #{vae_forward.9} parent=23 // pred_check_branch
        %130 = sbr.rel (%p128) target = $region28
      $region27: #{vae_forward.9} parent=23 // pred_region
        %s131 = smul.u32 32, %s9
        %p132 = scmp.lt.s32.totalorder %s131, 63
        %s133 = scalar_select %p132, %s131, 63
        %s134 = smul.addr %s133, 4
        %s135 = scalar_lea.vmem %s0, %s134
        %s136 = smul.u32 32, %s9
      $region28: #{vae_forward.9} parent=23 // pred_fallthru
        _
    $region24: #{vae_forward.9} parent=5 // pred_fallthru
      _
    %p137 = scmp.le.s32.totalorder 1, %s9
    %p138 = scmp.lt.s32.totalorder %s9, 3
    %p139 = pnand %p137, %p138
    %p140 = pneg %p139
    // Predicated region
    $region29: #{vae_forward.9} parent=5 // pred_check
      _
    $region30: #{vae_forward.9} parent=5 // pred_check_branch
      %142 = sbr.rel (%p139) target = $region32
    $region31: #{vae_forward.9} parent=5 // pred_region
      %s143 = ssub.s32 %s9, 1
      %s144 = smul.u32 32, %s14
      %p145 = scmp.lt.s32.totalorder %s144, 63
      %s146 = scalar_select %p145, %s144, 63
      %s147 = smul.addr %s146, 4
      %s148 = scalar_lea.vmem %s0, %s147
      %p149 = pneg %p35
      %p150 = pneg %p32
      %p151 = pneg %p56
      %p152 = pneg %p53
      %p153 = pneg %p77
      %p154 = pneg %p74
      %p155 = pneg %p103
      %p156 = pneg %p100
      %s157 = smul.u32 32, %s14
      %p158 = scmp.lt.s32.totalorder %s157, 63
      %s159 = scalar_select %p158, %s157, 63
      %s160 = smul.addr %s159, 4
      %s161 = scalar_lea.vmem %s3, %s160
      %s162 = smul.u32 32, %s14
      %p163 = scmp.lt.s32.totalorder %s162, 63
      %s164 = scalar_select %p163, %s162, 63
      %s165 = smul.addr %s164, 4
      %s166 = scalar_lea.vmem %s0, %s165
      %s167 = smul.u32 32, %s14
      %s168 = smul.u32 32, %s14
      %p169 = scmp.lt.s32.totalorder %s168, 63
      %s170 = scalar_select %p169, %s168, 63
      %s171 = smul.addr %s170, 4
      %s172 = scalar_lea.vmem %s3, %s171
      %s173 = smul.u32 32, %s14
      %v175 = vld [vmem:[%s166] sm:$0xf]
      %v176 = vld [vmem:[%s166 + $0x4] sm:$0xf]
      %v177 = vld [vmem:[%s166 + $0x8] sm:$0xf]
      %v178 = vld [vmem:[%s166 + $0xc] sm:$0xf]
      %v179 = vld [vmem:[%s166 + $0x10] sm:$0xf]
      %v180 = vld [vmem:[%s166 + $0x14] sm:$0xf]
      %v181 = vld [vmem:[%s166 + $0x18] sm:$0xf]
      %v182 = vld [vmem:[%s166 + $0x1c] sm:$0xf]
      %v183 = vld [vmem:[%s166 + $0x20] sm:$0xf]
      %v184 = vld [vmem:[%s166 + $0x24] sm:$0xf]
      %v185 = vld [vmem:[%s166 + $0x28] sm:$0xf]
      %v186 = vld [vmem:[%s166 + $0x2c] sm:$0xf]
      %v187 = vld [vmem:[%s166 + $0x30] sm:$0xf]
      %v188 = vld [vmem:[%s166 + $0x34] sm:$0xf]
      %v189 = vld [vmem:[%s166 + $0x38] sm:$0xf]
      %v190 = vld [vmem:[%s166 + $0x3c] sm:$0xf]
      %v191 = vld [vmem:[%s166 + $0x40] sm:$0xf]
      %v192 = vld [vmem:[%s166 + $0x44] sm:$0xf]
      %v193 = vld [vmem:[%s166 + $0x48] sm:$0xf]
      %v194 = vld [vmem:[%s166 + $0x4c] sm:$0xf]
      %v195 = vld [vmem:[%s166 + $0x50] sm:$0xf]
      %v196 = vld [vmem:[%s166 + $0x54] sm:$0xf]
      %v197 = vld [vmem:[%s166 + $0x58] sm:$0xf]
      %v198 = vld [vmem:[%s166 + $0x5c] sm:$0xf]
      %v199 = vld [vmem:[%s166 + $0x60] sm:$0xf]
      %v200 = vld [vmem:[%s166 + $0x64] sm:$0xf]
      %v201 = vld [vmem:[%s166 + $0x68] sm:$0xf]
      %v202 = vld [vmem:[%s166 + $0x6c] sm:$0xf]
      %v203 = vld [vmem:[%s166 + $0x70] sm:$0xf]
      %v204 = vld [vmem:[%s166 + $0x74] sm:$0xf]
      %v205 = vld [vmem:[%s166 + $0x78] sm:$0xf]
      %v206 = vld [vmem:[%s166 + $0x7c] sm:$0xf]
      %v207 = vld [vmem:[%s1] sm:$0xf]
      %v208 = vld [vmem:[%s1 + $0x4] sm:$0xf]
      %v209 = vld [vmem:[%s1 + $0x8] sm:$0xf]
      %v210 = vld [vmem:[%s1 + $0xc] sm:$0xf]
      %v211 = vld [vmem:[%s2] sm:$0x1]
      %v213 = vlaneseq
      %v214 = vshrl.u32 %v213, 7
      %v215 = vsub.s32 0, %v214
      %v216 = vrot.slane %v211, %v215
      %v250 = vunpack.c.l.b16 %v175
      %v251 = vunpack.c.l.b16 %v176
      %v252 = vunpack.c.l.b16 %v177
      %v253 = vunpack.c.l.b16 %v178
      %v254 = vunpack.c.l.b16 %v179
      %v255 = vunpack.c.l.b16 %v180
      %v256 = vunpack.c.l.b16 %v181
      %v257 = vunpack.c.l.b16 %v182
      %v258 = vunpack.c.l.b16 %v183
      %v259 = vunpack.c.l.b16 %v184
      %v260 = vunpack.c.l.b16 %v185
      %v261 = vunpack.c.l.b16 %v186
      %v262 = vunpack.c.l.b16 %v187
      %v263 = vunpack.c.l.b16 %v188
      %v264 = vunpack.c.l.b16 %v189
      %v265 = vunpack.c.l.b16 %v190
      %v266 = vunpack.c.l.b16 %v191
      %v267 = vunpack.c.l.b16 %v192
      %v268 = vunpack.c.l.b16 %v193
      %v269 = vunpack.c.l.b16 %v194
      %v270 = vunpack.c.l.b16 %v195
      %v271 = vunpack.c.l.b16 %v196
      %v272 = vunpack.c.l.b16 %v197
      %v273 = vunpack.c.l.b16 %v198
      %v274 = vunpack.c.l.b16 %v199
      %v275 = vunpack.c.l.b16 %v200
      %v276 = vunpack.c.l.b16 %v201
      %v277 = vunpack.c.l.b16 %v202
      %v278 = vunpack.c.l.b16 %v203
      %v279 = vunpack.c.l.b16 %v204
      %v280 = vunpack.c.l.b16 %v205
      %v281 = vunpack.c.l.b16 %v206
      %v282 = vpack.c.b16 %v251, %v250
      %v283 = vpack.c.b16 %v253, %v252
      %v284 = vpack.c.b16 %v255, %v254
      %v285 = vpack.c.b16 %v257, %v256
      %v286 = vpack.c.b16 %v259, %v258
      %v287 = vpack.c.b16 %v261, %v260
      %v288 = vpack.c.b16 %v263, %v262
      %v289 = vpack.c.b16 %v265, %v264
      %v290 = vpack.c.b16 %v267, %v266
      %v291 = vpack.c.b16 %v269, %v268
      %v292 = vpack.c.b16 %v271, %v270
      %v293 = vpack.c.b16 %v273, %v272
      %v294 = vpack.c.b16 %v275, %v274
      %v295 = vpack.c.b16 %v277, %v276
      %v296 = vpack.c.b16 %v279, %v278
      %v297 = vpack.c.b16 %v281, %v280
      %v302 = vunpack.c.l.b16 %v207
      %v303 = vunpack.c.l.b16 %v208
      %v304 = vunpack.c.l.b16 %v209
      %v305 = vunpack.c.l.b16 %v210
      %v306 = vpack.c.b16 %v303, %v302
      %v307 = vpack.c.b16 %v305, %v304
      %vm310 = vcmask 261120
      %v312 = vsel %vm310, %v282, 0
      %v315 = vsel %vm310, %v283, 0
      %v318 = vsel %vm310, %v284, 0
      %v321 = vsel %vm310, %v285, 0
      %v324 = vsel %vm310, %v286, 0
      %v327 = vsel %vm310, %v287, 0
      %v330 = vsel %vm310, %v288, 0
      %v333 = vsel %vm310, %v289, 0
      %v336 = vsel %vm310, %v290, 0
      %v339 = vsel %vm310, %v291, 0
      %v342 = vsel %vm310, %v292, 0
      %v345 = vsel %vm310, %v293, 0
      %v348 = vsel %vm310, %v294, 0
      %v351 = vsel %vm310, %v295, 0
      %v354 = vsel %vm310, %v296, 0
      %v357 = vsel %vm310, %v297, 0
      %359 = vmatprep.subr.bf16.mxu0 0
      %360 = vmatpush1.bf16.msra.mxu0 0
      %361 = vmatprep.subr.bf16.mxu0 0
      %362 = vmatpush1.bf16.msra.mxu0 0
      %363 = vmatprep.subr.bf16.mxu0 0
      %364 = vmatpush1.bf16.msra.mxu0 0
      %365 = vmatprep.subr.bf16.mxu0 0
      %366 = vmatpush1.bf16.msra.mxu0 0
      %367 = vmatprep.subr.bf16.mxu0 0
      %368 = vmatpush1.bf16.msra.mxu0 0
      %369 = vmatprep.subr.bf16.mxu0 0
      %370 = vmatpush1.bf16.msra.mxu0 0
      %371 = vmatprep.subr.bf16.mxu0 0
      %372 = vmatpush1.bf16.msra.mxu0 %v307
      %373 = vmatprep.subr.bf16.mxu0 0
      %374 = vmatpush1.bf16.msra.mxu0 %v306
      %375 = vmatprep.subr.bf16.mxu0 0
      %376 = vmatpush2.bf16.msra.mxu0 0
      %377 = vmatprep.subr.bf16.mxu0 0
      %378 = vmatpush2.bf16.msra.mxu0 0
      %379 = vmatprep.subr.bf16.mxu0 0
      %380 = vmatpush2.bf16.msra.mxu0 0
      %381 = vmatprep.subr.bf16.mxu0 0
      %382 = vmatpush2.bf16.msra.mxu0 0
      %383 = vmatprep.subr.bf16.mxu0 0
      %384 = vmatpush2.bf16.msra.mxu0 0
      %385 = vmatprep.subr.bf16.mxu0 0
      %386 = vmatpush2.bf16.msra.mxu0 0
      %387 = vmatprep.subr.bf16.mxu0 0
      %388 = vmatpush2.bf16.msra.mxu0 0
      %389 = vmatprep.subr.bf16.mxu0 0
      %390 = vmatpush2.bf16.msra.mxu0 0
      %391 = vmatprep.mubr.bf16.mxu0 0
      %392 = vmatmul.mubr.bf16.gmra.mxu0 %v312
      %v393 = vpop.f32.mrf.mxu0
      %v394 = vadd.f32 %v216, %v393
      %v395 = vpop.f32.mrf.mxu0
      %v396 = vpop.f32.mrf.mxu0
      %v397 = vadd.f32 %v216, %v396
      %v398 = vpop.f32.mrf.mxu0
      %399 = vmatprep.mubr.bf16.mxu0 0
      %400 = vmatmul.mubr.bf16.gmra.mxu0 %v315
      %v401 = vpop.f32.mrf.mxu0
      %v402 = vadd.f32 %v216, %v401
      %v403 = vpop.f32.mrf.mxu0
      %v404 = vpop.f32.mrf.mxu0
      %v405 = vadd.f32 %v216, %v404
      %v406 = vpop.f32.mrf.mxu0
      %407 = vmatprep.mubr.bf16.mxu0 0
      %408 = vmatmul.mubr.bf16.gmra.mxu0 %v318
      %v409 = vpop.f32.mrf.mxu0
      %v410 = vadd.f32 %v216, %v409
      %v411 = vpop.f32.mrf.mxu0
      %v412 = vpop.f32.mrf.mxu0
      %v413 = vadd.f32 %v216, %v412
      %v414 = vpop.f32.mrf.mxu0
      %415 = vmatprep.mubr.bf16.mxu0 0
      %416 = vmatmul.mubr.bf16.gmra.mxu0 %v321
      %v417 = vpop.f32.mrf.mxu0
      %v418 = vadd.f32 %v216, %v417
      %v419 = vpop.f32.mrf.mxu0
      %v420 = vpop.f32.mrf.mxu0
      %v421 = vadd.f32 %v216, %v420
      %v422 = vpop.f32.mrf.mxu0
      %423 = vmatprep.mubr.bf16.mxu0 0
      %424 = vmatmul.mubr.bf16.gmra.mxu0 %v324
      %v425 = vpop.f32.mrf.mxu0
      %v426 = vadd.f32 %v216, %v425
      %v427 = vpop.f32.mrf.mxu0
      %v428 = vpop.f32.mrf.mxu0
      %v429 = vadd.f32 %v216, %v428
      %v430 = vpop.f32.mrf.mxu0
      %431 = vmatprep.mubr.bf16.mxu0 0
      %432 = vmatmul.mubr.bf16.gmra.mxu0 %v327
      %v433 = vpop.f32.mrf.mxu0
      %v434 = vadd.f32 %v216, %v433
      %v435 = vpop.f32.mrf.mxu0
      %v436 = vpop.f32.mrf.mxu0
      %v437 = vadd.f32 %v216, %v436
      %v438 = vpop.f32.mrf.mxu0
      %439 = vmatprep.mubr.bf16.mxu0 0
      %440 = vmatmul.mubr.bf16.gmra.mxu0 %v330
      %v441 = vpop.f32.mrf.mxu0
      %v442 = vadd.f32 %v216, %v441
      %v443 = vpop.f32.mrf.mxu0
      %v444 = vpop.f32.mrf.mxu0
      %v445 = vadd.f32 %v216, %v444
      %v446 = vpop.f32.mrf.mxu0
      %447 = vmatprep.mubr.bf16.mxu0 0
      %448 = vmatmul.mubr.bf16.gmra.mxu0 %v333
      %v449 = vpop.f32.mrf.mxu0
      %v450 = vadd.f32 %v216, %v449
      %v451 = vpop.f32.mrf.mxu0
      %v452 = vpop.f32.mrf.mxu0
      %v453 = vadd.f32 %v216, %v452
      %v454 = vpop.f32.mrf.mxu0
      %455 = vmatprep.mubr.bf16.mxu0 0
      %456 = vmatmul.mubr.bf16.gmra.mxu0 %v336
      %v457 = vpop.f32.mrf.mxu0
      %v458 = vadd.f32 %v216, %v457
      %v459 = vpop.f32.mrf.mxu0
      %v460 = vpop.f32.mrf.mxu0
      %v461 = vadd.f32 %v216, %v460
      %v462 = vpop.f32.mrf.mxu0
      %463 = vmatprep.mubr.bf16.mxu0 0
      %464 = vmatmul.mubr.bf16.gmra.mxu0 %v339
      %v465 = vpop.f32.mrf.mxu0
      %v466 = vadd.f32 %v216, %v465
      %v467 = vpop.f32.mrf.mxu0
      %v468 = vpop.f32.mrf.mxu0
      %v469 = vadd.f32 %v216, %v468
      %v470 = vpop.f32.mrf.mxu0
      %471 = vmatprep.mubr.bf16.mxu0 0
      %472 = vmatmul.mubr.bf16.gmra.mxu0 %v342
      %v473 = vpop.f32.mrf.mxu0
      %v474 = vadd.f32 %v216, %v473
      %v475 = vpop.f32.mrf.mxu0
      %v476 = vpop.f32.mrf.mxu0
      %v477 = vadd.f32 %v216, %v476
      %v478 = vpop.f32.mrf.mxu0
      %479 = vmatprep.mubr.bf16.mxu0 0
      %480 = vmatmul.mubr.bf16.gmra.mxu0 %v345
      %v481 = vpop.f32.mrf.mxu0
      %v482 = vadd.f32 %v216, %v481
      %v483 = vpop.f32.mrf.mxu0
      %v484 = vpop.f32.mrf.mxu0
      %v485 = vadd.f32 %v216, %v484
      %v486 = vpop.f32.mrf.mxu0
      %487 = vmatprep.mubr.bf16.mxu0 0
      %488 = vmatmul.mubr.bf16.gmra.mxu0 %v348
      %v489 = vpop.f32.mrf.mxu0
      %v490 = vadd.f32 %v216, %v489
      %v491 = vpop.f32.mrf.mxu0
      %v492 = vpop.f32.mrf.mxu0
      %v493 = vadd.f32 %v216, %v492
      %v494 = vpop.f32.mrf.mxu0
      %495 = vmatprep.mubr.bf16.mxu0 0
      %496 = vmatmul.mubr.bf16.gmra.mxu0 %v351
      %v497 = vpop.f32.mrf.mxu0
      %v498 = vadd.f32 %v216, %v497
      %v499 = vpop.f32.mrf.mxu0
      %v500 = vpop.f32.mrf.mxu0
      %v501 = vadd.f32 %v216, %v500
      %v502 = vpop.f32.mrf.mxu0
      %503 = vmatprep.mubr.bf16.mxu0 0
      %504 = vmatmul.mubr.bf16.gmra.mxu0 %v354
      %v505 = vpop.f32.mrf.mxu0
      %v506 = vadd.f32 %v216, %v505
      %v507 = vpop.f32.mrf.mxu0
      %v508 = vpop.f32.mrf.mxu0
      %v509 = vadd.f32 %v216, %v508
      %v510 = vpop.f32.mrf.mxu0
      %511 = vmatprep.mubr.bf16.mxu0 0
      %512 = vmatmul.mubr.bf16.gmra.mxu0 %v357
      %v513 = vpop.f32.mrf.mxu0
      %v514 = vadd.f32 %v216, %v513
      %v515 = vpop.f32.mrf.mxu0
      %v516 = vpop.f32.mrf.mxu0
      %v517 = vadd.f32 %v216, %v516
      %v518 = vpop.f32.mrf.mxu0
      %519 = vdwg.mxu0
      %v520 = vmax.f32 %v394, 0.0
      %v521 = vmax.f32 %v397, 0.0
      %v522 = vmax.f32 %v402, 0.0
      %v523 = vmax.f32 %v405, 0.0
      %v524 = vmax.f32 %v410, 0.0
      %v525 = vmax.f32 %v413, 0.0
      %v526 = vmax.f32 %v418, 0.0
      %v527 = vmax.f32 %v421, 0.0
      %v528 = vmax.f32 %v426, 0.0
      %v529 = vmax.f32 %v429, 0.0
      %v530 = vmax.f32 %v434, 0.0
      %v531 = vmax.f32 %v437, 0.0
      %v532 = vmax.f32 %v442, 0.0
      %v533 = vmax.f32 %v445, 0.0
      %v534 = vmax.f32 %v450, 0.0
      %v535 = vmax.f32 %v453, 0.0
      %v536 = vmax.f32 %v458, 0.0
      %v537 = vmax.f32 %v461, 0.0
      %v538 = vmax.f32 %v466, 0.0
      %v539 = vmax.f32 %v469, 0.0
      %v540 = vmax.f32 %v474, 0.0
      %v541 = vmax.f32 %v477, 0.0
      %v542 = vmax.f32 %v482, 0.0
      %v543 = vmax.f32 %v485, 0.0
      %v544 = vmax.f32 %v490, 0.0
      %v545 = vmax.f32 %v493, 0.0
      %v546 = vmax.f32 %v498, 0.0
      %v547 = vmax.f32 %v501, 0.0
      %v548 = vmax.f32 %v506, 0.0
      %v549 = vmax.f32 %v509, 0.0
      %v550 = vmax.f32 %v514, 0.0
      %v551 = vmax.f32 %v517, 0.0
      %v552 = vpack.c.bf16 %v521, %v520
      %v553 = vpack.c.bf16 %v523, %v522
      %v554 = vpack.c.bf16 %v525, %v524
      %v555 = vpack.c.bf16 %v527, %v526
      %v556 = vpack.c.bf16 %v529, %v528
      %v557 = vpack.c.bf16 %v531, %v530
      %v558 = vpack.c.bf16 %v533, %v532
      %v559 = vpack.c.bf16 %v535, %v534
      %v560 = vpack.c.bf16 %v537, %v536
      %v561 = vpack.c.bf16 %v539, %v538
      %v562 = vpack.c.bf16 %v541, %v540
      %v563 = vpack.c.bf16 %v543, %v542
      %v564 = vpack.c.bf16 %v545, %v544
      %v565 = vpack.c.bf16 %v547, %v546
      %v566 = vpack.c.bf16 %v549, %v548
      %v567 = vpack.c.bf16 %v551, %v550
      %v584 = vunpack.c.l.b16 %v552
      %v585 = vunpack.c.h.b16 %v552
      %v586 = vunpack.c.l.b16 %v553
      %v587 = vunpack.c.h.b16 %v553
      %v588 = vunpack.c.l.b16 %v554
      %v589 = vunpack.c.h.b16 %v554
      %v590 = vunpack.c.l.b16 %v555
      %v591 = vunpack.c.h.b16 %v555
      %v592 = vunpack.c.l.b16 %v556
      %v593 = vunpack.c.h.b16 %v556
      %v594 = vunpack.c.l.b16 %v557
      %v595 = vunpack.c.h.b16 %v557
      %v596 = vunpack.c.l.b16 %v558
      %v597 = vunpack.c.h.b16 %v558
      %v598 = vunpack.c.l.b16 %v559
      %v599 = vunpack.c.h.b16 %v559
      %v600 = vunpack.c.l.b16 %v560
      %v601 = vunpack.c.h.b16 %v560
      %v602 = vunpack.c.l.b16 %v561
      %v603 = vunpack.c.h.b16 %v561
      %v604 = vunpack.c.l.b16 %v562
      %v605 = vunpack.c.h.b16 %v562
      %v606 = vunpack.c.l.b16 %v563
      %v607 = vunpack.c.h.b16 %v563
      %v608 = vunpack.c.l.b16 %v564
      %v609 = vunpack.c.h.b16 %v564
      %v610 = vunpack.c.l.b16 %v565
      %v611 = vunpack.c.h.b16 %v565
      %v612 = vunpack.c.l.b16 %v566
      %v613 = vunpack.c.h.b16 %v566
      %v614 = vunpack.c.l.b16 %v567
      %v615 = vunpack.c.h.b16 %v567
      %v616 = vpack.c.b16 %v584, %v584
      %v617 = vpack.c.b16 %v585, %v585
      %v618 = vpack.c.b16 %v586, %v586
      %v619 = vpack.c.b16 %v587, %v587
      %v620 = vpack.c.b16 %v588, %v588
      %v621 = vpack.c.b16 %v589, %v589
      %v622 = vpack.c.b16 %v590, %v590
      %v623 = vpack.c.b16 %v591, %v591
      %v624 = vpack.c.b16 %v592, %v592
      %v625 = vpack.c.b16 %v593, %v593
      %v626 = vpack.c.b16 %v594, %v594
      %v627 = vpack.c.b16 %v595, %v595
      %v628 = vpack.c.b16 %v596, %v596
      %v629 = vpack.c.b16 %v597, %v597
      %v630 = vpack.c.b16 %v598, %v598
      %v631 = vpack.c.b16 %v599, %v599
      %v632 = vpack.c.b16 %v600, %v600
      %v633 = vpack.c.b16 %v601, %v601
      %v634 = vpack.c.b16 %v602, %v602
      %v635 = vpack.c.b16 %v603, %v603
      %v636 = vpack.c.b16 %v604, %v604
      %v637 = vpack.c.b16 %v605, %v605
      %v638 = vpack.c.b16 %v606, %v606
      %v639 = vpack.c.b16 %v607, %v607
      %v640 = vpack.c.b16 %v608, %v608
      %v641 = vpack.c.b16 %v609, %v609
      %v642 = vpack.c.b16 %v610, %v610
      %v643 = vpack.c.b16 %v611, %v611
      %v644 = vpack.c.b16 %v612, %v612
      %v645 = vpack.c.b16 %v613, %v613
      %v646 = vpack.c.b16 %v614, %v614
      %v647 = vpack.c.b16 %v615, %v615
      %680 = vst [vmem:[%s172] sm:$0xf] %v616
      %681 = vst [vmem:[%s172 + $0x4] sm:$0xf] %v617
      %682 = vst [vmem:[%s172 + $0x8] sm:$0xf] %v618
      %683 = vst [vmem:[%s172 + $0xc] sm:$0xf] %v619
      %684 = vst [vmem:[%s172 + $0x10] sm:$0xf] %v620
      %685 = vst [vmem:[%s172 + $0x14] sm:$0xf] %v621
      %686 = vst [vmem:[%s172 + $0x18] sm:$0xf] %v622
      %687 = vst [vmem:[%s172 + $0x1c] sm:$0xf] %v623
      %688 = vst [vmem:[%s172 + $0x20] sm:$0xf] %v624
      %689 = vst [vmem:[%s172 + $0x24] sm:$0xf] %v625
      %690 = vst [vmem:[%s172 + $0x28] sm:$0xf] %v626
      %691 = vst [vmem:[%s172 + $0x2c] sm:$0xf] %v627
      %692 = vst [vmem:[%s172 + $0x30] sm:$0xf] %v628
      %693 = vst [vmem:[%s172 + $0x34] sm:$0xf] %v629
      %694 = vst [vmem:[%s172 + $0x38] sm:$0xf] %v630
      %695 = vst [vmem:[%s172 + $0x3c] sm:$0xf] %v631
      %696 = vst [vmem:[%s172 + $0x40] sm:$0xf] %v632
      %697 = vst [vmem:[%s172 + $0x44] sm:$0xf] %v633
      %698 = vst [vmem:[%s172 + $0x48] sm:$0xf] %v634
      %699 = vst [vmem:[%s172 + $0x4c] sm:$0xf] %v635
      %700 = vst [vmem:[%s172 + $0x50] sm:$0xf] %v636
      %701 = vst [vmem:[%s172 + $0x54] sm:$0xf] %v637
      %702 = vst [vmem:[%s172 + $0x58] sm:$0xf] %v638
      %703 = vst [vmem:[%s172 + $0x5c] sm:$0xf] %v639
      %704 = vst [vmem:[%s172 + $0x60] sm:$0xf] %v640
      %705 = vst [vmem:[%s172 + $0x64] sm:$0xf] %v641
      %706 = vst [vmem:[%s172 + $0x68] sm:$0xf] %v642
      %707 = vst [vmem:[%s172 + $0x6c] sm:$0xf] %v643
      %708 = vst [vmem:[%s172 + $0x70] sm:$0xf] %v644
      %709 = vst [vmem:[%s172 + $0x74] sm:$0xf] %v645
      %710 = vst [vmem:[%s172 + $0x78] sm:$0xf] %v646
      %711 = vst [vmem:[%s172 + $0x7c] sm:$0xf] %v647
      %s712 = smul.u32 32, %s14
      %p713 = scmp.lt.s32.totalorder %s712, 63
      %s714 = scalar_select %p713, %s712, 63
      %s715 = smul.addr %s714, 4
      %s716 = scalar_lea.vmem %s3, %s715
      // Predicated region
      $region33: #{vae_forward.9} parent=31 // pred_check
        %p717 = pneg %p100
      $region34: #{vae_forward.9} parent=31 // pred_check_branch
        %719 = sbr.rel (%p717) target = $region36
      $region35: #{vae_forward.9} parent=31 // pred_region
        %s720 = smul.u32 32, %s14
      $region36: #{vae_forward.9} parent=31 // pred_fallthru
        _
    $region32: #{vae_forward.9} parent=5 // pred_fallthru
      _
    %p721 = scmp.le.s32.totalorder 2, %s9
    // Predicated region
    $region37: #{vae_forward.9} parent=5 // pred_check
      %p722 = pneg %p721
    $region38: #{vae_forward.9} parent=5 // pred_check_branch
      %724 = sbr.rel (%p722) target = $region40
    $region39: #{vae_forward.9} parent=5 // pred_region
      %s725 = ssub.s32 %s9, 2
      // Predicated region
      $region41: #{vae_forward.9} parent=39 // pred_check
        %p726 = pneg %p106
      $region42: #{vae_forward.9} parent=39 // pred_check_branch
        %728 = sbr.rel (%p726) target = $region44
      $region43: #{vae_forward.9} parent=39 // pred_region
        %s729 = smul.u32 32, %s15
        %p730 = scmp.lt.s32.totalorder %s729, 63
        %s731 = scalar_select %p730, %s729, 63
        %s732 = smul.addr %s731, 4
        %s733 = scalar_lea.vmem %s3, %s732
      $region44: #{vae_forward.9} parent=39 // pred_fallthru
        _
    $region40: #{vae_forward.9} parent=5 // pred_fallthru
      _
  $region6: #{vae_forward.9} parent=0 // loop_footer
    %s13 = sadd.s32 1, %s9
  $region7: #{vae_forward.9} parent=0 // loop_footer_branch
    %8 = sbr.rel target = $region3
  $region8: #{vae_forward.9} parent=0 // loop_exit
    _

// kernel: vae_forward.10
$region0: #{vae_forward.10}
  #allocation0 [shape = 'u32[]', space=smem, size = 0x4, offset = 0x4, fixed_abs, tag = 'smem constant byte address 0x4 - core index']
  #allocation1 [shape = 'u32[144,128]{1,0:T(1,128)}', space=vmem, size = 0x12000, scoped, tag = 'internal scratch']
  %s0 = inlined_call_operand.vmem [shape: bf16[128,144], index: 0, kind: input, shape index: {}]
  %s1 = inlined_call_operand.vmem [shape: bf16[144,128], index: 1, kind: input, shape index: {}]
  %s2 = inlined_call_operand.vmem [shape: f32[1,128], index: 2, kind: input, shape index: {}]
  %s3 = inlined_call_operand.vmem [shape: bf16[128,128], index: 3, kind: output, shape index: {}]
  %s4 = sld [smem:[#allocation0]]
  $region22: #{vae_forward.10} parent=0
    _
  %s6 = ssub.s32 1, %s4
  %s7 = scalar_select 0, %s6, %s4
  // Predicated region
  $region2: #{vae_forward.10} parent=0 // pred_check
    _
  $region3: #{vae_forward.10} parent=0 // pred_check_branch
    %9 = sbr.rel (0) target = $region5
  $region4: #{vae_forward.10} parent=0 // pred_region
    _
  $region5: #{vae_forward.10} parent=0 // pred_fallthru
    _
  // Predicated region
  $region6: #{vae_forward.10} parent=0 // pred_check
    _
  $region7: #{vae_forward.10} parent=0 // pred_check_branch
    %11 = sbr.rel (0) target = $region9
  $region8: #{vae_forward.10} parent=0 // pred_region
    _
  $region9: #{vae_forward.10} parent=0 // pred_fallthru
    _
  // Predicated region
  $region10: #{vae_forward.10} parent=0 // pred_check
    _
  $region11: #{vae_forward.10} parent=0 // pred_check_branch
    %13 = sbr.rel (0) target = $region13
  $region12: #{vae_forward.10} parent=0 // pred_region
    _
  $region13: #{vae_forward.10} parent=0 // pred_fallthru
    _
  %v15 = vld [vmem:[%s0] sm:$0xff]
  %v16 = vld [vmem:[%s0 + $0x8] sm:$0xff]
  %v17 = vld [vmem:[%s0 + $0x10] sm:$0xff]
  %v18 = vld [vmem:[%s0 + $0x18] sm:$0xff]
  %v19 = vld [vmem:[%s0 + $0x20] sm:$0xff]
  %v20 = vld [vmem:[%s0 + $0x28] sm:$0xff]
  %v21 = vld [vmem:[%s0 + $0x30] sm:$0xff]
  %v22 = vld [vmem:[%s0 + $0x38] sm:$0xff]
  %v23 = vld [vmem:[%s0 + $0x40] sm:$0xff]
  %v24 = vld [vmem:[%s0 + $0x48] sm:$0xff]
  %v25 = vld [vmem:[%s0 + $0x50] sm:$0xff]
  %v26 = vld [vmem:[%s0 + $0x58] sm:$0xff]
  %v27 = vld [vmem:[%s0 + $0x60] sm:$0xff]
  %v28 = vld [vmem:[%s0 + $0x68] sm:$0xff]
  %v29 = vld [vmem:[%s0 + $0x70] sm:$0xff]
  %v30 = vld [vmem:[%s0 + $0x78] sm:$0xff]
  %v31 = vld [vmem:[%s1] sm:$0xf]
  %v32 = vld [vmem:[%s1 + $0x4] sm:$0xf]
  %v33 = vld [vmem:[%s1 + $0x8] sm:$0xf]
  %v34 = vld [vmem:[%s1 + $0xc] sm:$0xf]
  %v35 = vld [vmem:[%s1 + $0x10] sm:$0xf]
  %v36 = vld [vmem:[%s1 + $0x14] sm:$0xf]
  %v37 = vld [vmem:[%s1 + $0x18] sm:$0xf]
  %v38 = vld [vmem:[%s1 + $0x1c] sm:$0xf]
  %v39 = vld [vmem:[%s1 + $0x20] sm:$0xf]
  %v40 = vld [vmem:[%s1 + $0x24] sm:$0xf]
  %v41 = vld [vmem:[%s1 + $0x28] sm:$0xf]
  %v42 = vld [vmem:[%s1 + $0x2c] sm:$0xf]
  %v43 = vld [vmem:[%s1 + $0x30] sm:$0xf]
  %v44 = vld [vmem:[%s1 + $0x34] sm:$0xf]
  %v45 = vld [vmem:[%s1 + $0x38] sm:$0xf]
  %v46 = vld [vmem:[%s1 + $0x3c] sm:$0xf]
  %v47 = vld [vmem:[%s1 + $0x40] sm:$0xf]
  %v48 = vld [vmem:[%s1 + $0x44] sm:$0xf]
  %v49 = vld [vmem:[%s2] sm:$0x1]
  %v51 = vlaneseq
  %v52 = vshrl.u32 %v51, 7
  %v53 = vsub.s32 0, %v52
  %v54 = vrot.slane %v49, %v53
  %v72 = vunpack.c.l.b16 %v15
  %v73 = vunpack.c.h.b16 %v15
  %v74 = vunpack.c.l.b16 %v16
  %v75 = vunpack.c.h.b16 %v16
  %v76 = vunpack.c.l.b16 %v17
  %v77 = vunpack.c.h.b16 %v17
  %v78 = vunpack.c.l.b16 %v18
  %v79 = vunpack.c.h.b16 %v18
  %v80 = vunpack.c.l.b16 %v19
  %v81 = vunpack.c.h.b16 %v19
  %v82 = vunpack.c.l.b16 %v20
  %v83 = vunpack.c.h.b16 %v20
  %v84 = vunpack.c.l.b16 %v21
  %v85 = vunpack.c.h.b16 %v21
  %v86 = vunpack.c.l.b16 %v22
  %v87 = vunpack.c.h.b16 %v22
  %v88 = vunpack.c.l.b16 %v23
  %v89 = vunpack.c.h.b16 %v23
  %v90 = vunpack.c.l.b16 %v24
  %v91 = vunpack.c.h.b16 %v24
  %v92 = vunpack.c.l.b16 %v25
  %v93 = vunpack.c.h.b16 %v25
  %v94 = vunpack.c.l.b16 %v26
  %v95 = vunpack.c.h.b16 %v26
  %v96 = vunpack.c.l.b16 %v27
  %v97 = vunpack.c.h.b16 %v27
  %v98 = vunpack.c.l.b16 %v28
  %v99 = vunpack.c.h.b16 %v28
  %v100 = vunpack.c.l.b16 %v29
  %v101 = vunpack.c.h.b16 %v29
  %v102 = vunpack.c.l.b16 %v30
  %v103 = vunpack.c.h.b16 %v30
  %v104 = vpack.c.b16 %v74, %v72
  %v105 = vpack.c.b16 %v75, %v73
  %v106 = vpack.c.b16 %v78, %v76
  %v107 = vpack.c.b16 %v79, %v77
  %v108 = vpack.c.b16 %v82, %v80
  %v109 = vpack.c.b16 %v83, %v81
  %v110 = vpack.c.b16 %v86, %v84
  %v111 = vpack.c.b16 %v87, %v85
  %v112 = vpack.c.b16 %v90, %v88
  %v113 = vpack.c.b16 %v91, %v89
  %v114 = vpack.c.b16 %v94, %v92
  %v115 = vpack.c.b16 %v95, %v93
  %v116 = vpack.c.b16 %v98, %v96
  %v117 = vpack.c.b16 %v99, %v97
  %v118 = vpack.c.b16 %v102, %v100
  %v119 = vpack.c.b16 %v103, %v101
  %v146 = vunpack.c.l.b16 %v31
  %v147 = vunpack.c.l.b16 %v32
  %v148 = vunpack.c.l.b16 %v33
  %v149 = vunpack.c.l.b16 %v34
  %v150 = vunpack.c.l.b16 %v35
  %v151 = vunpack.c.l.b16 %v36
  %v152 = vunpack.c.l.b16 %v37
  %v153 = vunpack.c.l.b16 %v38
  %v154 = vunpack.c.l.b16 %v39
  %v155 = vunpack.c.l.b16 %v40
  %v156 = vunpack.c.l.b16 %v41
  %v157 = vunpack.c.l.b16 %v42
  %v158 = vunpack.c.l.b16 %v43
  %v159 = vunpack.c.l.b16 %v44
  %v160 = vunpack.c.l.b16 %v45
  %v161 = vunpack.c.l.b16 %v46
  %v162 = vunpack.c.l.b16 %v47
  %v163 = vunpack.c.l.b16 %v48
  %v164 = vpack.c.b16 %v147, %v146
  %v165 = vpack.c.b16 %v149, %v148
  %v166 = vpack.c.b16 %v151, %v150
  %v167 = vpack.c.b16 %v153, %v152
  %v168 = vpack.c.b16 %v155, %v154
  %v169 = vpack.c.b16 %v157, %v156
  %v170 = vpack.c.b16 %v159, %v158
  %v171 = vpack.c.b16 %v161, %v160
  %v172 = vpack.c.b16 %v163, %v162
  %vm182 = vcmask 130048
  %v184 = vsel %vm182, %v105, 0
  %v187 = vsel %vm182, %v107, 0
  %v190 = vsel %vm182, %v109, 0
  %v193 = vsel %vm182, %v111, 0
  %v196 = vsel %vm182, %v113, 0
  %v199 = vsel %vm182, %v115, 0
  %v202 = vsel %vm182, %v117, 0
  %v205 = vsel %vm182, %v119, 0
  %207 = vmatprep.subr.bf16.mxu0 0
  %208 = vmatpush1.bf16.msra.mxu0 %v171
  %209 = vmatprep.subr.bf16.mxu0 0
  %210 = vmatpush1.bf16.msra.mxu0 %v170
  %211 = vmatprep.subr.bf16.mxu0 0
  %212 = vmatpush1.bf16.msra.mxu0 %v169
  %213 = vmatprep.subr.bf16.mxu0 0
  %214 = vmatpush1.bf16.msra.mxu0 %v168
  %215 = vmatprep.subr.bf16.mxu0 0
  %216 = vmatpush1.bf16.msra.mxu0 %v167
  %217 = vmatprep.subr.bf16.mxu0 0
  %218 = vmatpush1.bf16.msra.mxu0 %v166
  %219 = vmatprep.subr.bf16.mxu0 0
  %220 = vmatpush1.bf16.msra.mxu0 %v165
  %221 = vmatprep.subr.bf16.mxu0 0
  %222 = vmatpush1.bf16.msra.mxu0 %v164
  %223 = vmatprep.subr.bf16.mxu0 0
  %224 = vmatpush2.bf16.msra.mxu0 0
  %225 = vmatprep.subr.bf16.mxu0 0
  %226 = vmatpush2.bf16.msra.mxu0 0
  %227 = vmatprep.subr.bf16.mxu0 0
  %228 = vmatpush2.bf16.msra.mxu0 0
  %229 = vmatprep.subr.bf16.mxu0 0
  %230 = vmatpush2.bf16.msra.mxu0 0
  %231 = vmatprep.subr.bf16.mxu0 0
  %232 = vmatpush2.bf16.msra.mxu0 0
  %233 = vmatprep.subr.bf16.mxu0 0
  %234 = vmatpush2.bf16.msra.mxu0 0
  %235 = vmatprep.subr.bf16.mxu0 0
  %236 = vmatpush2.bf16.msra.mxu0 0
  %237 = vmatprep.subr.bf16.mxu0 0
  %238 = vmatpush2.bf16.msra.mxu0 %v172
  %239 = vmatprep.mubr.bf16.mxu0 %v184
  %240 = vmatmul.mubr.bf16.gmra.mxu0 %v104
  %v241 = vpop.f32.mrf.mxu0
  %v242 = vadd.f32 %v54, %v241
  %v243 = vpop.f32.mrf.mxu0
  %v244 = vpop.f32.mrf.mxu0
  %v245 = vadd.f32 %v54, %v244
  %v246 = vpop.f32.mrf.mxu0
  %247 = vmatprep.mubr.bf16.mxu0 %v187
  %248 = vmatmul.mubr.bf16.gmra.mxu0 %v106
  %v249 = vpop.f32.mrf.mxu0
  %v250 = vadd.f32 %v54, %v249
  %v251 = vpop.f32.mrf.mxu0
  %v252 = vpop.f32.mrf.mxu0
  %v253 = vadd.f32 %v54, %v252
  %v254 = vpop.f32.mrf.mxu0
  %255 = vmatprep.mubr.bf16.mxu0 %v190
  %256 = vmatmul.mubr.bf16.gmra.mxu0 %v108
  %v257 = vpop.f32.mrf.mxu0
  %v258 = vadd.f32 %v54, %v257
  %v259 = vpop.f32.mrf.mxu0
  %v260 = vpop.f32.mrf.mxu0
  %v261 = vadd.f32 %v54, %v260
  %v262 = vpop.f32.mrf.mxu0
  %263 = vmatprep.mubr.bf16.mxu0 %v193
  %264 = vmatmul.mubr.bf16.gmra.mxu0 %v110
  %v265 = vpop.f32.mrf.mxu0
  %v266 = vadd.f32 %v54, %v265
  %v267 = vpop.f32.mrf.mxu0
  %v268 = vpop.f32.mrf.mxu0
  %v269 = vadd.f32 %v54, %v268
  %v270 = vpop.f32.mrf.mxu0
  %271 = vmatprep.mubr.bf16.mxu0 %v196
  %272 = vmatmul.mubr.bf16.gmra.mxu0 %v112
  %v273 = vpop.f32.mrf.mxu0
  %v274 = vadd.f32 %v54, %v273
  %v275 = vpop.f32.mrf.mxu0
  %v276 = vpop.f32.mrf.mxu0
  %v277 = vadd.f32 %v54, %v276
  %v278 = vpop.f32.mrf.mxu0
  %279 = vmatprep.mubr.bf16.mxu0 %v199
  %280 = vmatmul.mubr.bf16.gmra.mxu0 %v114
  %v281 = vpop.f32.mrf.mxu0
  %v282 = vadd.f32 %v54, %v281
  %v283 = vpop.f32.mrf.mxu0
  %v284 = vpop.f32.mrf.mxu0
  %v285 = vadd.f32 %v54, %v284
  %v286 = vpop.f32.mrf.mxu0
  %287 = vmatprep.mubr.bf16.mxu0 %v202
  %288 = vmatmul.mubr.bf16.gmra.mxu0 %v116
  %v289 = vpop.f32.mrf.mxu0
  %v290 = vadd.f32 %v54, %v289
  %v291 = vpop.f32.mrf.mxu0
  %v292 = vpop.f32.mrf.mxu0
  %v293 = vadd.f32 %v54, %v292
  %v294 = vpop.f32.mrf.mxu0
  %295 = vmatprep.mubr.bf16.mxu0 %v205
  %296 = vmatmul.mubr.bf16.gmra.mxu0 %v118
  %v297 = vpop.f32.mrf.mxu0
  %v298 = vadd.f32 %v54, %v297
  %v299 = vpop.f32.mrf.mxu0
  %v300 = vpop.f32.mrf.mxu0
  %v301 = vadd.f32 %v54, %v300
  %v302 = vpop.f32.mrf.mxu0
  %303 = vdwg.mxu0
  %v304 = vmax.f32 %v242, 0.0
  %v305 = vmax.f32 %v245, 0.0
  %v306 = vmax.f32 %v250, 0.0
  %v307 = vmax.f32 %v253, 0.0
  %v308 = vmax.f32 %v258, 0.0
  %v309 = vmax.f32 %v261, 0.0
  %v310 = vmax.f32 %v266, 0.0
  %v311 = vmax.f32 %v269, 0.0
  %v312 = vmax.f32 %v274, 0.0
  %v313 = vmax.f32 %v277, 0.0
  %v314 = vmax.f32 %v282, 0.0
  %v315 = vmax.f32 %v285, 0.0
  %v316 = vmax.f32 %v290, 0.0
  %v317 = vmax.f32 %v293, 0.0
  %v318 = vmax.f32 %v298, 0.0
  %v319 = vmax.f32 %v301, 0.0
  %v320 = vpack.c.bf16 %v305, %v304
  %v321 = vpack.c.bf16 %v307, %v306
  %v322 = vpack.c.bf16 %v309, %v308
  %v323 = vpack.c.bf16 %v311, %v310
  %v324 = vpack.c.bf16 %v313, %v312
  %v325 = vpack.c.bf16 %v315, %v314
  %v326 = vpack.c.bf16 %v317, %v316
  %v327 = vpack.c.bf16 %v319, %v318
  %v336 = vunpack.c.l.b16 %v320
  %v337 = vunpack.c.h.b16 %v320
  %v338 = vunpack.c.l.b16 %v321
  %v339 = vunpack.c.h.b16 %v321
  %v340 = vunpack.c.l.b16 %v322
  %v341 = vunpack.c.h.b16 %v322
  %v342 = vunpack.c.l.b16 %v323
  %v343 = vunpack.c.h.b16 %v323
  %v344 = vunpack.c.l.b16 %v324
  %v345 = vunpack.c.h.b16 %v324
  %v346 = vunpack.c.l.b16 %v325
  %v347 = vunpack.c.h.b16 %v325
  %v348 = vunpack.c.l.b16 %v326
  %v349 = vunpack.c.h.b16 %v326
  %v350 = vunpack.c.l.b16 %v327
  %v351 = vunpack.c.h.b16 %v327
  %v352 = vpack.c.b16 %v336, %v336
  %v353 = vpack.c.b16 %v337, %v337
  %v354 = vpack.c.b16 %v338, %v338
  %v355 = vpack.c.b16 %v339, %v339
  %v356 = vpack.c.b16 %v340, %v340
  %v357 = vpack.c.b16 %v341, %v341
  %v358 = vpack.c.b16 %v342, %v342
  %v359 = vpack.c.b16 %v343, %v343
  %v360 = vpack.c.b16 %v344, %v344
  %v361 = vpack.c.b16 %v345, %v345
  %v362 = vpack.c.b16 %v346, %v346
  %v363 = vpack.c.b16 %v347, %v347
  %v364 = vpack.c.b16 %v348, %v348
  %v365 = vpack.c.b16 %v349, %v349
  %v366 = vpack.c.b16 %v350, %v350
  %v367 = vpack.c.b16 %v351, %v351
  %384 = vst [vmem:[%s3] sm:$0xf] %v352
  %385 = vst [vmem:[%s3 + $0x4] sm:$0xf] %v353
  %386 = vst [vmem:[%s3 + $0x8] sm:$0xf] %v354
  %387 = vst [vmem:[%s3 + $0xc] sm:$0xf] %v355
  %388 = vst [vmem:[%s3 + $0x10] sm:$0xf] %v356
  %389 = vst [vmem:[%s3 + $0x14] sm:$0xf] %v357
  %390 = vst [vmem:[%s3 + $0x18] sm:$0xf] %v358
  %391 = vst [vmem:[%s3 + $0x1c] sm:$0xf] %v359
  %392 = vst [vmem:[%s3 + $0x20] sm:$0xf] %v360
  %393 = vst [vmem:[%s3 + $0x24] sm:$0xf] %v361
  %394 = vst [vmem:[%s3 + $0x28] sm:$0xf] %v362
  %395 = vst [vmem:[%s3 + $0x2c] sm:$0xf] %v363
  %396 = vst [vmem:[%s3 + $0x30] sm:$0xf] %v364
  %397 = vst [vmem:[%s3 + $0x34] sm:$0xf] %v365
  %398 = vst [vmem:[%s3 + $0x38] sm:$0xf] %v366
  %399 = vst [vmem:[%s3 + $0x3c] sm:$0xf] %v367
  // Predicated region
  $region14: #{vae_forward.10} parent=0 // pred_check
    _
  $region15: #{vae_forward.10} parent=0 // pred_check_branch
    %401 = sbr.rel (0) target = $region17
  $region16: #{vae_forward.10} parent=0 // pred_region
    _
  $region17: #{vae_forward.10} parent=0 // pred_fallthru
    _
  // Predicated region
  $region18: #{vae_forward.10} parent=0 // pred_check
    _
  $region19: #{vae_forward.10} parent=0 // pred_check_branch
    %403 = sbr.rel (0) target = $region21
  $region20: #{vae_forward.10} parent=0 // pred_region
    _
  $region21: #{vae_forward.10} parent=0 // pred_fallthru
    _

// kernel: vae_forward.11
$region0: #{vae_forward.11}
  #allocation0 [shape = 'u32[]', space=smem, size = 0x4, offset = 0x4, fixed_abs, tag = 'smem constant byte address 0x4 - core index']
  #allocation1 [shape = 'u32[144,128]{1,0:T(1,128)}', space=vmem, size = 0x12000, scoped, tag = 'internal scratch']
  %s0 = inlined_call_operand.vmem [shape: bf16[32,288], index: 0, kind: input, shape index: {}]
  %s1 = inlined_call_operand.vmem [shape: bf16[288,128], index: 1, kind: input, shape index: {}]
  %s2 = inlined_call_operand.vmem [shape: f32[1,128], index: 2, kind: input, shape index: {}]
  %s3 = inlined_call_operand.vmem [shape: bf16[32,128], index: 3, kind: output, shape index: {}]
  %s4 = sld [smem:[#allocation0]]
  $region22: #{vae_forward.11} parent=0
    _
  %s6 = ssub.s32 1, %s4
  %s7 = scalar_select 0, %s6, %s4
  // Predicated region
  $region2: #{vae_forward.11} parent=0 // pred_check
    _
  $region3: #{vae_forward.11} parent=0 // pred_check_branch
    %9 = sbr.rel (0) target = $region5
  $region4: #{vae_forward.11} parent=0 // pred_region
    _
  $region5: #{vae_forward.11} parent=0 // pred_fallthru
    _
  // Predicated region
  $region6: #{vae_forward.11} parent=0 // pred_check
    _
  $region7: #{vae_forward.11} parent=0 // pred_check_branch
    %11 = sbr.rel (0) target = $region9
  $region8: #{vae_forward.11} parent=0 // pred_region
    _
  $region9: #{vae_forward.11} parent=0 // pred_fallthru
    _
  // Predicated region
  $region10: #{vae_forward.11} parent=0 // pred_check
    _
  $region11: #{vae_forward.11} parent=0 // pred_check_branch
    %13 = sbr.rel (0) target = $region13
  $region12: #{vae_forward.11} parent=0 // pred_region
    _
  $region13: #{vae_forward.11} parent=0 // pred_fallthru
    _
  %v15 = vld [vmem:[%s0] sm:$0xff]
  %v16 = vld [vmem:[%s0 + $0x8] sm:$0xf]
  %v17 = vld [vmem:[%s0 + $0xc] sm:$0xff]
  %v18 = vld [vmem:[%s0 + $0x14] sm:$0xf]
  %v19 = vld [vmem:[%s0 + $0x18] sm:$0xff]
  %v20 = vld [vmem:[%s0 + $0x20] sm:$0xf]
  %v21 = vld [vmem:[%s0 + $0x24] sm:$0xff]
  %v22 = vld [vmem:[%s0 + $0x2c] sm:$0xf]
  %v23 = vld [vmem:[%s1] sm:$0xf]
  %v24 = vld [vmem:[%s1 + $0x4] sm:$0xf]
  %v25 = vld [vmem:[%s1 + $0x8] sm:$0xf]
  %v26 = vld [vmem:[%s1 + $0xc] sm:$0xf]
  %v27 = vld [vmem:[%s1 + $0x10] sm:$0xf]
  %v28 = vld [vmem:[%s1 + $0x14] sm:$0xf]
  %v29 = vld [vmem:[%s1 + $0x18] sm:$0xf]
  %v30 = vld [vmem:[%s1 + $0x1c] sm:$0xf]
  %v31 = vld [vmem:[%s1 + $0x20] sm:$0xf]
  %v32 = vld [vmem:[%s1 + $0x24] sm:$0xf]
  %v33 = vld [vmem:[%s1 + $0x28] sm:$0xf]
  %v34 = vld [vmem:[%s1 + $0x2c] sm:$0xf]
  %v35 = vld [vmem:[%s1 + $0x30] sm:$0xf]
  %v36 = vld [vmem:[%s1 + $0x34] sm:$0xf]
  %v37 = vld [vmem:[%s1 + $0x38] sm:$0xf]
  %v38 = vld [vmem:[%s1 + $0x3c] sm:$0xf]
  %v39 = vld [vmem:[%s1 + $0x40] sm:$0xf]
  %v40 = vld [vmem:[%s1 + $0x44] sm:$0xf]
  %v41 = vld [vmem:[%s1 + $0x48] sm:$0xf]
  %v42 = vld [vmem:[%s1 + $0x4c] sm:$0xf]
  %v43 = vld [vmem:[%s1 + $0x50] sm:$0xf]
  %v44 = vld [vmem:[%s1 + $0x54] sm:$0xf]
  %v45 = vld [vmem:[%s1 + $0x58] sm:$0xf]
  %v46 = vld [vmem:[%s1 + $0x5c] sm:$0xf]
  %v47 = vld [vmem:[%s1 + $0x60] sm:$0xf]
  %v48 = vld [vmem:[%s1 + $0x64] sm:$0xf]
  %v49 = vld [vmem:[%s1 + $0x68] sm:$0xf]
  %v50 = vld [vmem:[%s1 + $0x6c] sm:$0xf]
  %v51 = vld [vmem:[%s1 + $0x70] sm:$0xf]
  %v52 = vld [vmem:[%s1 + $0x74] sm:$0xf]
  %v53 = vld [vmem:[%s1 + $0x78] sm:$0xf]
  %v54 = vld [vmem:[%s1 + $0x7c] sm:$0xf]
  %v55 = vld [vmem:[%s1 + $0x80] sm:$0xf]
  %v56 = vld [vmem:[%s1 + $0x84] sm:$0xf]
  %v57 = vld [vmem:[%s1 + $0x88] sm:$0xf]
  %v58 = vld [vmem:[%s1 + $0x8c] sm:$0xf]
  %v59 = vld [vmem:[%s2] sm:$0x1]
  %v61 = vlaneseq
  %v62 = vshrl.u32 %v61, 7
  %v63 = vsub.s32 0, %v62
  %v64 = vrot.slane %v59, %v63
  %v74 = vunpack.c.l.b16 %v15
  %v75 = vunpack.c.h.b16 %v15
  %v76 = vunpack.c.l.b16 %v16
  %v77 = vunpack.c.l.b16 %v17
  %v78 = vunpack.c.h.b16 %v17
  %v79 = vunpack.c.l.b16 %v18
  %v80 = vunpack.c.l.b16 %v19
  %v81 = vunpack.c.h.b16 %v19
  %v82 = vunpack.c.l.b16 %v20
  %v83 = vunpack.c.l.b16 %v21
  %v84 = vunpack.c.h.b16 %v21
  %v85 = vunpack.c.l.b16 %v22
  %v86 = vpack.c.b16 %v77, %v74
  %v87 = vpack.c.b16 %v78, %v75
  %v88 = vpack.c.b16 %v79, %v76
  %v89 = vpack.c.b16 %v83, %v80
  %v90 = vpack.c.b16 %v84, %v81
  %v91 = vpack.c.b16 %v85, %v82
  %v132 = vunpack.c.l.b16 %v23
  %v133 = vunpack.c.l.b16 %v24
  %v134 = vunpack.c.l.b16 %v25
  %v135 = vunpack.c.l.b16 %v26
  %v136 = vunpack.c.l.b16 %v27
  %v137 = vunpack.c.l.b16 %v28
  %v138 = vunpack.c.l.b16 %v29
  %v139 = vunpack.c.l.b16 %v30
  %v140 = vunpack.c.l.b16 %v31
  %v141 = vunpack.c.l.b16 %v32
  %v142 = vunpack.c.l.b16 %v33
  %v143 = vunpack.c.l.b16 %v34
  %v144 = vunpack.c.l.b16 %v35
  %v145 = vunpack.c.l.b16 %v36
  %v146 = vunpack.c.l.b16 %v37
  %v147 = vunpack.c.l.b16 %v38
  %v148 = vunpack.c.l.b16 %v39
  %v149 = vunpack.c.l.b16 %v40
  %v150 = vunpack.c.l.b16 %v41
  %v151 = vunpack.c.l.b16 %v42
  %v152 = vunpack.c.l.b16 %v43
  %v153 = vunpack.c.l.b16 %v44
  %v154 = vunpack.c.l.b16 %v45
  %v155 = vunpack.c.l.b16 %v46
  %v156 = vunpack.c.l.b16 %v47
  %v157 = vunpack.c.l.b16 %v48
  %v158 = vunpack.c.l.b16 %v49
  %v159 = vunpack.c.l.b16 %v50
  %v160 = vunpack.c.l.b16 %v51
  %v161 = vunpack.c.l.b16 %v52
  %v162 = vunpack.c.l.b16 %v53
  %v163 = vunpack.c.l.b16 %v54
  %v164 = vunpack.c.l.b16 %v55
  %v165 = vunpack.c.l.b16 %v56
  %v166 = vunpack.c.l.b16 %v57
  %v167 = vunpack.c.l.b16 %v58
  %v168 = vpack.c.b16 %v133, %v132
  %v169 = vpack.c.b16 %v135, %v134
  %v170 = vpack.c.b16 %v137, %v136
  %v171 = vpack.c.b16 %v139, %v138
  %v172 = vpack.c.b16 %v141, %v140
  %v173 = vpack.c.b16 %v143, %v142
  %v174 = vpack.c.b16 %v145, %v144
  %v175 = vpack.c.b16 %v147, %v146
  %v176 = vpack.c.b16 %v149, %v148
  %v177 = vpack.c.b16 %v151, %v150
  %v178 = vpack.c.b16 %v153, %v152
  %v179 = vpack.c.b16 %v155, %v154
  %v180 = vpack.c.b16 %v157, %v156
  %v181 = vpack.c.b16 %v159, %v158
  %v182 = vpack.c.b16 %v161, %v160
  %v183 = vpack.c.b16 %v163, %v162
  %v184 = vpack.c.b16 %v165, %v164
  %v185 = vpack.c.b16 %v167, %v166
  %vm204 = vcmask 261120
  %v206 = vsel %vm204, %v88, 0
  %v209 = vsel %vm204, %v91, 0
  %211 = vmatprep.subr.bf16.mxu0 0
  %212 = vmatpush1.bf16.msra.mxu0 %v175
  %213 = vmatprep.subr.bf16.mxu0 0
  %214 = vmatpush1.bf16.msra.mxu0 %v174
  %215 = vmatprep.subr.bf16.mxu0 0
  %216 = vmatpush1.bf16.msra.mxu0 %v173
  %217 = vmatprep.subr.bf16.mxu0 0
  %218 = vmatpush1.bf16.msra.mxu0 %v172
  %219 = vmatprep.subr.bf16.mxu0 0
  %220 = vmatpush1.bf16.msra.mxu0 %v171
  %221 = vmatprep.subr.bf16.mxu0 0
  %222 = vmatpush1.bf16.msra.mxu0 %v170
  %223 = vmatprep.subr.bf16.mxu0 0
  %224 = vmatpush1.bf16.msra.mxu0 %v169
  %225 = vmatprep.subr.bf16.mxu0 0
  %226 = vmatpush1.bf16.msra.mxu0 %v168
  %227 = vmatprep.subr.bf16.mxu0 0
  %228 = vmatpush2.bf16.msra.mxu0 %v183
  %229 = vmatprep.subr.bf16.mxu0 0
  %230 = vmatpush2.bf16.msra.mxu0 %v182
  %231 = vmatprep.subr.bf16.mxu0 0
  %232 = vmatpush2.bf16.msra.mxu0 %v181
  %233 = vmatprep.subr.bf16.mxu0 0
  %234 = vmatpush2.bf16.msra.mxu0 %v180
  %235 = vmatprep.subr.bf16.mxu0 0
  %236 = vmatpush2.bf16.msra.mxu0 %v179
  %237 = vmatprep.subr.bf16.mxu0 0
  %238 = vmatpush2.bf16.msra.mxu0 %v178
  %239 = vmatprep.subr.bf16.mxu0 0
  %240 = vmatpush2.bf16.msra.mxu0 %v177
  %241 = vmatprep.subr.bf16.mxu0 0
  %242 = vmatpush2.bf16.msra.mxu0 %v176
  %243 = vmatprep.mubr.bf16.mxu0 %v87
  %244 = vmatmul.mubr.bf16.gmra.mxu0 %v86
  %v245 = vpop.f32.mrf.mxu0
  %v246 = vadd.f32 %v64, %v245
  %v247 = vpop.f32.mrf.mxu0
  %v248 = vpop.f32.mrf.mxu0
  %v249 = vadd.f32 %v64, %v248
  %v250 = vpop.f32.mrf.mxu0
  %251 = vmatprep.mubr.bf16.mxu0 %v90
  %252 = vmatmul.mubr.bf16.gmra.mxu0 %v89
  %v253 = vpop.f32.mrf.mxu0
  %v254 = vadd.f32 %v64, %v253
  %v255 = vpop.f32.mrf.mxu0
  %v256 = vpop.f32.mrf.mxu0
  %v257 = vadd.f32 %v64, %v256
  %v258 = vpop.f32.mrf.mxu0
  %259 = vdwg.mxu0
  %260 = vmatprep.subr.bf16.mxu0 0
  %261 = vmatpush1.bf16.msra.mxu0 0
  %262 = vmatprep.subr.bf16.mxu0 0
  %263 = vmatpush1.bf16.msra.mxu0 0
  %264 = vmatprep.subr.bf16.mxu0 0
  %265 = vmatpush1.bf16.msra.mxu0 0
  %266 = vmatprep.subr.bf16.mxu0 0
  %267 = vmatpush1.bf16.msra.mxu0 0
  %268 = vmatprep.subr.bf16.mxu0 0
  %269 = vmatpush1.bf16.msra.mxu0 0
  %270 = vmatprep.subr.bf16.mxu0 0
  %271 = vmatpush1.bf16.msra.mxu0 0
  %272 = vmatprep.subr.bf16.mxu0 0
  %273 = vmatpush1.bf16.msra.mxu0 %v185
  %274 = vmatprep.subr.bf16.mxu0 0
  %275 = vmatpush1.bf16.msra.mxu0 %v184
  %276 = vmatprep.subr.bf16.mxu0 0
  %277 = vmatpush2.bf16.msra.mxu0 0
  %278 = vmatprep.subr.bf16.mxu0 0
  %279 = vmatpush2.bf16.msra.mxu0 0
  %280 = vmatprep.subr.bf16.mxu0 0
  %281 = vmatpush2.bf16.msra.mxu0 0
  %282 = vmatprep.subr.bf16.mxu0 0
  %283 = vmatpush2.bf16.msra.mxu0 0
  %284 = vmatprep.subr.bf16.mxu0 0
  %285 = vmatpush2.bf16.msra.mxu0 0
  %286 = vmatprep.subr.bf16.mxu0 0
  %287 = vmatpush2.bf16.msra.mxu0 0
  %288 = vmatprep.subr.bf16.mxu0 0
  %289 = vmatpush2.bf16.msra.mxu0 0
  %290 = vmatprep.subr.bf16.mxu0 0
  %291 = vmatpush2.bf16.msra.mxu0 0
  %292 = vmatprep.mubr.bf16.mxu0 0
  %293 = vmatmul.mubr.bf16.gmra.mxu0 %v206
  %v294 = vpop.f32.mrf.mxu0
  %v295 = vadd.f32 %v246, %v294
  %v296 = vpop.f32.mrf.mxu0
  %v297 = vpop.f32.mrf.mxu0
  %v298 = vadd.f32 %v249, %v297
  %v299 = vpop.f32.mrf.mxu0
  %300 = vmatprep.mubr.bf16.mxu0 0
  %301 = vmatmul.mubr.bf16.gmra.mxu0 %v209
  %v302 = vpop.f32.mrf.mxu0
  %v303 = vadd.f32 %v254, %v302
  %v304 = vpop.f32.mrf.mxu0
  %v305 = vpop.f32.mrf.mxu0
  %v306 = vadd.f32 %v257, %v305
  %v307 = vpop.f32.mrf.mxu0
  %308 = vdwg.mxu0
  %v309 = vmax.f32 %v295, 0.0
  %v310 = vmax.f32 %v298, 0.0
  %v311 = vmax.f32 %v303, 0.0
  %v312 = vmax.f32 %v306, 0.0
  %v313 = vpack.c.bf16 %v310, %v309
  %v314 = vpack.c.bf16 %v312, %v311
  %v317 = vunpack.c.l.b16 %v313
  %v318 = vunpack.c.h.b16 %v313
  %v319 = vunpack.c.l.b16 %v314
  %v320 = vunpack.c.h.b16 %v314
  %v321 = vpack.c.b16 %v317, %v317
  %v322 = vpack.c.b16 %v318, %v318
  %v323 = vpack.c.b16 %v319, %v319
  %v324 = vpack.c.b16 %v320, %v320
  %329 = vst [vmem:[%s3] sm:$0xf] %v321
  %330 = vst [vmem:[%s3 + $0x4] sm:$0xf] %v322
  %331 = vst [vmem:[%s3 + $0x8] sm:$0xf] %v323
  %332 = vst [vmem:[%s3 + $0xc] sm:$0xf] %v324
  // Predicated region
  $region14: #{vae_forward.11} parent=0 // pred_check
    _
  $region15: #{vae_forward.11} parent=0 // pred_check_branch
    %334 = sbr.rel (0) target = $region17
  $region16: #{vae_forward.11} parent=0 // pred_region
    _
  $region17: #{vae_forward.11} parent=0 // pred_fallthru
    _
  // Predicated region
  $region18: #{vae_forward.11} parent=0 // pred_check
    _
  $region19: #{vae_forward.11} parent=0 // pred_check_branch
    %336 = sbr.rel (0) target = $region21
  $region20: #{vae_forward.11} parent=0 // pred_region
    _
  $region21: #{vae_forward.11} parent=0 // pred_fallthru
    _

// kernel: vae_forward.12
$region0: #{vae_forward.12}
  #allocation0 [shape = 'u32[]', space=smem, size = 0x4, offset = 0x4, fixed_abs, tag = 'smem constant byte address 0x4 - core index']
  #allocation1 [shape = 'u32[144,128]{1,0:T(1,128)}', space=vmem, size = 0x12000, scoped, tag = 'internal scratch']
  %s0 = inlined_call_operand.vmem [shape: bf16[8,576], index: 0, kind: input, shape index: {}]
  %s1 = inlined_call_operand.vmem [shape: bf16[576,128], index: 1, kind: input, shape index: {}]
  %s2 = inlined_call_operand.vmem [shape: f32[1,128], index: 2, kind: input, shape index: {}]
  %s3 = inlined_call_operand.vmem [shape: bf16[8,128], index: 3, kind: output, shape index: {}]
  %s4 = sld [smem:[#allocation0]]
  $region22: #{vae_forward.12} parent=0
    _
  %s6 = ssub.s32 1, %s4
  %s7 = scalar_select 0, %s6, %s4
  // Predicated region
  $region2: #{vae_forward.12} parent=0 // pred_check
    _
  $region3: #{vae_forward.12} parent=0 // pred_check_branch
    %9 = sbr.rel (0) target = $region5
  $region4: #{vae_forward.12} parent=0 // pred_region
    _
  $region5: #{vae_forward.12} parent=0 // pred_fallthru
    _
  // Predicated region
  $region6: #{vae_forward.12} parent=0 // pred_check
    _
  $region7: #{vae_forward.12} parent=0 // pred_check_branch
    %11 = sbr.rel (0) target = $region9
  $region8: #{vae_forward.12} parent=0 // pred_region
    _
  $region9: #{vae_forward.12} parent=0 // pred_fallthru
    _
  // Predicated region
  $region10: #{vae_forward.12} parent=0 // pred_check
    _
  $region11: #{vae_forward.12} parent=0 // pred_check_branch
    %13 = sbr.rel (0) target = $region13
  $region12: #{vae_forward.12} parent=0 // pred_region
    _
  $region13: #{vae_forward.12} parent=0 // pred_fallthru
    _
  %v15 = vld [vmem:[%s0] sm:$0xff]
  %v16 = vld [vmem:[%s0 + $0x8] sm:$0xff]
  %v17 = vld [vmem:[%s0 + $0x10] sm:$0xf]
  %v18 = vld [vmem:[%s1] sm:$0xf]
  %v19 = vld [vmem:[%s1 + $0x4] sm:$0xf]
  %v20 = vld [vmem:[%s1 + $0x8] sm:$0xf]
  %v21 = vld [vmem:[%s1 + $0xc] sm:$0xf]
  %v22 = vld [vmem:[%s1 + $0x10] sm:$0xf]
  %v23 = vld [vmem:[%s1 + $0x14] sm:$0xf]
  %v24 = vld [vmem:[%s1 + $0x18] sm:$0xf]
  %v25 = vld [vmem:[%s1 + $0x1c] sm:$0xf]
  %v26 = vld [vmem:[%s1 + $0x20] sm:$0xf]
  %v27 = vld [vmem:[%s1 + $0x24] sm:$0xf]
  %v28 = vld [vmem:[%s1 + $0x28] sm:$0xf]
  %v29 = vld [vmem:[%s1 + $0x2c] sm:$0xf]
  %v30 = vld [vmem:[%s1 + $0x30] sm:$0xf]
  %v31 = vld [vmem:[%s1 + $0x34] sm:$0xf]
  %v32 = vld [vmem:[%s1 + $0x38] sm:$0xf]
  %v33 = vld [vmem:[%s1 + $0x3c] sm:$0xf]
  %v34 = vld [vmem:[%s1 + $0x40] sm:$0xf]
  %v35 = vld [vmem:[%s1 + $0x44] sm:$0xf]
  %v36 = vld [vmem:[%s1 + $0x48] sm:$0xf]
  %v37 = vld [vmem:[%s1 + $0x4c] sm:$0xf]
  %v38 = vld [vmem:[%s1 + $0x50] sm:$0xf]
  %v39 = vld [vmem:[%s1 + $0x54] sm:$0xf]
  %v40 = vld [vmem:[%s1 + $0x58] sm:$0xf]
  %v41 = vld [vmem:[%s1 + $0x5c] sm:$0xf]
  %v42 = vld [vmem:[%s1 + $0x60] sm:$0xf]
  %v43 = vld [vmem:[%s1 + $0x64] sm:$0xf]
  %v44 = vld [vmem:[%s1 + $0x68] sm:$0xf]
  %v45 = vld [vmem:[%s1 + $0x6c] sm:$0xf]
  %v46 = vld [vmem:[%s1 + $0x70] sm:$0xf]
  %v47 = vld [vmem:[%s1 + $0x74] sm:$0xf]
  %v48 = vld [vmem:[%s1 + $0x78] sm:$0xf]
  %v49 = vld [vmem:[%s1 + $0x7c] sm:$0xf]
  %v50 = vld [vmem:[%s1 + $0x80] sm:$0xf]
  %v51 = vld [vmem:[%s1 + $0x84] sm:$0xf]
  %v52 = vld [vmem:[%s1 + $0x88] sm:$0xf]
  %v53 = vld [vmem:[%s1 + $0x8c] sm:$0xf]
  %v54 = vld [vmem:[%s1 + $0x90] sm:$0xf]
  %v55 = vld [vmem:[%s1 + $0x94] sm:$0xf]
  %v56 = vld [vmem:[%s1 + $0x98] sm:$0xf]
  %v57 = vld [vmem:[%s1 + $0x9c] sm:$0xf]
  %v58 = vld [vmem:[%s1 + $0xa0] sm:$0xf]
  %v59 = vld [vmem:[%s1 + $0xa4] sm:$0xf]
  %v60 = vld [vmem:[%s1 + $0xa8] sm:$0xf]
  %v61 = vld [vmem:[%s1 + $0xac] sm:$0xf]
  %v62 = vld [vmem:[%s1 + $0xb0] sm:$0xf]
  %v63 = vld [vmem:[%s1 + $0xb4] sm:$0xf]
  %v64 = vld [vmem:[%s1 + $0xb8] sm:$0xf]
  %v65 = vld [vmem:[%s1 + $0xbc] sm:$0xf]
  %v66 = vld [vmem:[%s1 + $0xc0] sm:$0xf]
  %v67 = vld [vmem:[%s1 + $0xc4] sm:$0xf]
  %v68 = vld [vmem:[%s1 + $0xc8] sm:$0xf]
  %v69 = vld [vmem:[%s1 + $0xcc] sm:$0xf]
  %v70 = vld [vmem:[%s1 + $0xd0] sm:$0xf]
  %v71 = vld [vmem:[%s1 + $0xd4] sm:$0xf]
  %v72 = vld [vmem:[%s1 + $0xd8] sm:$0xf]
  %v73 = vld [vmem:[%s1 + $0xdc] sm:$0xf]
  %v74 = vld [vmem:[%s1 + $0xe0] sm:$0xf]
  %v75 = vld [vmem:[%s1 + $0xe4] sm:$0xf]
  %v76 = vld [vmem:[%s1 + $0xe8] sm:$0xf]
  %v77 = vld [vmem:[%s1 + $0xec] sm:$0xf]
  %v78 = vld [vmem:[%s1 + $0xf0] sm:$0xf]
  %v79 = vld [vmem:[%s1 + $0xf4] sm:$0xf]
  %v80 = vld [vmem:[%s1 + $0xf8] sm:$0xf]
  %v81 = vld [vmem:[%s1 + $0xfc] sm:$0xf]
  %v82 = vld [vmem:[%s1 + $0x100] sm:$0xf]
  %v83 = vld [vmem:[%s1 + $0x104] sm:$0xf]
  %v84 = vld [vmem:[%s1 + $0x108] sm:$0xf]
  %v85 = vld [vmem:[%s1 + $0x10c] sm:$0xf]
  %v86 = vld [vmem:[%s1 + $0x110] sm:$0xf]
  %v87 = vld [vmem:[%s1 + $0x114] sm:$0xf]
  %v88 = vld [vmem:[%s1 + $0x118] sm:$0xf]
  %v89 = vld [vmem:[%s1 + $0x11c] sm:$0xf]
  %v90 = vld [vmem:[%s2] sm:$0x1]
  %v92 = vlaneseq
  %v93 = vshrl.u32 %v92, 7
  %v94 = vsub.s32 0, %v93
  %v95 = vrot.slane %v90, %v94
  %v100 = vunpack.c.l.b16 %v15
  %v101 = vunpack.c.h.b16 %v15
  %v102 = vunpack.c.l.b16 %v16
  %v103 = vunpack.c.h.b16 %v16
  %v104 = vunpack.c.l.b16 %v17
  %v105 = vpack.c.b16 %v100, %v100
  %v106 = vpack.c.b16 %v101, %v101
  %v107 = vpack.c.b16 %v102, %v102
  %v108 = vpack.c.b16 %v103, %v103
  %v109 = vpack.c.b16 %v104, %v104
  %v186 = vunpack.c.l.b16 %v18
  %v187 = vunpack.c.l.b16 %v19
  %v188 = vunpack.c.l.b16 %v20
  %v189 = vunpack.c.l.b16 %v21
  %v190 = vunpack.c.l.b16 %v22
  %v191 = vunpack.c.l.b16 %v23
  %v192 = vunpack.c.l.b16 %v24
  %v193 = vunpack.c.l.b16 %v25
  %v194 = vunpack.c.l.b16 %v26
  %v195 = vunpack.c.l.b16 %v27
  %v196 = vunpack.c.l.b16 %v28
  %v197 = vunpack.c.l.b16 %v29
  %v198 = vunpack.c.l.b16 %v30
  %v199 = vunpack.c.l.b16 %v31
  %v200 = vunpack.c.l.b16 %v32
  %v201 = vunpack.c.l.b16 %v33
  %v202 = vunpack.c.l.b16 %v34
  %v203 = vunpack.c.l.b16 %v35
  %v204 = vunpack.c.l.b16 %v36
  %v205 = vunpack.c.l.b16 %v37
  %v206 = vunpack.c.l.b16 %v38
  %v207 = vunpack.c.l.b16 %v39
  %v208 = vunpack.c.l.b16 %v40
  %v209 = vunpack.c.l.b16 %v41
  %v210 = vunpack.c.l.b16 %v42
  %v211 = vunpack.c.l.b16 %v43
  %v212 = vunpack.c.l.b16 %v44
  %v213 = vunpack.c.l.b16 %v45
  %v214 = vunpack.c.l.b16 %v46
  %v215 = vunpack.c.l.b16 %v47
  %v216 = vunpack.c.l.b16 %v48
  %v217 = vunpack.c.l.b16 %v49
  %v218 = vunpack.c.l.b16 %v50
  %v219 = vunpack.c.l.b16 %v51
  %v220 = vunpack.c.l.b16 %v52
  %v221 = vunpack.c.l.b16 %v53
  %v222 = vunpack.c.l.b16 %v54
  %v223 = vunpack.c.l.b16 %v55
  %v224 = vunpack.c.l.b16 %v56
  %v225 = vunpack.c.l.b16 %v57
  %v226 = vunpack.c.l.b16 %v58
  %v227 = vunpack.c.l.b16 %v59
  %v228 = vunpack.c.l.b16 %v60
  %v229 = vunpack.c.l.b16 %v61
  %v230 = vunpack.c.l.b16 %v62
  %v231 = vunpack.c.l.b16 %v63
  %v232 = vunpack.c.l.b16 %v64
  %v233 = vunpack.c.l.b16 %v65
  %v234 = vunpack.c.l.b16 %v66
  %v235 = vunpack.c.l.b16 %v67
  %v236 = vunpack.c.l.b16 %v68
  %v237 = vunpack.c.l.b16 %v69
  %v238 = vunpack.c.l.b16 %v70
  %v239 = vunpack.c.l.b16 %v71
  %v240 = vunpack.c.l.b16 %v72
  %v241 = vunpack.c.l.b16 %v73
  %v242 = vunpack.c.l.b16 %v74
  %v243 = vunpack.c.l.b16 %v75
  %v244 = vunpack.c.l.b16 %v76
  %v245 = vunpack.c.l.b16 %v77
  %v246 = vunpack.c.l.b16 %v78
  %v247 = vunpack.c.l.b16 %v79
  %v248 = vunpack.c.l.b16 %v80
  %v249 = vunpack.c.l.b16 %v81
  %v250 = vunpack.c.l.b16 %v82
  %v251 = vunpack.c.l.b16 %v83
  %v252 = vunpack.c.l.b16 %v84
  %v253 = vunpack.c.l.b16 %v85
  %v254 = vunpack.c.l.b16 %v86
  %v255 = vunpack.c.l.b16 %v87
  %v256 = vunpack.c.l.b16 %v88
  %v257 = vunpack.c.l.b16 %v89
  %v258 = vpack.c.b16 %v187, %v186
  %v259 = vpack.c.b16 %v189, %v188
  %v260 = vpack.c.b16 %v191, %v190
  %v261 = vpack.c.b16 %v193, %v192
  %v262 = vpack.c.b16 %v195, %v194
  %v263 = vpack.c.b16 %v197, %v196
  %v264 = vpack.c.b16 %v199, %v198
  %v265 = vpack.c.b16 %v201, %v200
  %v266 = vpack.c.b16 %v203, %v202
  %v267 = vpack.c.b16 %v205, %v204
  %v268 = vpack.c.b16 %v207, %v206
  %v269 = vpack.c.b16 %v209, %v208
  %v270 = vpack.c.b16 %v211, %v210
  %v271 = vpack.c.b16 %v213, %v212
  %v272 = vpack.c.b16 %v215, %v214
  %v273 = vpack.c.b16 %v217, %v216
  %v274 = vpack.c.b16 %v219, %v218
  %v275 = vpack.c.b16 %v221, %v220
  %v276 = vpack.c.b16 %v223, %v222
  %v277 = vpack.c.b16 %v225, %v224
  %v278 = vpack.c.b16 %v227, %v226
  %v279 = vpack.c.b16 %v229, %v228
  %v280 = vpack.c.b16 %v231, %v230
  %v281 = vpack.c.b16 %v233, %v232
  %v282 = vpack.c.b16 %v235, %v234
  %v283 = vpack.c.b16 %v237, %v236
  %v284 = vpack.c.b16 %v239, %v238
  %v285 = vpack.c.b16 %v241, %v240
  %v286 = vpack.c.b16 %v243, %v242
  %v287 = vpack.c.b16 %v245, %v244
  %v288 = vpack.c.b16 %v247, %v246
  %v289 = vpack.c.b16 %v249, %v248
  %v290 = vpack.c.b16 %v251, %v250
  %v291 = vpack.c.b16 %v253, %v252
  %v292 = vpack.c.b16 %v255, %v254
  %v293 = vpack.c.b16 %v257, %v256
  %vm330 = vcmask 523264
  %v332 = vsel %vm330, %v109, 0
  %334 = vmatprep.subr.bf16.mxu0 0
  %335 = vmatpush1.bf16.msra.mxu0 %v265
  %336 = vmatprep.subr.bf16.mxu0 0
  %337 = vmatpush1.bf16.msra.mxu0 %v264
  %338 = vmatprep.subr.bf16.mxu0 0
  %339 = vmatpush1.bf16.msra.mxu0 %v263
  %340 = vmatprep.subr.bf16.mxu0 0
  %341 = vmatpush1.bf16.msra.mxu0 %v262
  %342 = vmatprep.subr.bf16.mxu0 0
  %343 = vmatpush1.bf16.msra.mxu0 %v261
  %344 = vmatprep.subr.bf16.mxu0 0
  %345 = vmatpush1.bf16.msra.mxu0 %v260
  %346 = vmatprep.subr.bf16.mxu0 0
  %347 = vmatpush1.bf16.msra.mxu0 %v259
  %348 = vmatprep.subr.bf16.mxu0 0
  %349 = vmatpush1.bf16.msra.mxu0 %v258
  %350 = vmatprep.subr.bf16.mxu0 0
  %351 = vmatpush2.bf16.msra.mxu0 %v273
  %352 = vmatprep.subr.bf16.mxu0 0
  %353 = vmatpush2.bf16.msra.mxu0 %v272
  %354 = vmatprep.subr.bf16.mxu0 0
  %355 = vmatpush2.bf16.msra.mxu0 %v271
  %356 = vmatprep.subr.bf16.mxu0 0
  %357 = vmatpush2.bf16.msra.mxu0 %v270
  %358 = vmatprep.subr.bf16.mxu0 0
  %359 = vmatpush2.bf16.msra.mxu0 %v269
  %360 = vmatprep.subr.bf16.mxu0 0
  %361 = vmatpush2.bf16.msra.mxu0 %v268
  %362 = vmatprep.subr.bf16.mxu0 0
  %363 = vmatpush2.bf16.msra.mxu0 %v267
  %364 = vmatprep.subr.bf16.mxu0 0
  %365 = vmatpush2.bf16.msra.mxu0 %v266
  %366 = vmatprep.mubr.bf16.mxu0 %v106
  %367 = vmatmul.mubr.bf16.gmra.mxu0 %v105
  %v368 = vpop.f32.mrf.mxu0
  %v369 = vadd.f32 %v95, %v368
  %v370 = vpop.f32.mrf.mxu0
  %v371 = vpop.f32.mrf.mxu0
  %v372 = vpop.f32.mrf.mxu0
  %373 = vdwg.mxu0
  %374 = vmatprep.subr.bf16.mxu0 0
  %375 = vmatpush1.bf16.msra.mxu0 %v281
  %376 = vmatprep.subr.bf16.mxu0 0
  %377 = vmatpush1.bf16.msra.mxu0 %v280
  %378 = vmatprep.subr.bf16.mxu0 0
  %379 = vmatpush1.bf16.msra.mxu0 %v279
  %380 = vmatprep.subr.bf16.mxu0 0
  %381 = vmatpush1.bf16.msra.mxu0 %v278
  %382 = vmatprep.subr.bf16.mxu0 0
  %383 = vmatpush1.bf16.msra.mxu0 %v277
  %384 = vmatprep.subr.bf16.mxu0 0
  %385 = vmatpush1.bf16.msra.mxu0 %v276
  %386 = vmatprep.subr.bf16.mxu0 0
  %387 = vmatpush1.bf16.msra.mxu0 %v275
  %388 = vmatprep.subr.bf16.mxu0 0
  %389 = vmatpush1.bf16.msra.mxu0 %v274
  %390 = vmatprep.subr.bf16.mxu0 0
  %391 = vmatpush2.bf16.msra.mxu0 %v289
  %392 = vmatprep.subr.bf16.mxu0 0
  %393 = vmatpush2.bf16.msra.mxu0 %v288
  %394 = vmatprep.subr.bf16.mxu0 0
  %395 = vmatpush2.bf16.msra.mxu0 %v287
  %396 = vmatprep.subr.bf16.mxu0 0
  %397 = vmatpush2.bf16.msra.mxu0 %v286
  %398 = vmatprep.subr.bf16.mxu0 0
  %399 = vmatpush2.bf16.msra.mxu0 %v285
  %400 = vmatprep.subr.bf16.mxu0 0
  %401 = vmatpush2.bf16.msra.mxu0 %v284
  %402 = vmatprep.subr.bf16.mxu0 0
  %403 = vmatpush2.bf16.msra.mxu0 %v283
  %404 = vmatprep.subr.bf16.mxu0 0
  %405 = vmatpush2.bf16.msra.mxu0 %v282
  %406 = vmatprep.mubr.bf16.mxu0 %v108
  %407 = vmatmul.mubr.bf16.gmra.mxu0 %v107
  %v408 = vpop.f32.mrf.mxu0
  %v409 = vadd.f32 %v369, %v408
  %v410 = vpop.f32.mrf.mxu0
  %v411 = vpop.f32.mrf.mxu0
  %v412 = vpop.f32.mrf.mxu0
  %413 = vdwg.mxu0
  %414 = vmatprep.subr.bf16.mxu0 0
  %415 = vmatpush1.bf16.msra.mxu0 0
  %416 = vmatprep.subr.bf16.mxu0 0
  %417 = vmatpush1.bf16.msra.mxu0 0
  %418 = vmatprep.subr.bf16.mxu0 0
  %419 = vmatpush1.bf16.msra.mxu0 0
  %420 = vmatprep.subr.bf16.mxu0 0
  %421 = vmatpush1.bf16.msra.mxu0 0
  %422 = vmatprep.subr.bf16.mxu0 0
  %423 = vmatpush1.bf16.msra.mxu0 %v293
  %424 = vmatprep.subr.bf16.mxu0 0
  %425 = vmatpush1.bf16.msra.mxu0 %v292
  %426 = vmatprep.subr.bf16.mxu0 0
  %427 = vmatpush1.bf16.msra.mxu0 %v291
  %428 = vmatprep.subr.bf16.mxu0 0
  %429 = vmatpush1.bf16.msra.mxu0 %v290
  %430 = vmatprep.subr.bf16.mxu0 0
  %431 = vmatpush2.bf16.msra.mxu0 0
  %432 = vmatprep.subr.bf16.mxu0 0
  %433 = vmatpush2.bf16.msra.mxu0 0
  %434 = vmatprep.subr.bf16.mxu0 0
  %435 = vmatpush2.bf16.msra.mxu0 0
  %436 = vmatprep.subr.bf16.mxu0 0
  %437 = vmatpush2.bf16.msra.mxu0 0
  %438 = vmatprep.subr.bf16.mxu0 0
  %439 = vmatpush2.bf16.msra.mxu0 0
  %440 = vmatprep.subr.bf16.mxu0 0
  %441 = vmatpush2.bf16.msra.mxu0 0
  %442 = vmatprep.subr.bf16.mxu0 0
  %443 = vmatpush2.bf16.msra.mxu0 0
  %444 = vmatprep.subr.bf16.mxu0 0
  %445 = vmatpush2.bf16.msra.mxu0 0
  %446 = vmatprep.mubr.bf16.mxu0 0
  %447 = vmatmul.mubr.bf16.gmra.mxu0 %v332
  %v448 = vpop.f32.mrf.mxu0
  %v449 = vadd.f32 %v409, %v448
  %v450 = vpop.f32.mrf.mxu0
  %v451 = vpop.f32.mrf.mxu0
  %v452 = vpop.f32.mrf.mxu0
  %453 = vdwg.mxu0
  %v454 = vpack.c.bf16 %v449, %v449
  %455 = vst [vmem:[%s3] sm:$0xf] %v454
  // Predicated region
  $region14: #{vae_forward.12} parent=0 // pred_check
    _
  $region15: #{vae_forward.12} parent=0 // pred_check_branch
    %457 = sbr.rel (0) target = $region17
  $region16: #{vae_forward.12} parent=0 // pred_region
    _
  $region17: #{vae_forward.12} parent=0 // pred_fallthru
    _
  // Predicated region
  $region18: #{vae_forward.12} parent=0 // pred_check
    _
  $region19: #{vae_forward.12} parent=0 // pred_check_branch
    %459 = sbr.rel (0) target = $region21
  $region20: #{vae_forward.12} parent=0 // pred_region
    _
  $region21: #{vae_forward.12} parent=0 // pred_fallthru
    _

// kernel: vae_forward.13
$region0: #{vae_forward.13}
  #allocation0 [shape = 'u32[]', space=smem, size = 0x4, offset = 0x4, fixed_abs, tag = 'smem constant byte address 0x4 - core index']
  #allocation1 [shape = 'u32[144,128]{1,0:T(1,128)}', space=vmem, size = 0x12000, scoped, tag = 'internal scratch']
  %s0 = inlined_call_operand.vmem [shape: bf16[2,512], index: 0, kind: input, shape index: {}]
  %s1 = inlined_call_operand.vmem [shape: bf16[512,256], index: 1, kind: input, shape index: {}]
  %s2 = inlined_call_operand.vmem [shape: f32[1,256], index: 2, kind: input, shape index: {}]
  %s3 = inlined_call_operand.vmem [shape: f32[2,128], index: 3, kind: input, shape index: {}]
  %s4 = inlined_call_operand.vmem [shape: bf16[128,512], index: 4, kind: input, shape index: {}]
  %s5 = inlined_call_operand.vmem [shape: f32[1,512], index: 5, kind: input, shape index: {}]
  %s6 = inlined_call_operand.hbm [shape: f32[2,128], index: 6, kind: output, shape index: {0}]
  %s7 = inlined_call_operand.hbm [shape: f32[2,128], index: 7, kind: output, shape index: {1}]
  %s8 = inlined_call_operand.vmem [shape: bf16[2,512], index: 8, kind: output, shape index: {2}]
  %9 = xla_tuple %s6, %s7, %s8
  %s10 = sld [smem:[#allocation0]]
  $region50: #{vae_forward.13} parent=0
    _
  %s12 = ssub.s32 1, %s10
  %s13 = scalar_select 0, %s12, %s10
  $region1: #{vae_forward.13} parent=0
    #allocation2 [shape = 'u8[1024]{0}', space=vmem, size = 0x400, scoped, tag = 'output window, operand 0, single buffered']
    #allocation3 [shape = 's32[1]{0}', space=sflag, size = 0x4, scoped, tag = 'scoped memory for vae_forward.13']
    #allocation4 [shape = 'u8[1024]{0}', space=vmem, size = 0x400, scoped, tag = 'output window, operand 1, single buffered']
    #allocation5 [shape = 's32[1]{0}', space=sflag, size = 0x4, scoped, tag = 'scoped memory for vae_forward.13']
    %14 = vsyncpa [#allocation3], 0
    %15 = vsyncpa [#allocation5], 0
    // Predicated region
    $region2: #{vae_forward.13} parent=1 // pred_check
      _
    $region3: #{vae_forward.13} parent=1 // pred_check_branch
      %17 = sbr.rel (0) target = $region5
    $region4: #{vae_forward.13} parent=1 // pred_region
      _
    $region5: #{vae_forward.13} parent=1 // pred_fallthru
      _
    // Predicated region
    $region6: #{vae_forward.13} parent=1 // pred_check
      _
    $region7: #{vae_forward.13} parent=1 // pred_check_branch
      %19 = sbr.rel (0) target = $region9
    $region8: #{vae_forward.13} parent=1 // pred_region
      _
    $region9: #{vae_forward.13} parent=1 // pred_fallthru
      _
    // Predicated region
    $region10: #{vae_forward.13} parent=1 // pred_check
      _
    $region11: #{vae_forward.13} parent=1 // pred_check_branch
      %21 = sbr.rel (0) target = $region13
    $region12: #{vae_forward.13} parent=1 // pred_region
      _
    $region13: #{vae_forward.13} parent=1 // pred_fallthru
      _
    // Predicated region
    $region14: #{vae_forward.13} parent=1 // pred_check
      _
    $region15: #{vae_forward.13} parent=1 // pred_check_branch
      %23 = sbr.rel (0) target = $region17
    $region16: #{vae_forward.13} parent=1 // pred_region
      _
    $region17: #{vae_forward.13} parent=1 // pred_fallthru
      _
    // Predicated region
    $region18: #{vae_forward.13} parent=1 // pred_check
      _
    $region19: #{vae_forward.13} parent=1 // pred_check_branch
      %25 = sbr.rel (0) target = $region21
    $region20: #{vae_forward.13} parent=1 // pred_region
      _
    $region21: #{vae_forward.13} parent=1 // pred_fallthru
      _
    // Predicated region
    $region22: #{vae_forward.13} parent=1 // pred_check
      _
    $region23: #{vae_forward.13} parent=1 // pred_check_branch
      %27 = sbr.rel (0) target = $region25
    $region24: #{vae_forward.13} parent=1 // pred_region
      _
    $region25: #{vae_forward.13} parent=1 // pred_fallthru
      _
    %v29 = vld [vmem:[%s0] sm:$0xf]
    %v30 = vld [vmem:[%s1] sm:$0xff]
    %v31 = vld [vmem:[%s1 + $0x8] sm:$0xff]
    %v32 = vld [vmem:[%s1 + $0x10] sm:$0xff]
    %v33 = vld [vmem:[%s1 + $0x18] sm:$0xff]
    %v34 = vld [vmem:[%s1 + $0x20] sm:$0xff]
    %v35 = vld [vmem:[%s1 + $0x28] sm:$0xff]
    %v36 = vld [vmem:[%s1 + $0x30] sm:$0xff]
    %v37 = vld [vmem:[%s1 + $0x38] sm:$0xff]
    %v38 = vld [vmem:[%s1 + $0x40] sm:$0xff]
    %v39 = vld [vmem:[%s1 + $0x48] sm:$0xff]
    %v40 = vld [vmem:[%s1 + $0x50] sm:$0xff]
    %v41 = vld [vmem:[%s1 + $0x58] sm:$0xff]
    %v42 = vld [vmem:[%s1 + $0x60] sm:$0xff]
    %v43 = vld [vmem:[%s1 + $0x68] sm:$0xff]
    %v44 = vld [vmem:[%s1 + $0x70] sm:$0xff]
    %v45 = vld [vmem:[%s1 + $0x78] sm:$0xff]
    %v46 = vld [vmem:[%s1 + $0x80] sm:$0xff]
    %v47 = vld [vmem:[%s1 + $0x88] sm:$0xff]
    %v48 = vld [vmem:[%s1 + $0x90] sm:$0xff]
    %v49 = vld [vmem:[%s1 + $0x98] sm:$0xff]
    %v50 = vld [vmem:[%s1 + $0xa0] sm:$0xff]
    %v51 = vld [vmem:[%s1 + $0xa8] sm:$0xff]
    %v52 = vld [vmem:[%s1 + $0xb0] sm:$0xff]
    %v53 = vld [vmem:[%s1 + $0xb8] sm:$0xff]
    %v54 = vld [vmem:[%s1 + $0xc0] sm:$0xff]
    %v55 = vld [vmem:[%s1 + $0xc8] sm:$0xff]
    %v56 = vld [vmem:[%s1 + $0xd0] sm:$0xff]
    %v57 = vld [vmem:[%s1 + $0xd8] sm:$0xff]
    %v58 = vld [vmem:[%s1 + $0xe0] sm:$0xff]
    %v59 = vld [vmem:[%s1 + $0xe8] sm:$0xff]
    %v60 = vld [vmem:[%s1 + $0xf0] sm:$0xff]
    %v61 = vld [vmem:[%s1 + $0xf8] sm:$0xff]
    %v62 = vld [vmem:[%s1 + $0x100] sm:$0xff]
    %v63 = vld [vmem:[%s1 + $0x108] sm:$0xff]
    %v64 = vld [vmem:[%s1 + $0x110] sm:$0xff]
    %v65 = vld [vmem:[%s1 + $0x118] sm:$0xff]
    %v66 = vld [vmem:[%s1 + $0x120] sm:$0xff]
    %v67 = vld [vmem:[%s1 + $0x128] sm:$0xff]
    %v68 = vld [vmem:[%s1 + $0x130] sm:$0xff]
    %v69 = vld [vmem:[%s1 + $0x138] sm:$0xff]
    %v70 = vld [vmem:[%s1 + $0x140] sm:$0xff]
    %v71 = vld [vmem:[%s1 + $0x148] sm:$0xff]
    %v72 = vld [vmem:[%s1 + $0x150] sm:$0xff]
    %v73 = vld [vmem:[%s1 + $0x158] sm:$0xff]
    %v74 = vld [vmem:[%s1 + $0x160] sm:$0xff]
    %v75 = vld [vmem:[%s1 + $0x168] sm:$0xff]
    %v76 = vld [vmem:[%s1 + $0x170] sm:$0xff]
    %v77 = vld [vmem:[%s1 + $0x178] sm:$0xff]
    %v78 = vld [vmem:[%s1 + $0x180] sm:$0xff]
    %v79 = vld [vmem:[%s1 + $0x188] sm:$0xff]
    %v80 = vld [vmem:[%s1 + $0x190] sm:$0xff]
    %v81 = vld [vmem:[%s1 + $0x198] sm:$0xff]
    %v82 = vld [vmem:[%s1 + $0x1a0] sm:$0xff]
    %v83 = vld [vmem:[%s1 + $0x1a8] sm:$0xff]
    %v84 = vld [vmem:[%s1 + $0x1b0] sm:$0xff]
    %v85 = vld [vmem:[%s1 + $0x1b8] sm:$0xff]
    %v86 = vld [vmem:[%s1 + $0x1c0] sm:$0xff]
    %v87 = vld [vmem:[%s1 + $0x1c8] sm:$0xff]
    %v88 = vld [vmem:[%s1 + $0x1d0] sm:$0xff]
    %v89 = vld [vmem:[%s1 + $0x1d8] sm:$0xff]
    %v90 = vld [vmem:[%s1 + $0x1e0] sm:$0xff]
    %v91 = vld [vmem:[%s1 + $0x1e8] sm:$0xff]
    %v92 = vld [vmem:[%s1 + $0x1f0] sm:$0xff]
    %v93 = vld [vmem:[%s1 + $0x1f8] sm:$0xff]
    %v94 = vld [vmem:[%s2] sm:$0x3]
    %v96 = vlaneseq
    %v97 = vshrl.u32 %v96, 7
    %v98 = vsub.s32 0, %v97
    %v99 = vrot.slane %v94, %v98
    %v100 = vlaneseq
    %v101 = vshrl.u32 %v100, 7
    %v102 = vsub.s32 1, %v101
    %v103 = vrot.slane %v94, %v102
    %v108 = vunpack.c.l.s4 1966171168
    %v109 = vunpack.c.0.s8 %v108
    %v110 = vlaneseq
    %v111 = vshrl.u32 %v110, 7
    %v112 = vsub.s32 %v109, %v111
    %v113 = vrot.slane %v29, %v112
    %v114 = vcombine.high %v113, %v113
    %v116 = vunpack.c.l.s4 1966171168
    %v117 = vunpack.c.0.s8 %v116
    %v118 = vlaneseq
    %v119 = vshrl.u32 %v118, 7
    %v120 = vsub.s32 %v117, %v119
    %v121 = vrot.slane %v113, %v120
    %v123 = vunpack.c.l.s4 1966171168
    %v124 = vunpack.c.0.s8 %v123
    %v125 = vlaneseq
    %v126 = vshrl.u32 %v125, 7
    %v127 = vsub.s32 %v124, %v126
    %v128 = vrot.slane %v114, %v127
    %v129 = vcombine.high %v121, %v121
    %v130 = vcombine.high %v128, %v128
    %v199 = vunpack.c.l.b16 %v30
    %v200 = vunpack.c.h.b16 %v30
    %v201 = vunpack.c.l.b16 %v31
    %v202 = vunpack.c.h.b16 %v31
    %v203 = vunpack.c.l.b16 %v32
    %v204 = vunpack.c.h.b16 %v32
    %v205 = vunpack.c.l.b16 %v33
    %v206 = vunpack.c.h.b16 %v33
    %v207 = vunpack.c.l.b16 %v34
    %v208 = vunpack.c.h.b16 %v34
    %v209 = vunpack.c.l.b16 %v35
    %v210 = vunpack.c.h.b16 %v35
    %v211 = vunpack.c.l.b16 %v36
    %v212 = vunpack.c.h.b16 %v36
    %v213 = vunpack.c.l.b16 %v37
    %v214 = vunpack.c.h.b16 %v37
    %v215 = vunpack.c.l.b16 %v38
    %v216 = vunpack.c.h.b16 %v38
    %v217 = vunpack.c.l.b16 %v39
    %v218 = vunpack.c.h.b16 %v39
    %v219 = vunpack.c.l.b16 %v40
    %v220 = vunpack.c.h.b16 %v40
    %v221 = vunpack.c.l.b16 %v41
    %v222 = vunpack.c.h.b16 %v41
    %v223 = vunpack.c.l.b16 %v42
    %v224 = vunpack.c.h.b16 %v42
    %v225 = vunpack.c.l.b16 %v43
    %v226 = vunpack.c.h.b16 %v43
    %v227 = vunpack.c.l.b16 %v44
    %v228 = vunpack.c.h.b16 %v44
    %v229 = vunpack.c.l.b16 %v45
    %v230 = vunpack.c.h.b16 %v45
    %v231 = vunpack.c.l.b16 %v46
    %v232 = vunpack.c.h.b16 %v46
    %v233 = vunpack.c.l.b16 %v47
    %v234 = vunpack.c.h.b16 %v47
    %v235 = vunpack.c.l.b16 %v48
    %v236 = vunpack.c.h.b16 %v48
    %v237 = vunpack.c.l.b16 %v49
    %v238 = vunpack.c.h.b16 %v49
    %v239 = vunpack.c.l.b16 %v50
    %v240 = vunpack.c.h.b16 %v50
    %v241 = vunpack.c.l.b16 %v51
    %v242 = vunpack.c.h.b16 %v51
    %v243 = vunpack.c.l.b16 %v52
    %v244 = vunpack.c.h.b16 %v52
    %v245 = vunpack.c.l.b16 %v53
    %v246 = vunpack.c.h.b16 %v53
    %v247 = vunpack.c.l.b16 %v54
    %v248 = vunpack.c.h.b16 %v54
    %v249 = vunpack.c.l.b16 %v55
    %v250 = vunpack.c.h.b16 %v55
    %v251 = vunpack.c.l.b16 %v56
    %v252 = vunpack.c.h.b16 %v56
    %v253 = vunpack.c.l.b16 %v57
    %v254 = vunpack.c.h.b16 %v57
    %v255 = vunpack.c.l.b16 %v58
    %v256 = vunpack.c.h.b16 %v58
    %v257 = vunpack.c.l.b16 %v59
    %v258 = vunpack.c.h.b16 %v59
    %v259 = vunpack.c.l.b16 %v60
    %v260 = vunpack.c.h.b16 %v60
    %v261 = vunpack.c.l.b16 %v61
    %v262 = vunpack.c.h.b16 %v61
    %v263 = vunpack.c.l.b16 %v62
    %v264 = vunpack.c.h.b16 %v62
    %v265 = vunpack.c.l.b16 %v63
    %v266 = vunpack.c.h.b16 %v63
    %v267 = vunpack.c.l.b16 %v64
    %v268 = vunpack.c.h.b16 %v64
    %v269 = vunpack.c.l.b16 %v65
    %v270 = vunpack.c.h.b16 %v65
    %v271 = vunpack.c.l.b16 %v66
    %v272 = vunpack.c.h.b16 %v66
    %v273 = vunpack.c.l.b16 %v67
    %v274 = vunpack.c.h.b16 %v67
    %v275 = vunpack.c.l.b16 %v68
    %v276 = vunpack.c.h.b16 %v68
    %v277 = vunpack.c.l.b16 %v69
    %v278 = vunpack.c.h.b16 %v69
    %v279 = vunpack.c.l.b16 %v70
    %v280 = vunpack.c.h.b16 %v70
    %v281 = vunpack.c.l.b16 %v71
    %v282 = vunpack.c.h.b16 %v71
    %v283 = vunpack.c.l.b16 %v72
    %v284 = vunpack.c.h.b16 %v72
    %v285 = vunpack.c.l.b16 %v73
    %v286 = vunpack.c.h.b16 %v73
    %v287 = vunpack.c.l.b16 %v74
    %v288 = vunpack.c.h.b16 %v74
    %v289 = vunpack.c.l.b16 %v75
    %v290 = vunpack.c.h.b16 %v75
    %v291 = vunpack.c.l.b16 %v76
    %v292 = vunpack.c.h.b16 %v76
    %v293 = vunpack.c.l.b16 %v77
    %v294 = vunpack.c.h.b16 %v77
    %v295 = vunpack.c.l.b16 %v78
    %v296 = vunpack.c.h.b16 %v78
    %v297 = vunpack.c.l.b16 %v79
    %v298 = vunpack.c.h.b16 %v79
    %v299 = vunpack.c.l.b16 %v80
    %v300 = vunpack.c.h.b16 %v80
    %v301 = vunpack.c.l.b16 %v81
    %v302 = vunpack.c.h.b16 %v81
    %v303 = vunpack.c.l.b16 %v82
    %v304 = vunpack.c.h.b16 %v82
    %v305 = vunpack.c.l.b16 %v83
    %v306 = vunpack.c.h.b16 %v83
    %v307 = vunpack.c.l.b16 %v84
    %v308 = vunpack.c.h.b16 %v84
    %v309 = vunpack.c.l.b16 %v85
    %v310 = vunpack.c.h.b16 %v85
    %v311 = vunpack.c.l.b16 %v86
    %v312 = vunpack.c.h.b16 %v86
    %v313 = vunpack.c.l.b16 %v87
    %v314 = vunpack.c.h.b16 %v87
    %v315 = vunpack.c.l.b16 %v88
    %v316 = vunpack.c.h.b16 %v88
    %v317 = vunpack.c.l.b16 %v89
    %v318 = vunpack.c.h.b16 %v89
    %v319 = vunpack.c.l.b16 %v90
    %v320 = vunpack.c.h.b16 %v90
    %v321 = vunpack.c.l.b16 %v91
    %v322 = vunpack.c.h.b16 %v91
    %v323 = vunpack.c.l.b16 %v92
    %v324 = vunpack.c.h.b16 %v92
    %v325 = vunpack.c.l.b16 %v93
    %v326 = vunpack.c.h.b16 %v93
    %v327 = vpack.c.b16 %v201, %v199
    %v328 = vpack.c.b16 %v202, %v200
    %v329 = vpack.c.b16 %v205, %v203
    %v330 = vpack.c.b16 %v206, %v204
    %v331 = vpack.c.b16 %v209, %v207
    %v332 = vpack.c.b16 %v210, %v208
    %v333 = vpack.c.b16 %v213, %v211
    %v334 = vpack.c.b16 %v214, %v212
    %v335 = vpack.c.b16 %v217, %v215
    %v336 = vpack.c.b16 %v218, %v216
    %v337 = vpack.c.b16 %v221, %v219
    %v338 = vpack.c.b16 %v222, %v220
    %v339 = vpack.c.b16 %v225, %v223
    %v340 = vpack.c.b16 %v226, %v224
    %v341 = vpack.c.b16 %v229, %v227
    %v342 = vpack.c.b16 %v230, %v228
    %v343 = vpack.c.b16 %v233, %v231
    %v344 = vpack.c.b16 %v234, %v232
    %v345 = vpack.c.b16 %v237, %v235
    %v346 = vpack.c.b16 %v238, %v236
    %v347 = vpack.c.b16 %v241, %v239
    %v348 = vpack.c.b16 %v242, %v240
    %v349 = vpack.c.b16 %v245, %v243
    %v350 = vpack.c.b16 %v246, %v244
    %v351 = vpack.c.b16 %v249, %v247
    %v352 = vpack.c.b16 %v250, %v248
    %v353 = vpack.c.b16 %v253, %v251
    %v354 = vpack.c.b16 %v254, %v252
    %v355 = vpack.c.b16 %v257, %v255
    %v356 = vpack.c.b16 %v258, %v256
    %v357 = vpack.c.b16 %v261, %v259
    %v358 = vpack.c.b16 %v262, %v260
    %v359 = vpack.c.b16 %v265, %v263
    %v360 = vpack.c.b16 %v266, %v264
    %v361 = vpack.c.b16 %v269, %v267
    %v362 = vpack.c.b16 %v270, %v268
    %v363 = vpack.c.b16 %v273, %v271
    %v364 = vpack.c.b16 %v274, %v272
    %v365 = vpack.c.b16 %v277, %v275
    %v366 = vpack.c.b16 %v278, %v276
    %v367 = vpack.c.b16 %v281, %v279
    %v368 = vpack.c.b16 %v282, %v280
    %v369 = vpack.c.b16 %v285, %v283
    %v370 = vpack.c.b16 %v286, %v284
    %v371 = vpack.c.b16 %v289, %v287
    %v372 = vpack.c.b16 %v290, %v288
    %v373 = vpack.c.b16 %v293, %v291
    %v374 = vpack.c.b16 %v294, %v292
    %v375 = vpack.c.b16 %v297, %v295
    %v376 = vpack.c.b16 %v298, %v296
    %v377 = vpack.c.b16 %v301, %v299
    %v378 = vpack.c.b16 %v302, %v300
    %v379 = vpack.c.b16 %v305, %v303
    %v380 = vpack.c.b16 %v306, %v304
    %v381 = vpack.c.b16 %v309, %v307
    %v382 = vpack.c.b16 %v310, %v308
    %v383 = vpack.c.b16 %v313, %v311
    %v384 = vpack.c.b16 %v314, %v312
    %v385 = vpack.c.b16 %v317, %v315
    %v386 = vpack.c.b16 %v318, %v316
    %v387 = vpack.c.b16 %v321, %v319
    %v388 = vpack.c.b16 %v322, %v320
    %v389 = vpack.c.b16 %v325, %v323
    %v390 = vpack.c.b16 %v326, %v324
    %455 = vmatprep.subr.bf16.mxu0 %v342
    %456 = vmatpush1.bf16.msra.mxu0 %v341
    %457 = vmatprep.subr.bf16.mxu0 %v340
    %458 = vmatpush1.bf16.msra.mxu0 %v339
    %459 = vmatprep.subr.bf16.mxu0 %v338
    %460 = vmatpush1.bf16.msra.mxu0 %v337
    %461 = vmatprep.subr.bf16.mxu0 %v336
    %462 = vmatpush1.bf16.msra.mxu0 %v335
    %463 = vmatprep.subr.bf16.mxu0 %v334
    %464 = vmatpush1.bf16.msra.mxu0 %v333
    %465 = vmatprep.subr.bf16.mxu0 %v332
    %466 = vmatpush1.bf16.msra.mxu0 %v331
    %467 = vmatprep.subr.bf16.mxu0 %v330
    %468 = vmatpush1.bf16.msra.mxu0 %v329
    %469 = vmatprep.subr.bf16.mxu0 %v328
    %470 = vmatpush1.bf16.msra.mxu0 %v327
    %471 = vmatprep.subr.bf16.mxu0 %v358
    %472 = vmatpush2.bf16.msra.mxu0 %v357
    %473 = vmatprep.subr.bf16.mxu0 %v356
    %474 = vmatpush2.bf16.msra.mxu0 %v355
    %475 = vmatprep.subr.bf16.mxu0 %v354
    %476 = vmatpush2.bf16.msra.mxu0 %v353
    %477 = vmatprep.subr.bf16.mxu0 %v352
    %478 = vmatpush2.bf16.msra.mxu0 %v351
    %479 = vmatprep.subr.bf16.mxu0 %v350
    %480 = vmatpush2.bf16.msra.mxu0 %v349
    %481 = vmatprep.subr.bf16.mxu0 %v348
    %482 = vmatpush2.bf16.msra.mxu0 %v347
    %483 = vmatprep.subr.bf16.mxu0 %v346
    %484 = vmatpush2.bf16.msra.mxu0 %v345
    %485 = vmatprep.subr.bf16.mxu0 %v344
    %486 = vmatpush2.bf16.msra.mxu0 %v343
    %487 = vmatprep.mubr.bf16.mxu0 %v128
    %488 = vmatmul.mubr.bf16.gmra.mxu0 %v121
    %v489 = vpop.f32.mrf.mxu0
    %v490 = vadd.f32 %v99, %v489
    %v491 = vpop.f32.mrf.mxu0
    %v492 = vadd.f32 %v103, %v491
    %v493 = vpop.f32.mrf.mxu0
    %v494 = vpop.f32.mrf.mxu0
    %495 = vdwg.mxu0
    %496 = vmatprep.subr.bf16.mxu0 %v374
    %497 = vmatpush1.bf16.msra.mxu0 %v373
    %498 = vmatprep.subr.bf16.mxu0 %v372
    %499 = vmatpush1.bf16.msra.mxu0 %v371
    %500 = vmatprep.subr.bf16.mxu0 %v370
    %501 = vmatpush1.bf16.msra.mxu0 %v369
    %502 = vmatprep.subr.bf16.mxu0 %v368
    %503 = vmatpush1.bf16.msra.mxu0 %v367
    %504 = vmatprep.subr.bf16.mxu0 %v366
    %505 = vmatpush1.bf16.msra.mxu0 %v365
    %506 = vmatprep.subr.bf16.mxu0 %v364
    %507 = vmatpush1.bf16.msra.mxu0 %v363
    %508 = vmatprep.subr.bf16.mxu0 %v362
    %509 = vmatpush1.bf16.msra.mxu0 %v361
    %510 = vmatprep.subr.bf16.mxu0 %v360
    %511 = vmatpush1.bf16.msra.mxu0 %v359
    %512 = vmatprep.subr.bf16.mxu0 %v390
    %513 = vmatpush2.bf16.msra.mxu0 %v389
    %514 = vmatprep.subr.bf16.mxu0 %v388
    %515 = vmatpush2.bf16.msra.mxu0 %v387
    %516 = vmatprep.subr.bf16.mxu0 %v386
    %517 = vmatpush2.bf16.msra.mxu0 %v385
    %518 = vmatprep.subr.bf16.mxu0 %v384
    %519 = vmatpush2.bf16.msra.mxu0 %v383
    %520 = vmatprep.subr.bf16.mxu0 %v382
    %521 = vmatpush2.bf16.msra.mxu0 %v381
    %522 = vmatprep.subr.bf16.mxu0 %v380
    %523 = vmatpush2.bf16.msra.mxu0 %v379
    %524 = vmatprep.subr.bf16.mxu0 %v378
    %525 = vmatpush2.bf16.msra.mxu0 %v377
    %526 = vmatprep.subr.bf16.mxu0 %v376
    %527 = vmatpush2.bf16.msra.mxu0 %v375
    %528 = vmatprep.mubr.bf16.mxu0 %v130
    %529 = vmatmul.mubr.bf16.gmra.mxu0 %v129
    %v530 = vpop.f32.mrf.mxu0
    %v531 = vadd.f32 %v490, %v530
    %v532 = vpop.f32.mrf.mxu0
    %v533 = vadd.f32 %v492, %v532
    %v534 = vpop.f32.mrf.mxu0
    %v535 = vpop.f32.mrf.mxu0
    %536 = vdwg.mxu0
    %v537 = vld [vmem:[%s3] sm:$0x3]
    %v538 = vmul.f32 %v533, 0.5
    %v539 = vmul.f32 %v538, 1.442695
    %v540 = vpow.pop %v539
    %v541 = vmul.f32 %v537, %v540
    %v542 = vadd.f32 %v531, %v541
    %v543 = vpack.c.bf16 %v542, %v542
    %v544 = vld [vmem:[%s4] sm:$0xff]
    %v545 = vld [vmem:[%s4 + $0x8] sm:$0xff]
    %v546 = vld [vmem:[%s4 + $0x10] sm:$0xff]
    %v547 = vld [vmem:[%s4 + $0x18] sm:$0xff]
    %v548 = vld [vmem:[%s4 + $0x20] sm:$0xff]
    %v549 = vld [vmem:[%s4 + $0x28] sm:$0xff]
    %v550 = vld [vmem:[%s4 + $0x30] sm:$0xff]
    %v551 = vld [vmem:[%s4 + $0x38] sm:$0xff]
    %v552 = vld [vmem:[%s4 + $0x40] sm:$0xff]
    %v553 = vld [vmem:[%s4 + $0x48] sm:$0xff]
    %v554 = vld [vmem:[%s4 + $0x50] sm:$0xff]
    %v555 = vld [vmem:[%s4 + $0x58] sm:$0xff]
    %v556 = vld [vmem:[%s4 + $0x60] sm:$0xff]
    %v557 = vld [vmem:[%s4 + $0x68] sm:$0xff]
    %v558 = vld [vmem:[%s4 + $0x70] sm:$0xff]
    %v559 = vld [vmem:[%s4 + $0x78] sm:$0xff]
    %v560 = vld [vmem:[%s4 + $0x80] sm:$0xff]
    %v561 = vld [vmem:[%s4 + $0x88] sm:$0xff]
    %v562 = vld [vmem:[%s4 + $0x90] sm:$0xff]
    %v563 = vld [vmem:[%s4 + $0x98] sm:$0xff]
    %v564 = vld [vmem:[%s4 + $0xa0] sm:$0xff]
    %v565 = vld [vmem:[%s4 + $0xa8] sm:$0xff]
    %v566 = vld [vmem:[%s4 + $0xb0] sm:$0xff]
    %v567 = vld [vmem:[%s4 + $0xb8] sm:$0xff]
    %v568 = vld [vmem:[%s4 + $0xc0] sm:$0xff]
    %v569 = vld [vmem:[%s4 + $0xc8] sm:$0xff]
    %v570 = vld [vmem:[%s4 + $0xd0] sm:$0xff]
    %v571 = vld [vmem:[%s4 + $0xd8] sm:$0xff]
    %v572 = vld [vmem:[%s4 + $0xe0] sm:$0xff]
    %v573 = vld [vmem:[%s4 + $0xe8] sm:$0xff]
    %v574 = vld [vmem:[%s4 + $0xf0] sm:$0xff]
    %v575 = vld [vmem:[%s4 + $0xf8] sm:$0xff]
    %v576 = vld [vmem:[%s5] sm:$0xf]
    %v578 = vlaneseq
    %v579 = vshrl.u32 %v578, 7
    %v580 = vsub.s32 0, %v579
    %v581 = vrot.slane %v576, %v580
    %v582 = vlaneseq
    %v583 = vshrl.u32 %v582, 7
    %v584 = vsub.s32 1, %v583
    %v585 = vrot.slane %v576, %v584
    %v586 = vlaneseq
    %v587 = vshrl.u32 %v586, 7
    %v588 = vsub.s32 2, %v587
    %v589 = vrot.slane %v576, %v588
    %v590 = vlaneseq
    %v591 = vshrl.u32 %v590, 7
    %v592 = vsub.s32 3, %v591
    %v593 = vrot.slane %v576, %v592
    %v630 = vunpack.c.l.b16 %v544
    %v631 = vunpack.c.h.b16 %v544
    %v632 = vunpack.c.l.b16 %v545
    %v633 = vunpack.c.h.b16 %v545
    %v634 = vunpack.c.l.b16 %v546
    %v635 = vunpack.c.h.b16 %v546
    %v636 = vunpack.c.l.b16 %v547
    %v637 = vunpack.c.h.b16 %v547
    %v638 = vunpack.c.l.b16 %v548
    %v639 = vunpack.c.h.b16 %v548
    %v640 = vunpack.c.l.b16 %v549
    %v641 = vunpack.c.h.b16 %v549
    %v642 = vunpack.c.l.b16 %v550
    %v643 = vunpack.c.h.b16 %v550
    %v644 = vunpack.c.l.b16 %v551
    %v645 = vunpack.c.h.b16 %v551
    %v646 = vunpack.c.l.b16 %v552
    %v647 = vunpack.c.h.b16 %v552
    %v648 = vunpack.c.l.b16 %v553
    %v649 = vunpack.c.h.b16 %v553
    %v650 = vunpack.c.l.b16 %v554
    %v651 = vunpack.c.h.b16 %v554
    %v652 = vunpack.c.l.b16 %v555
    %v653 = vunpack.c.h.b16 %v555
    %v654 = vunpack.c.l.b16 %v556
    %v655 = vunpack.c.h.b16 %v556
    %v656 = vunpack.c.l.b16 %v557
    %v657 = vunpack.c.h.b16 %v557
    %v658 = vunpack.c.l.b16 %v558
    %v659 = vunpack.c.h.b16 %v558
    %v660 = vunpack.c.l.b16 %v559
    %v661 = vunpack.c.h.b16 %v559
    %v662 = vunpack.c.l.b16 %v560
    %v663 = vunpack.c.h.b16 %v560
    %v664 = vunpack.c.l.b16 %v561
    %v665 = vunpack.c.h.b16 %v561
    %v666 = vunpack.c.l.b16 %v562
    %v667 = vunpack.c.h.b16 %v562
    %v668 = vunpack.c.l.b16 %v563
    %v669 = vunpack.c.h.b16 %v563
    %v670 = vunpack.c.l.b16 %v564
    %v671 = vunpack.c.h.b16 %v564
    %v672 = vunpack.c.l.b16 %v565
    %v673 = vunpack.c.h.b16 %v565
    %v674 = vunpack.c.l.b16 %v566
    %v675 = vunpack.c.h.b16 %v566
    %v676 = vunpack.c.l.b16 %v567
    %v677 = vunpack.c.h.b16 %v567
    %v678 = vunpack.c.l.b16 %v568
    %v679 = vunpack.c.h.b16 %v568
    %v680 = vunpack.c.l.b16 %v569
    %v681 = vunpack.c.h.b16 %v569
    %v682 = vunpack.c.l.b16 %v570
    %v683 = vunpack.c.h.b16 %v570
    %v684 = vunpack.c.l.b16 %v571
    %v685 = vunpack.c.h.b16 %v571
    %v686 = vunpack.c.l.b16 %v572
    %v687 = vunpack.c.h.b16 %v572
    %v688 = vunpack.c.l.b16 %v573
    %v689 = vunpack.c.h.b16 %v573
    %v690 = vunpack.c.l.b16 %v574
    %v691 = vunpack.c.h.b16 %v574
    %v692 = vunpack.c.l.b16 %v575
    %v693 = vunpack.c.h.b16 %v575
    %v694 = vpack.c.b16 %v634, %v630
    %v695 = vpack.c.b16 %v635, %v631
    %v696 = vpack.c.b16 %v636, %v632
    %v697 = vpack.c.b16 %v637, %v633
    %v698 = vpack.c.b16 %v642, %v638
    %v699 = vpack.c.b16 %v643, %v639
    %v700 = vpack.c.b16 %v644, %v640
    %v701 = vpack.c.b16 %v645, %v641
    %v702 = vpack.c.b16 %v650, %v646
    %v703 = vpack.c.b16 %v651, %v647
    %v704 = vpack.c.b16 %v652, %v648
    %v705 = vpack.c.b16 %v653, %v649
    %v706 = vpack.c.b16 %v658, %v654
    %v707 = vpack.c.b16 %v659, %v655
    %v708 = vpack.c.b16 %v660, %v656
    %v709 = vpack.c.b16 %v661, %v657
    %v710 = vpack.c.b16 %v666, %v662
    %v711 = vpack.c.b16 %v667, %v663
    %v712 = vpack.c.b16 %v668, %v664
    %v713 = vpack.c.b16 %v669, %v665
    %v714 = vpack.c.b16 %v674, %v670
    %v715 = vpack.c.b16 %v675, %v671
    %v716 = vpack.c.b16 %v676, %v672
    %v717 = vpack.c.b16 %v677, %v673
    %v718 = vpack.c.b16 %v682, %v678
    %v719 = vpack.c.b16 %v683, %v679
    %v720 = vpack.c.b16 %v684, %v680
    %v721 = vpack.c.b16 %v685, %v681
    %v722 = vpack.c.b16 %v690, %v686
    %v723 = vpack.c.b16 %v691, %v687
    %v724 = vpack.c.b16 %v692, %v688
    %v725 = vpack.c.b16 %v693, %v689
    %758 = vmatprep.subr.bf16.mxu0 %v723
    %759 = vmatpush1.bf16.msra.mxu0 %v722
    %760 = vmatprep.subr.bf16.mxu0 %v719
    %761 = vmatpush1.bf16.msra.mxu0 %v718
    %762 = vmatprep.subr.bf16.mxu0 %v715
    %763 = vmatpush1.bf16.msra.mxu0 %v714
    %764 = vmatprep.subr.bf16.mxu0 %v711
    %765 = vmatpush1.bf16.msra.mxu0 %v710
    %766 = vmatprep.subr.bf16.mxu0 %v707
    %767 = vmatpush1.bf16.msra.mxu0 %v706
    %768 = vmatprep.subr.bf16.mxu0 %v703
    %769 = vmatpush1.bf16.msra.mxu0 %v702
    %770 = vmatprep.subr.bf16.mxu0 %v699
    %771 = vmatpush1.bf16.msra.mxu0 %v698
    %772 = vmatprep.subr.bf16.mxu0 %v695
    %773 = vmatpush1.bf16.msra.mxu0 %v694
    %774 = vmatprep.subr.bf16.mxu0 0
    %775 = vmatpush2.bf16.msra.mxu0 0
    %776 = vmatprep.subr.bf16.mxu0 0
    %777 = vmatpush2.bf16.msra.mxu0 0
    %778 = vmatprep.subr.bf16.mxu0 0
    %779 = vmatpush2.bf16.msra.mxu0 0
    %780 = vmatprep.subr.bf16.mxu0 0
    %781 = vmatpush2.bf16.msra.mxu0 0
    %782 = vmatprep.subr.bf16.mxu0 0
    %783 = vmatpush2.bf16.msra.mxu0 0
    %784 = vmatprep.subr.bf16.mxu0 0
    %785 = vmatpush2.bf16.msra.mxu0 0
    %786 = vmatprep.subr.bf16.mxu0 0
    %787 = vmatpush2.bf16.msra.mxu0 0
    %788 = vmatprep.subr.bf16.mxu0 0
    %789 = vmatpush2.bf16.msra.mxu0 0
    %790 = vmatprep.mubr.bf16.mxu0 0
    %791 = vmatmul.mubr.bf16.gmra.mxu0 %v543
    %v792 = vpop.f32.mrf.mxu0
    %v793 = vadd.f32 %v581, %v792
    %v794 = vpop.f32.mrf.mxu0
    %v795 = vadd.f32 %v585, %v794
    %v796 = vpop.f32.mrf.mxu0
    %v797 = vpop.f32.mrf.mxu0
    %798 = vdwg.mxu0
    %799 = vmatprep.subr.bf16.mxu0 %v725
    %800 = vmatpush1.bf16.msra.mxu0 %v724
    %801 = vmatprep.subr.bf16.mxu0 %v721
    %802 = vmatpush1.bf16.msra.mxu0 %v720
    %803 = vmatprep.subr.bf16.mxu0 %v717
    %804 = vmatpush1.bf16.msra.mxu0 %v716
    %805 = vmatprep.subr.bf16.mxu0 %v713
    %806 = vmatpush1.bf16.msra.mxu0 %v712
    %807 = vmatprep.subr.bf16.mxu0 %v709
    %808 = vmatpush1.bf16.msra.mxu0 %v708
    %809 = vmatprep.subr.bf16.mxu0 %v705
    %810 = vmatpush1.bf16.msra.mxu0 %v704
    %811 = vmatprep.subr.bf16.mxu0 %v701
    %812 = vmatpush1.bf16.msra.mxu0 %v700
    %813 = vmatprep.subr.bf16.mxu0 %v697
    %814 = vmatpush1.bf16.msra.mxu0 %v696
    %815 = vmatprep.subr.bf16.mxu0 0
    %816 = vmatpush2.bf16.msra.mxu0 0
    %817 = vmatprep.subr.bf16.mxu0 0
    %818 = vmatpush2.bf16.msra.mxu0 0
    %819 = vmatprep.subr.bf16.mxu0 0
    %820 = vmatpush2.bf16.msra.mxu0 0
    %821 = vmatprep.subr.bf16.mxu0 0
    %822 = vmatpush2.bf16.msra.mxu0 0
    %823 = vmatprep.subr.bf16.mxu0 0
    %824 = vmatpush2.bf16.msra.mxu0 0
    %825 = vmatprep.subr.bf16.mxu0 0
    %826 = vmatpush2.bf16.msra.mxu0 0
    %827 = vmatprep.subr.bf16.mxu0 0
    %828 = vmatpush2.bf16.msra.mxu0 0
    %829 = vmatprep.subr.bf16.mxu0 0
    %830 = vmatpush2.bf16.msra.mxu0 0
    %831 = vmatprep.mubr.bf16.mxu0 0
    %832 = vmatmul.mubr.bf16.gmra.mxu0 %v543
    %v833 = vpop.f32.mrf.mxu0
    %v834 = vadd.f32 %v589, %v833
    %v835 = vpop.f32.mrf.mxu0
    %v836 = vadd.f32 %v593, %v835
    %v837 = vpop.f32.mrf.mxu0
    %v838 = vpop.f32.mrf.mxu0
    %839 = vdwg.mxu0
    %840 = vst [vmem:[#allocation2] sm:$0x3] %v531
    %841 = vst [vmem:[#allocation4] sm:$0x3] %v533
    %v842 = vpack.c.bf16 %v793, %v793
    %v843 = vpack.c.bf16 %v795, %v795
    %v844 = vpack.c.bf16 %v834, %v834
    %v845 = vpack.c.bf16 %v836, %v836
    %v850 = vcombine.low %v842, %v843
    %v851 = vcombine.low %v844, %v845
    %v853 = vunpack.c.l.s4 1966171168
    %v854 = vunpack.c.0.s8 %v853
    %v855 = vlaneseq
    %v856 = vshrl.u32 %v855, 7
    %v857 = vsub.s32 %v854, %v856
    %v858 = vrot.slane %v850, %v857
    %v860 = vunpack.c.l.s4 1966171168
    %v861 = vunpack.c.0.s8 %v860
    %v862 = vlaneseq
    %v863 = vshrl.u32 %v862, 7
    %v864 = vsub.s32 %v861, %v863
    %v865 = vrot.slane %v851, %v864
    %v866 = vcombine.low %v858, %v865
    %v868 = vunpack.c.l.s4 1966171168
    %v869 = vunpack.c.0.s8 %v868
    %v870 = vlaneseq
    %v871 = vshrl.u32 %v870, 7
    %v872 = vsub.s32 %v869, %v871
    %v873 = vrot.slane %v866, %v872
    %875 = vst [vmem:[%s8] sm:$0xf] %v873
    // Predicated region
    $region26: #{vae_forward.13} parent=1 // pred_check
      _
    $region27: #{vae_forward.13} parent=1 // pred_check_branch
      %877 = sbr.rel (0) target = $region29
    $region28: #{vae_forward.13} parent=1 // pred_region
      %s879 = ssub.s32 32, 32
      %880 = vsyncadd [#allocation3], %s879
      %s882 = sshll.u32 [#allocation2], 4
      %s883 = int_to_ptr.vmem [resolvable:$true] %s882
      %885 = dma.vmem_to_hbm [thread:$0]  %s883, 32, %s6, [#allocation3]
    $region29: #{vae_forward.13} parent=1 // pred_fallthru
      _
    // Predicated region
    $region30: #{vae_forward.13} parent=1 // pred_check
      _
    $region31: #{vae_forward.13} parent=1 // pred_check_branch
      %887 = sbr.rel (0) target = $region33
    $region32: #{vae_forward.13} parent=1 // pred_region
      %s889 = ssub.s32 32, 32
      %890 = vsyncadd [#allocation5], %s889
      %s892 = sshll.u32 [#allocation4], 4
      %s893 = int_to_ptr.vmem [resolvable:$true] %s892
      %895 = dma.vmem_to_hbm [thread:$0]  %s893, 32, %s7, [#allocation5]
    $region33: #{vae_forward.13} parent=1 // pred_fallthru
      _
    // Predicated region
    $region34: #{vae_forward.13} parent=1 // pred_check
      _
    $region35: #{vae_forward.13} parent=1 // pred_check_branch
      %897 = sbr.rel (0) target = $region37
    $region36: #{vae_forward.13} parent=1 // pred_region
      _
    $region37: #{vae_forward.13} parent=1 // pred_fallthru
      _
    // Predicated region
    $region38: #{vae_forward.13} parent=1 // pred_check
      _
    $region39: #{vae_forward.13} parent=1 // pred_check_branch
      %899 = sbr.rel (0) target = $region41
    $region40: #{vae_forward.13} parent=1 // pred_region
      %900 = dma.done [#allocation3], 32
    $region41: #{vae_forward.13} parent=1 // pred_fallthru
      _
    // Predicated region
    $region42: #{vae_forward.13} parent=1 // pred_check
      _
    $region43: #{vae_forward.13} parent=1 // pred_check_branch
      %902 = sbr.rel (0) target = $region45
    $region44: #{vae_forward.13} parent=1 // pred_region
      %903 = dma.done [#allocation5], 32
    $region45: #{vae_forward.13} parent=1 // pred_fallthru
      _
    // Predicated region
    $region46: #{vae_forward.13} parent=1 // pred_check
      _
    $region47: #{vae_forward.13} parent=1 // pred_check_branch
      %905 = sbr.rel (0) target = $region49
    $region48: #{vae_forward.13} parent=1 // pred_region
      _
    $region49: #{vae_forward.13} parent=1 // pred_fallthru
      _
    %906 = vsyncpa [#allocation3], 1
    %907 = vsyncpa [#allocation5], 1

// kernel: vae_forward.14
$region0: #{vae_forward.14}
  #allocation0 [shape = 'u32[]', space=smem, size = 0x4, offset = 0x4, fixed_abs, tag = 'smem constant byte address 0x4 - core index']
  #allocation1 [shape = 'u32[144,128]{1,0:T(1,128)}', space=vmem, size = 0x12000, scoped, tag = 'internal scratch']
  %s0 = inlined_call_operand.vmem [shape: bf16[8,512], index: 0, kind: input, shape index: {}]
  %s1 = inlined_call_operand.vmem [shape: bf16[512,256], index: 1, kind: input, shape index: {}]
  %s2 = inlined_call_operand.vmem [shape: f32[1,256], index: 2, kind: input, shape index: {}]
  %s3 = inlined_call_operand.vmem [shape: bf16[8,256], index: 3, kind: output, shape index: {}]
  %s4 = sld [smem:[#allocation0]]
  $region22: #{vae_forward.14} parent=0
    _
  %s6 = ssub.s32 1, %s4
  %s7 = scalar_select 0, %s6, %s4
  // Predicated region
  $region2: #{vae_forward.14} parent=0 // pred_check
    _
  $region3: #{vae_forward.14} parent=0 // pred_check_branch
    %9 = sbr.rel (0) target = $region5
  $region4: #{vae_forward.14} parent=0 // pred_region
    _
  $region5: #{vae_forward.14} parent=0 // pred_fallthru
    _
  // Predicated region
  $region6: #{vae_forward.14} parent=0 // pred_check
    _
  $region7: #{vae_forward.14} parent=0 // pred_check_branch
    %11 = sbr.rel (0) target = $region9
  $region8: #{vae_forward.14} parent=0 // pred_region
    _
  $region9: #{vae_forward.14} parent=0 // pred_fallthru
    _
  // Predicated region
  $region10: #{vae_forward.14} parent=0 // pred_check
    _
  $region11: #{vae_forward.14} parent=0 // pred_check_branch
    %13 = sbr.rel (0) target = $region13
  $region12: #{vae_forward.14} parent=0 // pred_region
    _
  $region13: #{vae_forward.14} parent=0 // pred_fallthru
    _
  %v14 = vld [vmem:[%s0] sm:$0xff]
  %v15 = vld [vmem:[%s0 + $0x8] sm:$0xff]
  %v16 = vld [vmem:[%s1] sm:$0xff]
  %v17 = vld [vmem:[%s1 + $0x8] sm:$0xff]
  %v18 = vld [vmem:[%s1 + $0x10] sm:$0xff]
  %v19 = vld [vmem:[%s1 + $0x18] sm:$0xff]
  %v20 = vld [vmem:[%s1 + $0x20] sm:$0xff]
  %v21 = vld [vmem:[%s1 + $0x28] sm:$0xff]
  %v22 = vld [vmem:[%s1 + $0x30] sm:$0xff]
  %v23 = vld [vmem:[%s1 + $0x38] sm:$0xff]
  %v24 = vld [vmem:[%s1 + $0x40] sm:$0xff]
  %v25 = vld [vmem:[%s1 + $0x48] sm:$0xff]
  %v26 = vld [vmem:[%s1 + $0x50] sm:$0xff]
  %v27 = vld [vmem:[%s1 + $0x58] sm:$0xff]
  %v28 = vld [vmem:[%s1 + $0x60] sm:$0xff]
  %v29 = vld [vmem:[%s1 + $0x68] sm:$0xff]
  %v30 = vld [vmem:[%s1 + $0x70] sm:$0xff]
  %v31 = vld [vmem:[%s1 + $0x78] sm:$0xff]
  %v32 = vld [vmem:[%s1 + $0x80] sm:$0xff]
  %v33 = vld [vmem:[%s1 + $0x88] sm:$0xff]
  %v34 = vld [vmem:[%s1 + $0x90] sm:$0xff]
  %v35 = vld [vmem:[%s1 + $0x98] sm:$0xff]
  %v36 = vld [vmem:[%s1 + $0xa0] sm:$0xff]
  %v37 = vld [vmem:[%s1 + $0xa8] sm:$0xff]
  %v38 = vld [vmem:[%s1 + $0xb0] sm:$0xff]
  %v39 = vld [vmem:[%s1 + $0xb8] sm:$0xff]
  %v40 = vld [vmem:[%s1 + $0xc0] sm:$0xff]
  %v41 = vld [vmem:[%s1 + $0xc8] sm:$0xff]
  %v42 = vld [vmem:[%s1 + $0xd0] sm:$0xff]
  %v43 = vld [vmem:[%s1 + $0xd8] sm:$0xff]
  %v44 = vld [vmem:[%s1 + $0xe0] sm:$0xff]
  %v45 = vld [vmem:[%s1 + $0xe8] sm:$0xff]
  %v46 = vld [vmem:[%s1 + $0xf0] sm:$0xff]
  %v47 = vld [vmem:[%s1 + $0xf8] sm:$0xff]
  %v48 = vld [vmem:[%s1 + $0x100] sm:$0xff]
  %v49 = vld [vmem:[%s1 + $0x108] sm:$0xff]
  %v50 = vld [vmem:[%s1 + $0x110] sm:$0xff]
  %v51 = vld [vmem:[%s1 + $0x118] sm:$0xff]
  %v52 = vld [vmem:[%s1 + $0x120] sm:$0xff]
  %v53 = vld [vmem:[%s1 + $0x128] sm:$0xff]
  %v54 = vld [vmem:[%s1 + $0x130] sm:$0xff]
  %v55 = vld [vmem:[%s1 + $0x138] sm:$0xff]
  %v56 = vld [vmem:[%s1 + $0x140] sm:$0xff]
  %v57 = vld [vmem:[%s1 + $0x148] sm:$0xff]
  %v58 = vld [vmem:[%s1 + $0x150] sm:$0xff]
  %v59 = vld [vmem:[%s1 + $0x158] sm:$0xff]
  %v60 = vld [vmem:[%s1 + $0x160] sm:$0xff]
  %v61 = vld [vmem:[%s1 + $0x168] sm:$0xff]
  %v62 = vld [vmem:[%s1 + $0x170] sm:$0xff]
  %v63 = vld [vmem:[%s1 + $0x178] sm:$0xff]
  %v64 = vld [vmem:[%s1 + $0x180] sm:$0xff]
  %v65 = vld [vmem:[%s1 + $0x188] sm:$0xff]
  %v66 = vld [vmem:[%s1 + $0x190] sm:$0xff]
  %v67 = vld [vmem:[%s1 + $0x198] sm:$0xff]
  %v68 = vld [vmem:[%s1 + $0x1a0] sm:$0xff]
  %v69 = vld [vmem:[%s1 + $0x1a8] sm:$0xff]
  %v70 = vld [vmem:[%s1 + $0x1b0] sm:$0xff]
  %v71 = vld [vmem:[%s1 + $0x1b8] sm:$0xff]
  %v72 = vld [vmem:[%s1 + $0x1c0] sm:$0xff]
  %v73 = vld [vmem:[%s1 + $0x1c8] sm:$0xff]
  %v74 = vld [vmem:[%s1 + $0x1d0] sm:$0xff]
  %v75 = vld [vmem:[%s1 + $0x1d8] sm:$0xff]
  %v76 = vld [vmem:[%s1 + $0x1e0] sm:$0xff]
  %v77 = vld [vmem:[%s1 + $0x1e8] sm:$0xff]
  %v78 = vld [vmem:[%s1 + $0x1f0] sm:$0xff]
  %v79 = vld [vmem:[%s1 + $0x1f8] sm:$0xff]
  %v80 = vld [vmem:[%s2] sm:$0x3]
  %v82 = vlaneseq
  %v83 = vshrl.u32 %v82, 7
  %v84 = vsub.s32 0, %v83
  %v85 = vrot.slane %v80, %v84
  %v86 = vlaneseq
  %v87 = vshrl.u32 %v86, 7
  %v88 = vsub.s32 1, %v87
  %v89 = vrot.slane %v80, %v88
  %v94 = vunpack.c.l.b16 %v14
  %v95 = vunpack.c.h.b16 %v14
  %v96 = vunpack.c.l.b16 %v15
  %v97 = vunpack.c.h.b16 %v15
  %v98 = vpack.c.b16 %v94, %v94
  %v99 = vpack.c.b16 %v95, %v95
  %v100 = vpack.c.b16 %v96, %v96
  %v101 = vpack.c.b16 %v97, %v97
  %v170 = vunpack.c.l.b16 %v16
  %v171 = vunpack.c.h.b16 %v16
  %v172 = vunpack.c.l.b16 %v17
  %v173 = vunpack.c.h.b16 %v17
  %v174 = vunpack.c.l.b16 %v18
  %v175 = vunpack.c.h.b16 %v18
  %v176 = vunpack.c.l.b16 %v19
  %v177 = vunpack.c.h.b16 %v19
  %v178 = vunpack.c.l.b16 %v20
  %v179 = vunpack.c.h.b16 %v20
  %v180 = vunpack.c.l.b16 %v21
  %v181 = vunpack.c.h.b16 %v21
  %v182 = vunpack.c.l.b16 %v22
  %v183 = vunpack.c.h.b16 %v22
  %v184 = vunpack.c.l.b16 %v23
  %v185 = vunpack.c.h.b16 %v23
  %v186 = vunpack.c.l.b16 %v24
  %v187 = vunpack.c.h.b16 %v24
  %v188 = vunpack.c.l.b16 %v25
  %v189 = vunpack.c.h.b16 %v25
  %v190 = vunpack.c.l.b16 %v26
  %v191 = vunpack.c.h.b16 %v26
  %v192 = vunpack.c.l.b16 %v27
  %v193 = vunpack.c.h.b16 %v27
  %v194 = vunpack.c.l.b16 %v28
  %v195 = vunpack.c.h.b16 %v28
  %v196 = vunpack.c.l.b16 %v29
  %v197 = vunpack.c.h.b16 %v29
  %v198 = vunpack.c.l.b16 %v30
  %v199 = vunpack.c.h.b16 %v30
  %v200 = vunpack.c.l.b16 %v31
  %v201 = vunpack.c.h.b16 %v31
  %v202 = vunpack.c.l.b16 %v32
  %v203 = vunpack.c.h.b16 %v32
  %v204 = vunpack.c.l.b16 %v33
  %v205 = vunpack.c.h.b16 %v33
  %v206 = vunpack.c.l.b16 %v34
  %v207 = vunpack.c.h.b16 %v34
  %v208 = vunpack.c.l.b16 %v35
  %v209 = vunpack.c.h.b16 %v35
  %v210 = vunpack.c.l.b16 %v36
  %v211 = vunpack.c.h.b16 %v36
  %v212 = vunpack.c.l.b16 %v37
  %v213 = vunpack.c.h.b16 %v37
  %v214 = vunpack.c.l.b16 %v38
  %v215 = vunpack.c.h.b16 %v38
  %v216 = vunpack.c.l.b16 %v39
  %v217 = vunpack.c.h.b16 %v39
  %v218 = vunpack.c.l.b16 %v40
  %v219 = vunpack.c.h.b16 %v40
  %v220 = vunpack.c.l.b16 %v41
  %v221 = vunpack.c.h.b16 %v41
  %v222 = vunpack.c.l.b16 %v42
  %v223 = vunpack.c.h.b16 %v42
  %v224 = vunpack.c.l.b16 %v43
  %v225 = vunpack.c.h.b16 %v43
  %v226 = vunpack.c.l.b16 %v44
  %v227 = vunpack.c.h.b16 %v44
  %v228 = vunpack.c.l.b16 %v45
  %v229 = vunpack.c.h.b16 %v45
  %v230 = vunpack.c.l.b16 %v46
  %v231 = vunpack.c.h.b16 %v46
  %v232 = vunpack.c.l.b16 %v47
  %v233 = vunpack.c.h.b16 %v47
  %v234 = vunpack.c.l.b16 %v48
  %v235 = vunpack.c.h.b16 %v48
  %v236 = vunpack.c.l.b16 %v49
  %v237 = vunpack.c.h.b16 %v49
  %v238 = vunpack.c.l.b16 %v50
  %v239 = vunpack.c.h.b16 %v50
  %v240 = vunpack.c.l.b16 %v51
  %v241 = vunpack.c.h.b16 %v51
  %v242 = vunpack.c.l.b16 %v52
  %v243 = vunpack.c.h.b16 %v52
  %v244 = vunpack.c.l.b16 %v53
  %v245 = vunpack.c.h.b16 %v53
  %v246 = vunpack.c.l.b16 %v54
  %v247 = vunpack.c.h.b16 %v54
  %v248 = vunpack.c.l.b16 %v55
  %v249 = vunpack.c.h.b16 %v55
  %v250 = vunpack.c.l.b16 %v56
  %v251 = vunpack.c.h.b16 %v56
  %v252 = vunpack.c.l.b16 %v57
  %v253 = vunpack.c.h.b16 %v57
  %v254 = vunpack.c.l.b16 %v58
  %v255 = vunpack.c.h.b16 %v58
  %v256 = vunpack.c.l.b16 %v59
  %v257 = vunpack.c.h.b16 %v59
  %v258 = vunpack.c.l.b16 %v60
  %v259 = vunpack.c.h.b16 %v60
  %v260 = vunpack.c.l.b16 %v61
  %v261 = vunpack.c.h.b16 %v61
  %v262 = vunpack.c.l.b16 %v62
  %v263 = vunpack.c.h.b16 %v62
  %v264 = vunpack.c.l.b16 %v63
  %v265 = vunpack.c.h.b16 %v63
  %v266 = vunpack.c.l.b16 %v64
  %v267 = vunpack.c.h.b16 %v64
  %v268 = vunpack.c.l.b16 %v65
  %v269 = vunpack.c.h.b16 %v65
  %v270 = vunpack.c.l.b16 %v66
  %v271 = vunpack.c.h.b16 %v66
  %v272 = vunpack.c.l.b16 %v67
  %v273 = vunpack.c.h.b16 %v67
  %v274 = vunpack.c.l.b16 %v68
  %v275 = vunpack.c.h.b16 %v68
  %v276 = vunpack.c.l.b16 %v69
  %v277 = vunpack.c.h.b16 %v69
  %v278 = vunpack.c.l.b16 %v70
  %v279 = vunpack.c.h.b16 %v70
  %v280 = vunpack.c.l.b16 %v71
  %v281 = vunpack.c.h.b16 %v71
  %v282 = vunpack.c.l.b16 %v72
  %v283 = vunpack.c.h.b16 %v72
  %v284 = vunpack.c.l.b16 %v73
  %v285 = vunpack.c.h.b16 %v73
  %v286 = vunpack.c.l.b16 %v74
  %v287 = vunpack.c.h.b16 %v74
  %v288 = vunpack.c.l.b16 %v75
  %v289 = vunpack.c.h.b16 %v75
  %v290 = vunpack.c.l.b16 %v76
  %v291 = vunpack.c.h.b16 %v76
  %v292 = vunpack.c.l.b16 %v77
  %v293 = vunpack.c.h.b16 %v77
  %v294 = vunpack.c.l.b16 %v78
  %v295 = vunpack.c.h.b16 %v78
  %v296 = vunpack.c.l.b16 %v79
  %v297 = vunpack.c.h.b16 %v79
  %v298 = vpack.c.b16 %v172, %v170
  %v299 = vpack.c.b16 %v173, %v171
  %v300 = vpack.c.b16 %v176, %v174
  %v301 = vpack.c.b16 %v177, %v175
  %v302 = vpack.c.b16 %v180, %v178
  %v303 = vpack.c.b16 %v181, %v179
  %v304 = vpack.c.b16 %v184, %v182
  %v305 = vpack.c.b16 %v185, %v183
  %v306 = vpack.c.b16 %v188, %v186
  %v307 = vpack.c.b16 %v189, %v187
  %v308 = vpack.c.b16 %v192, %v190
  %v309 = vpack.c.b16 %v193, %v191
  %v310 = vpack.c.b16 %v196, %v194
  %v311 = vpack.c.b16 %v197, %v195
  %v312 = vpack.c.b16 %v200, %v198
  %v313 = vpack.c.b16 %v201, %v199
  %v314 = vpack.c.b16 %v204, %v202
  %v315 = vpack.c.b16 %v205, %v203
  %v316 = vpack.c.b16 %v208, %v206
  %v317 = vpack.c.b16 %v209, %v207
  %v318 = vpack.c.b16 %v212, %v210
  %v319 = vpack.c.b16 %v213, %v211
  %v320 = vpack.c.b16 %v216, %v214
  %v321 = vpack.c.b16 %v217, %v215
  %v322 = vpack.c.b16 %v220, %v218
  %v323 = vpack.c.b16 %v221, %v219
  %v324 = vpack.c.b16 %v224, %v222
  %v325 = vpack.c.b16 %v225, %v223
  %v326 = vpack.c.b16 %v228, %v226
  %v327 = vpack.c.b16 %v229, %v227
  %v328 = vpack.c.b16 %v232, %v230
  %v329 = vpack.c.b16 %v233, %v231
  %v330 = vpack.c.b16 %v236, %v234
  %v331 = vpack.c.b16 %v237, %v235
  %v332 = vpack.c.b16 %v240, %v238
  %v333 = vpack.c.b16 %v241, %v239
  %v334 = vpack.c.b16 %v244, %v242
  %v335 = vpack.c.b16 %v245, %v243
  %v336 = vpack.c.b16 %v248, %v246
  %v337 = vpack.c.b16 %v249, %v247
  %v338 = vpack.c.b16 %v252, %v250
  %v339 = vpack.c.b16 %v253, %v251
  %v340 = vpack.c.b16 %v256, %v254
  %v341 = vpack.c.b16 %v257, %v255
  %v342 = vpack.c.b16 %v260, %v258
  %v343 = vpack.c.b16 %v261, %v259
  %v344 = vpack.c.b16 %v264, %v262
  %v345 = vpack.c.b16 %v265, %v263
  %v346 = vpack.c.b16 %v268, %v266
  %v347 = vpack.c.b16 %v269, %v267
  %v348 = vpack.c.b16 %v272, %v270
  %v349 = vpack.c.b16 %v273, %v271
  %v350 = vpack.c.b16 %v276, %v274
  %v351 = vpack.c.b16 %v277, %v275
  %v352 = vpack.c.b16 %v280, %v278
  %v353 = vpack.c.b16 %v281, %v279
  %v354 = vpack.c.b16 %v284, %v282
  %v355 = vpack.c.b16 %v285, %v283
  %v356 = vpack.c.b16 %v288, %v286
  %v357 = vpack.c.b16 %v289, %v287
  %v358 = vpack.c.b16 %v292, %v290
  %v359 = vpack.c.b16 %v293, %v291
  %v360 = vpack.c.b16 %v296, %v294
  %v361 = vpack.c.b16 %v297, %v295
  %426 = vmatprep.subr.bf16.mxu0 %v313
  %427 = vmatpush1.bf16.msra.mxu0 %v312
  %428 = vmatprep.subr.bf16.mxu0 %v311
  %429 = vmatpush1.bf16.msra.mxu0 %v310
  %430 = vmatprep.subr.bf16.mxu0 %v309
  %431 = vmatpush1.bf16.msra.mxu0 %v308
  %432 = vmatprep.subr.bf16.mxu0 %v307
  %433 = vmatpush1.bf16.msra.mxu0 %v306
  %434 = vmatprep.subr.bf16.mxu0 %v305
  %435 = vmatpush1.bf16.msra.mxu0 %v304
  %436 = vmatprep.subr.bf16.mxu0 %v303
  %437 = vmatpush1.bf16.msra.mxu0 %v302
  %438 = vmatprep.subr.bf16.mxu0 %v301
  %439 = vmatpush1.bf16.msra.mxu0 %v300
  %440 = vmatprep.subr.bf16.mxu0 %v299
  %441 = vmatpush1.bf16.msra.mxu0 %v298
  %442 = vmatprep.subr.bf16.mxu0 %v329
  %443 = vmatpush2.bf16.msra.mxu0 %v328
  %444 = vmatprep.subr.bf16.mxu0 %v327
  %445 = vmatpush2.bf16.msra.mxu0 %v326
  %446 = vmatprep.subr.bf16.mxu0 %v325
  %447 = vmatpush2.bf16.msra.mxu0 %v324
  %448 = vmatprep.subr.bf16.mxu0 %v323
  %449 = vmatpush2.bf16.msra.mxu0 %v322
  %450 = vmatprep.subr.bf16.mxu0 %v321
  %451 = vmatpush2.bf16.msra.mxu0 %v320
  %452 = vmatprep.subr.bf16.mxu0 %v319
  %453 = vmatpush2.bf16.msra.mxu0 %v318
  %454 = vmatprep.subr.bf16.mxu0 %v317
  %455 = vmatpush2.bf16.msra.mxu0 %v316
  %456 = vmatprep.subr.bf16.mxu0 %v315
  %457 = vmatpush2.bf16.msra.mxu0 %v314
  %458 = vmatprep.mubr.bf16.mxu0 %v99
  %459 = vmatmul.mubr.bf16.gmra.mxu0 %v98
  %v460 = vpop.f32.mrf.mxu0
  %v461 = vadd.f32 %v85, %v460
  %v462 = vpop.f32.mrf.mxu0
  %v463 = vadd.f32 %v89, %v462
  %v464 = vpop.f32.mrf.mxu0
  %v465 = vpop.f32.mrf.mxu0
  %466 = vdwg.mxu0
  %467 = vmatprep.subr.bf16.mxu0 %v345
  %468 = vmatpush1.bf16.msra.mxu0 %v344
  %469 = vmatprep.subr.bf16.mxu0 %v343
  %470 = vmatpush1.bf16.msra.mxu0 %v342
  %471 = vmatprep.subr.bf16.mxu0 %v341
  %472 = vmatpush1.bf16.msra.mxu0 %v340
  %473 = vmatprep.subr.bf16.mxu0 %v339
  %474 = vmatpush1.bf16.msra.mxu0 %v338
  %475 = vmatprep.subr.bf16.mxu0 %v337
  %476 = vmatpush1.bf16.msra.mxu0 %v336
  %477 = vmatprep.subr.bf16.mxu0 %v335
  %478 = vmatpush1.bf16.msra.mxu0 %v334
  %479 = vmatprep.subr.bf16.mxu0 %v333
  %480 = vmatpush1.bf16.msra.mxu0 %v332
  %481 = vmatprep.subr.bf16.mxu0 %v331
  %482 = vmatpush1.bf16.msra.mxu0 %v330
  %483 = vmatprep.subr.bf16.mxu0 %v361
  %484 = vmatpush2.bf16.msra.mxu0 %v360
  %485 = vmatprep.subr.bf16.mxu0 %v359
  %486 = vmatpush2.bf16.msra.mxu0 %v358
  %487 = vmatprep.subr.bf16.mxu0 %v357
  %488 = vmatpush2.bf16.msra.mxu0 %v356
  %489 = vmatprep.subr.bf16.mxu0 %v355
  %490 = vmatpush2.bf16.msra.mxu0 %v354
  %491 = vmatprep.subr.bf16.mxu0 %v353
  %492 = vmatpush2.bf16.msra.mxu0 %v352
  %493 = vmatprep.subr.bf16.mxu0 %v351
  %494 = vmatpush2.bf16.msra.mxu0 %v350
  %495 = vmatprep.subr.bf16.mxu0 %v349
  %496 = vmatpush2.bf16.msra.mxu0 %v348
  %497 = vmatprep.subr.bf16.mxu0 %v347
  %498 = vmatpush2.bf16.msra.mxu0 %v346
  %499 = vmatprep.mubr.bf16.mxu0 %v101
  %500 = vmatmul.mubr.bf16.gmra.mxu0 %v100
  %v501 = vpop.f32.mrf.mxu0
  %v502 = vadd.f32 %v461, %v501
  %v503 = vpop.f32.mrf.mxu0
  %v504 = vadd.f32 %v463, %v503
  %v505 = vpop.f32.mrf.mxu0
  %v506 = vpop.f32.mrf.mxu0
  %507 = vdwg.mxu0
  %v508 = vmax.f32 %v502, 0.0
  %v509 = vmax.f32 %v504, 0.0
  %v510 = vpack.c.bf16 %v508, %v508
  %v511 = vpack.c.bf16 %v509, %v509
  %v514 = vunpack.c.l.b16 %v510
  %v515 = vunpack.c.l.b16 %v511
  %v516 = vpack.c.b16 %v515, %v514
  %518 = vst [vmem:[%s3] sm:$0xff] %v516
  // Predicated region
  $region14: #{vae_forward.14} parent=0 // pred_check
    _
  $region15: #{vae_forward.14} parent=0 // pred_check_branch
    %520 = sbr.rel (0) target = $region17
  $region16: #{vae_forward.14} parent=0 // pred_region
    _
  $region17: #{vae_forward.14} parent=0 // pred_fallthru
    _
  // Predicated region
  $region18: #{vae_forward.14} parent=0 // pred_check
    _
  $region19: #{vae_forward.14} parent=0 // pred_check_branch
    %522 = sbr.rel (0) target = $region21
  $region20: #{vae_forward.14} parent=0 // pred_region
    _
  $region21: #{vae_forward.14} parent=0 // pred_fallthru
    _

// kernel: vae_forward.15
$region0: #{vae_forward.15}
  #allocation0 [shape = 'u32[]', space=smem, size = 0x4, offset = 0x4, fixed_abs, tag = 'smem constant byte address 0x4 - core index']
  #allocation1 [shape = 'u32[144,128]{1,0:T(1,128)}', space=vmem, size = 0x12000, scoped, tag = 'internal scratch']
  %s0 = inlined_call_operand.vmem [shape: bf16[32,256], index: 0, kind: input, shape index: {}]
  %s1 = inlined_call_operand.vmem [shape: bf16[256,128], index: 1, kind: input, shape index: {}]
  %s2 = inlined_call_operand.vmem [shape: f32[1,128], index: 2, kind: input, shape index: {}]
  %s3 = inlined_call_operand.vmem [shape: bf16[32,128], index: 3, kind: output, shape index: {}]
  %s4 = sld [smem:[#allocation0]]
  $region22: #{vae_forward.15} parent=0
    _
  %s6 = ssub.s32 1, %s4
  %s7 = scalar_select 0, %s6, %s4
  // Predicated region
  $region2: #{vae_forward.15} parent=0 // pred_check
    _
  $region3: #{vae_forward.15} parent=0 // pred_check_branch
    %9 = sbr.rel (0) target = $region5
  $region4: #{vae_forward.15} parent=0 // pred_region
    _
  $region5: #{vae_forward.15} parent=0 // pred_fallthru
    _
  // Predicated region
  $region6: #{vae_forward.15} parent=0 // pred_check
    _
  $region7: #{vae_forward.15} parent=0 // pred_check_branch
    %11 = sbr.rel (0) target = $region9
  $region8: #{vae_forward.15} parent=0 // pred_region
    _
  $region9: #{vae_forward.15} parent=0 // pred_fallthru
    _
  // Predicated region
  $region10: #{vae_forward.15} parent=0 // pred_check
    _
  $region11: #{vae_forward.15} parent=0 // pred_check_branch
    %13 = sbr.rel (0) target = $region13
  $region12: #{vae_forward.15} parent=0 // pred_region
    _
  $region13: #{vae_forward.15} parent=0 // pred_fallthru
    _
  %v15 = vld [vmem:[%s0] sm:$0xff]
  %v16 = vld [vmem:[%s0 + $0x8] sm:$0xff]
  %v17 = vld [vmem:[%s0 + $0x10] sm:$0xff]
  %v18 = vld [vmem:[%s0 + $0x18] sm:$0xff]
  %v19 = vld [vmem:[%s1] sm:$0xf]
  %v20 = vld [vmem:[%s1 + $0x4] sm:$0xf]
  %v21 = vld [vmem:[%s1 + $0x8] sm:$0xf]
  %v22 = vld [vmem:[%s1 + $0xc] sm:$0xf]
  %v23 = vld [vmem:[%s1 + $0x10] sm:$0xf]
  %v24 = vld [vmem:[%s1 + $0x14] sm:$0xf]
  %v25 = vld [vmem:[%s1 + $0x18] sm:$0xf]
  %v26 = vld [vmem:[%s1 + $0x1c] sm:$0xf]
  %v27 = vld [vmem:[%s1 + $0x20] sm:$0xf]
  %v28 = vld [vmem:[%s1 + $0x24] sm:$0xf]
  %v29 = vld [vmem:[%s1 + $0x28] sm:$0xf]
  %v30 = vld [vmem:[%s1 + $0x2c] sm:$0xf]
  %v31 = vld [vmem:[%s1 + $0x30] sm:$0xf]
  %v32 = vld [vmem:[%s1 + $0x34] sm:$0xf]
  %v33 = vld [vmem:[%s1 + $0x38] sm:$0xf]
  %v34 = vld [vmem:[%s1 + $0x3c] sm:$0xf]
  %v35 = vld [vmem:[%s1 + $0x40] sm:$0xf]
  %v36 = vld [vmem:[%s1 + $0x44] sm:$0xf]
  %v37 = vld [vmem:[%s1 + $0x48] sm:$0xf]
  %v38 = vld [vmem:[%s1 + $0x4c] sm:$0xf]
  %v39 = vld [vmem:[%s1 + $0x50] sm:$0xf]
  %v40 = vld [vmem:[%s1 + $0x54] sm:$0xf]
  %v41 = vld [vmem:[%s1 + $0x58] sm:$0xf]
  %v42 = vld [vmem:[%s1 + $0x5c] sm:$0xf]
  %v43 = vld [vmem:[%s1 + $0x60] sm:$0xf]
  %v44 = vld [vmem:[%s1 + $0x64] sm:$0xf]
  %v45 = vld [vmem:[%s1 + $0x68] sm:$0xf]
  %v46 = vld [vmem:[%s1 + $0x6c] sm:$0xf]
  %v47 = vld [vmem:[%s1 + $0x70] sm:$0xf]
  %v48 = vld [vmem:[%s1 + $0x74] sm:$0xf]
  %v49 = vld [vmem:[%s1 + $0x78] sm:$0xf]
  %v50 = vld [vmem:[%s1 + $0x7c] sm:$0xf]
  %v51 = vld [vmem:[%s2] sm:$0x1]
  %v53 = vlaneseq
  %v54 = vshrl.u32 %v53, 7
  %v55 = vsub.s32 0, %v54
  %v56 = vrot.slane %v51, %v55
  %v62 = vunpack.c.l.b16 %v15
  %v63 = vunpack.c.h.b16 %v15
  %v64 = vunpack.c.l.b16 %v16
  %v65 = vunpack.c.h.b16 %v16
  %v66 = vunpack.c.l.b16 %v17
  %v67 = vunpack.c.h.b16 %v17
  %v68 = vunpack.c.l.b16 %v18
  %v69 = vunpack.c.h.b16 %v18
  %v70 = vpack.c.b16 %v64, %v62
  %v71 = vpack.c.b16 %v65, %v63
  %v72 = vpack.c.b16 %v68, %v66
  %v73 = vpack.c.b16 %v69, %v67
  %v110 = vunpack.c.l.b16 %v19
  %v111 = vunpack.c.l.b16 %v20
  %v112 = vunpack.c.l.b16 %v21
  %v113 = vunpack.c.l.b16 %v22
  %v114 = vunpack.c.l.b16 %v23
  %v115 = vunpack.c.l.b16 %v24
  %v116 = vunpack.c.l.b16 %v25
  %v117 = vunpack.c.l.b16 %v26
  %v118 = vunpack.c.l.b16 %v27
  %v119 = vunpack.c.l.b16 %v28
  %v120 = vunpack.c.l.b16 %v29
  %v121 = vunpack.c.l.b16 %v30
  %v122 = vunpack.c.l.b16 %v31
  %v123 = vunpack.c.l.b16 %v32
  %v124 = vunpack.c.l.b16 %v33
  %v125 = vunpack.c.l.b16 %v34
  %v126 = vunpack.c.l.b16 %v35
  %v127 = vunpack.c.l.b16 %v36
  %v128 = vunpack.c.l.b16 %v37
  %v129 = vunpack.c.l.b16 %v38
  %v130 = vunpack.c.l.b16 %v39
  %v131 = vunpack.c.l.b16 %v40
  %v132 = vunpack.c.l.b16 %v41
  %v133 = vunpack.c.l.b16 %v42
  %v134 = vunpack.c.l.b16 %v43
  %v135 = vunpack.c.l.b16 %v44
  %v136 = vunpack.c.l.b16 %v45
  %v137 = vunpack.c.l.b16 %v46
  %v138 = vunpack.c.l.b16 %v47
  %v139 = vunpack.c.l.b16 %v48
  %v140 = vunpack.c.l.b16 %v49
  %v141 = vunpack.c.l.b16 %v50
  %v142 = vpack.c.b16 %v111, %v110
  %v143 = vpack.c.b16 %v113, %v112
  %v144 = vpack.c.b16 %v115, %v114
  %v145 = vpack.c.b16 %v117, %v116
  %v146 = vpack.c.b16 %v119, %v118
  %v147 = vpack.c.b16 %v121, %v120
  %v148 = vpack.c.b16 %v123, %v122
  %v149 = vpack.c.b16 %v125, %v124
  %v150 = vpack.c.b16 %v127, %v126
  %v151 = vpack.c.b16 %v129, %v128
  %v152 = vpack.c.b16 %v131, %v130
  %v153 = vpack.c.b16 %v133, %v132
  %v154 = vpack.c.b16 %v135, %v134
  %v155 = vpack.c.b16 %v137, %v136
  %v156 = vpack.c.b16 %v139, %v138
  %v157 = vpack.c.b16 %v141, %v140
  %174 = vmatprep.subr.bf16.mxu0 0
  %175 = vmatpush1.bf16.msra.mxu0 %v149
  %176 = vmatprep.subr.bf16.mxu0 0
  %177 = vmatpush1.bf16.msra.mxu0 %v148
  %178 = vmatprep.subr.bf16.mxu0 0
  %179 = vmatpush1.bf16.msra.mxu0 %v147
  %180 = vmatprep.subr.bf16.mxu0 0
  %181 = vmatpush1.bf16.msra.mxu0 %v146
  %182 = vmatprep.subr.bf16.mxu0 0
  %183 = vmatpush1.bf16.msra.mxu0 %v145
  %184 = vmatprep.subr.bf16.mxu0 0
  %185 = vmatpush1.bf16.msra.mxu0 %v144
  %186 = vmatprep.subr.bf16.mxu0 0
  %187 = vmatpush1.bf16.msra.mxu0 %v143
  %188 = vmatprep.subr.bf16.mxu0 0
  %189 = vmatpush1.bf16.msra.mxu0 %v142
  %190 = vmatprep.subr.bf16.mxu0 0
  %191 = vmatpush2.bf16.msra.mxu0 %v157
  %192 = vmatprep.subr.bf16.mxu0 0
  %193 = vmatpush2.bf16.msra.mxu0 %v156
  %194 = vmatprep.subr.bf16.mxu0 0
  %195 = vmatpush2.bf16.msra.mxu0 %v155
  %196 = vmatprep.subr.bf16.mxu0 0
  %197 = vmatpush2.bf16.msra.mxu0 %v154
  %198 = vmatprep.subr.bf16.mxu0 0
  %199 = vmatpush2.bf16.msra.mxu0 %v153
  %200 = vmatprep.subr.bf16.mxu0 0
  %201 = vmatpush2.bf16.msra.mxu0 %v152
  %202 = vmatprep.subr.bf16.mxu0 0
  %203 = vmatpush2.bf16.msra.mxu0 %v151
  %204 = vmatprep.subr.bf16.mxu0 0
  %205 = vmatpush2.bf16.msra.mxu0 %v150
  %206 = vmatprep.mubr.bf16.mxu0 %v71
  %207 = vmatmul.mubr.bf16.gmra.mxu0 %v70
  %v208 = vpop.f32.mrf.mxu0
  %v209 = vadd.f32 %v56, %v208
  %v210 = vpop.f32.mrf.mxu0
  %v211 = vpop.f32.mrf.mxu0
  %v212 = vadd.f32 %v56, %v211
  %v213 = vpop.f32.mrf.mxu0
  %214 = vmatprep.mubr.bf16.mxu0 %v73
  %215 = vmatmul.mubr.bf16.gmra.mxu0 %v72
  %v216 = vpop.f32.mrf.mxu0
  %v217 = vadd.f32 %v56, %v216
  %v218 = vpop.f32.mrf.mxu0
  %v219 = vpop.f32.mrf.mxu0
  %v220 = vadd.f32 %v56, %v219
  %v221 = vpop.f32.mrf.mxu0
  %222 = vdwg.mxu0
  %v223 = vmax.f32 %v209, 0.0
  %v224 = vmax.f32 %v212, 0.0
  %v225 = vmax.f32 %v217, 0.0
  %v226 = vmax.f32 %v220, 0.0
  %v227 = vpack.c.bf16 %v224, %v223
  %v228 = vpack.c.bf16 %v226, %v225
  %v231 = vunpack.c.l.b16 %v227
  %v232 = vunpack.c.h.b16 %v227
  %v233 = vunpack.c.l.b16 %v228
  %v234 = vunpack.c.h.b16 %v228
  %v235 = vpack.c.b16 %v231, %v231
  %v236 = vpack.c.b16 %v232, %v232
  %v237 = vpack.c.b16 %v233, %v233
  %v238 = vpack.c.b16 %v234, %v234
  %243 = vst [vmem:[%s3] sm:$0xf] %v235
  %244 = vst [vmem:[%s3 + $0x4] sm:$0xf] %v236
  %245 = vst [vmem:[%s3 + $0x8] sm:$0xf] %v237
  %246 = vst [vmem:[%s3 + $0xc] sm:$0xf] %v238
  // Predicated region
  $region14: #{vae_forward.15} parent=0 // pred_check
    _
  $region15: #{vae_forward.15} parent=0 // pred_check_branch
    %248 = sbr.rel (0) target = $region17
  $region16: #{vae_forward.15} parent=0 // pred_region
    _
  $region17: #{vae_forward.15} parent=0 // pred_fallthru
    _
  // Predicated region
  $region18: #{vae_forward.15} parent=0 // pred_check
    _
  $region19: #{vae_forward.15} parent=0 // pred_check_branch
    %250 = sbr.rel (0) target = $region21
  $region20: #{vae_forward.15} parent=0 // pred_region
    _
  $region21: #{vae_forward.15} parent=0 // pred_fallthru
    _

// kernel: vae_forward.16
$region0: #{vae_forward.16}
  #allocation0 [shape = 'u32[]', space=smem, size = 0x4, offset = 0x4, fixed_abs, tag = 'smem constant byte address 0x4 - core index']
  #allocation1 [shape = 'u32[144,128]{1,0:T(1,128)}', space=vmem, size = 0x12000, scoped, tag = 'internal scratch']
  %s0 = inlined_call_operand.vmem [shape: bf16[128,128], index: 0, kind: input, shape index: {}]
  %s1 = inlined_call_operand.vmem [shape: bf16[128,128], index: 1, kind: input, shape index: {}]
  %s2 = inlined_call_operand.vmem [shape: f32[1,128], index: 2, kind: input, shape index: {}]
  %s3 = inlined_call_operand.vmem [shape: bf16[128,128], index: 3, kind: output, shape index: {}]
  %s4 = sld [smem:[#allocation0]]
  $region22: #{vae_forward.16} parent=0
    _
  %s6 = ssub.s32 1, %s4
  %s7 = scalar_select 0, %s6, %s4
  // Predicated region
  $region2: #{vae_forward.16} parent=0 // pred_check
    _
  $region3: #{vae_forward.16} parent=0 // pred_check_branch
    %9 = sbr.rel (0) target = $region5
  $region4: #{vae_forward.16} parent=0 // pred_region
    _
  $region5: #{vae_forward.16} parent=0 // pred_fallthru
    _
  // Predicated region
  $region6: #{vae_forward.16} parent=0 // pred_check
    _
  $region7: #{vae_forward.16} parent=0 // pred_check_branch
    %11 = sbr.rel (0) target = $region9
  $region8: #{vae_forward.16} parent=0 // pred_region
    _
  $region9: #{vae_forward.16} parent=0 // pred_fallthru
    _
  // Predicated region
  $region10: #{vae_forward.16} parent=0 // pred_check
    _
  $region11: #{vae_forward.16} parent=0 // pred_check_branch
    %13 = sbr.rel (0) target = $region13
  $region12: #{vae_forward.16} parent=0 // pred_region
    _
  $region13: #{vae_forward.16} parent=0 // pred_fallthru
    _
  %v15 = vld [vmem:[%s0] sm:$0xf]
  %v16 = vld [vmem:[%s0 + $0x4] sm:$0xf]
  %v17 = vld [vmem:[%s0 + $0x8] sm:$0xf]
  %v18 = vld [vmem:[%s0 + $0xc] sm:$0xf]
  %v19 = vld [vmem:[%s0 + $0x10] sm:$0xf]
  %v20 = vld [vmem:[%s0 + $0x14] sm:$0xf]
  %v21 = vld [vmem:[%s0 + $0x18] sm:$0xf]
  %v22 = vld [vmem:[%s0 + $0x1c] sm:$0xf]
  %v23 = vld [vmem:[%s0 + $0x20] sm:$0xf]
  %v24 = vld [vmem:[%s0 + $0x24] sm:$0xf]
  %v25 = vld [vmem:[%s0 + $0x28] sm:$0xf]
  %v26 = vld [vmem:[%s0 + $0x2c] sm:$0xf]
  %v27 = vld [vmem:[%s0 + $0x30] sm:$0xf]
  %v28 = vld [vmem:[%s0 + $0x34] sm:$0xf]
  %v29 = vld [vmem:[%s0 + $0x38] sm:$0xf]
  %v30 = vld [vmem:[%s0 + $0x3c] sm:$0xf]
  %v31 = vld [vmem:[%s1] sm:$0xf]
  %v32 = vld [vmem:[%s1 + $0x4] sm:$0xf]
  %v33 = vld [vmem:[%s1 + $0x8] sm:$0xf]
  %v34 = vld [vmem:[%s1 + $0xc] sm:$0xf]
  %v35 = vld [vmem:[%s1 + $0x10] sm:$0xf]
  %v36 = vld [vmem:[%s1 + $0x14] sm:$0xf]
  %v37 = vld [vmem:[%s1 + $0x18] sm:$0xf]
  %v38 = vld [vmem:[%s1 + $0x1c] sm:$0xf]
  %v39 = vld [vmem:[%s1 + $0x20] sm:$0xf]
  %v40 = vld [vmem:[%s1 + $0x24] sm:$0xf]
  %v41 = vld [vmem:[%s1 + $0x28] sm:$0xf]
  %v42 = vld [vmem:[%s1 + $0x2c] sm:$0xf]
  %v43 = vld [vmem:[%s1 + $0x30] sm:$0xf]
  %v44 = vld [vmem:[%s1 + $0x34] sm:$0xf]
  %v45 = vld [vmem:[%s1 + $0x38] sm:$0xf]
  %v46 = vld [vmem:[%s1 + $0x3c] sm:$0xf]
  %v47 = vld [vmem:[%s2] sm:$0x1]
  %v49 = vlaneseq
  %v50 = vshrl.u32 %v49, 7
  %v51 = vsub.s32 0, %v50
  %v52 = vrot.slane %v47, %v51
  %v70 = vunpack.c.l.b16 %v15
  %v71 = vunpack.c.l.b16 %v16
  %v72 = vunpack.c.l.b16 %v17
  %v73 = vunpack.c.l.b16 %v18
  %v74 = vunpack.c.l.b16 %v19
  %v75 = vunpack.c.l.b16 %v20
  %v76 = vunpack.c.l.b16 %v21
  %v77 = vunpack.c.l.b16 %v22
  %v78 = vunpack.c.l.b16 %v23
  %v79 = vunpack.c.l.b16 %v24
  %v80 = vunpack.c.l.b16 %v25
  %v81 = vunpack.c.l.b16 %v26
  %v82 = vunpack.c.l.b16 %v27
  %v83 = vunpack.c.l.b16 %v28
  %v84 = vunpack.c.l.b16 %v29
  %v85 = vunpack.c.l.b16 %v30
  %v86 = vpack.c.b16 %v71, %v70
  %v87 = vpack.c.b16 %v73, %v72
  %v88 = vpack.c.b16 %v75, %v74
  %v89 = vpack.c.b16 %v77, %v76
  %v90 = vpack.c.b16 %v79, %v78
  %v91 = vpack.c.b16 %v81, %v80
  %v92 = vpack.c.b16 %v83, %v82
  %v93 = vpack.c.b16 %v85, %v84
  %v118 = vunpack.c.l.b16 %v31
  %v119 = vunpack.c.l.b16 %v32
  %v120 = vunpack.c.l.b16 %v33
  %v121 = vunpack.c.l.b16 %v34
  %v122 = vunpack.c.l.b16 %v35
  %v123 = vunpack.c.l.b16 %v36
  %v124 = vunpack.c.l.b16 %v37
  %v125 = vunpack.c.l.b16 %v38
  %v126 = vunpack.c.l.b16 %v39
  %v127 = vunpack.c.l.b16 %v40
  %v128 = vunpack.c.l.b16 %v41
  %v129 = vunpack.c.l.b16 %v42
  %v130 = vunpack.c.l.b16 %v43
  %v131 = vunpack.c.l.b16 %v44
  %v132 = vunpack.c.l.b16 %v45
  %v133 = vunpack.c.l.b16 %v46
  %v134 = vpack.c.b16 %v119, %v118
  %v135 = vpack.c.b16 %v121, %v120
  %v136 = vpack.c.b16 %v123, %v122
  %v137 = vpack.c.b16 %v125, %v124
  %v138 = vpack.c.b16 %v127, %v126
  %v139 = vpack.c.b16 %v129, %v128
  %v140 = vpack.c.b16 %v131, %v130
  %v141 = vpack.c.b16 %v133, %v132
  %150 = vmatprep.subr.bf16.mxu0 0
  %151 = vmatpush1.bf16.msra.mxu0 %v141
  %152 = vmatprep.subr.bf16.mxu0 0
  %153 = vmatpush1.bf16.msra.mxu0 %v140
  %154 = vmatprep.subr.bf16.mxu0 0
  %155 = vmatpush1.bf16.msra.mxu0 %v139
  %156 = vmatprep.subr.bf16.mxu0 0
  %157 = vmatpush1.bf16.msra.mxu0 %v138
  %158 = vmatprep.subr.bf16.mxu0 0
  %159 = vmatpush1.bf16.msra.mxu0 %v137
  %160 = vmatprep.subr.bf16.mxu0 0
  %161 = vmatpush1.bf16.msra.mxu0 %v136
  %162 = vmatprep.subr.bf16.mxu0 0
  %163 = vmatpush1.bf16.msra.mxu0 %v135
  %164 = vmatprep.subr.bf16.mxu0 0
  %165 = vmatpush1.bf16.msra.mxu0 %v134
  %166 = vmatprep.subr.bf16.mxu0 0
  %167 = vmatpush2.bf16.msra.mxu0 0
  %168 = vmatprep.subr.bf16.mxu0 0
  %169 = vmatpush2.bf16.msra.mxu0 0
  %170 = vmatprep.subr.bf16.mxu0 0
  %171 = vmatpush2.bf16.msra.mxu0 0
  %172 = vmatprep.subr.bf16.mxu0 0
  %173 = vmatpush2.bf16.msra.mxu0 0
  %174 = vmatprep.subr.bf16.mxu0 0
  %175 = vmatpush2.bf16.msra.mxu0 0
  %176 = vmatprep.subr.bf16.mxu0 0
  %177 = vmatpush2.bf16.msra.mxu0 0
  %178 = vmatprep.subr.bf16.mxu0 0
  %179 = vmatpush2.bf16.msra.mxu0 0
  %180 = vmatprep.subr.bf16.mxu0 0
  %181 = vmatpush2.bf16.msra.mxu0 0
  %182 = vmatprep.mubr.bf16.mxu0 0
  %183 = vmatmul.mubr.bf16.gmra.mxu0 %v86
  %v184 = vpop.f32.mrf.mxu0
  %v185 = vadd.f32 %v52, %v184
  %v186 = vpop.f32.mrf.mxu0
  %v187 = vpop.f32.mrf.mxu0
  %v188 = vadd.f32 %v52, %v187
  %v189 = vpop.f32.mrf.mxu0
  %190 = vmatprep.mubr.bf16.mxu0 0
  %191 = vmatmul.mubr.bf16.gmra.mxu0 %v87
  %v192 = vpop.f32.mrf.mxu0
  %v193 = vadd.f32 %v52, %v192
  %v194 = vpop.f32.mrf.mxu0
  %v195 = vpop.f32.mrf.mxu0
  %v196 = vadd.f32 %v52, %v195
  %v197 = vpop.f32.mrf.mxu0
  %198 = vmatprep.mubr.bf16.mxu0 0
  %199 = vmatmul.mubr.bf16.gmra.mxu0 %v88
  %v200 = vpop.f32.mrf.mxu0
  %v201 = vadd.f32 %v52, %v200
  %v202 = vpop.f32.mrf.mxu0
  %v203 = vpop.f32.mrf.mxu0
  %v204 = vadd.f32 %v52, %v203
  %v205 = vpop.f32.mrf.mxu0
  %206 = vmatprep.mubr.bf16.mxu0 0
  %207 = vmatmul.mubr.bf16.gmra.mxu0 %v89
  %v208 = vpop.f32.mrf.mxu0
  %v209 = vadd.f32 %v52, %v208
  %v210 = vpop.f32.mrf.mxu0
  %v211 = vpop.f32.mrf.mxu0
  %v212 = vadd.f32 %v52, %v211
  %v213 = vpop.f32.mrf.mxu0
  %214 = vmatprep.mubr.bf16.mxu0 0
  %215 = vmatmul.mubr.bf16.gmra.mxu0 %v90
  %v216 = vpop.f32.mrf.mxu0
  %v217 = vadd.f32 %v52, %v216
  %v218 = vpop.f32.mrf.mxu0
  %v219 = vpop.f32.mrf.mxu0
  %v220 = vadd.f32 %v52, %v219
  %v221 = vpop.f32.mrf.mxu0
  %222 = vmatprep.mubr.bf16.mxu0 0
  %223 = vmatmul.mubr.bf16.gmra.mxu0 %v91
  %v224 = vpop.f32.mrf.mxu0
  %v225 = vadd.f32 %v52, %v224
  %v226 = vpop.f32.mrf.mxu0
  %v227 = vpop.f32.mrf.mxu0
  %v228 = vadd.f32 %v52, %v227
  %v229 = vpop.f32.mrf.mxu0
  %230 = vmatprep.mubr.bf16.mxu0 0
  %231 = vmatmul.mubr.bf16.gmra.mxu0 %v92
  %v232 = vpop.f32.mrf.mxu0
  %v233 = vadd.f32 %v52, %v232
  %v234 = vpop.f32.mrf.mxu0
  %v235 = vpop.f32.mrf.mxu0
  %v236 = vadd.f32 %v52, %v235
  %v237 = vpop.f32.mrf.mxu0
  %238 = vmatprep.mubr.bf16.mxu0 0
  %239 = vmatmul.mubr.bf16.gmra.mxu0 %v93
  %v240 = vpop.f32.mrf.mxu0
  %v241 = vadd.f32 %v52, %v240
  %v242 = vpop.f32.mrf.mxu0
  %v243 = vpop.f32.mrf.mxu0
  %v244 = vadd.f32 %v52, %v243
  %v245 = vpop.f32.mrf.mxu0
  %246 = vdwg.mxu0
  %v247 = vmax.f32 %v185, 0.0
  %v248 = vmax.f32 %v188, 0.0
  %v249 = vmax.f32 %v193, 0.0
  %v250 = vmax.f32 %v196, 0.0
  %v251 = vmax.f32 %v201, 0.0
  %v252 = vmax.f32 %v204, 0.0
  %v253 = vmax.f32 %v209, 0.0
  %v254 = vmax.f32 %v212, 0.0
  %v255 = vmax.f32 %v217, 0.0
  %v256 = vmax.f32 %v220, 0.0
  %v257 = vmax.f32 %v225, 0.0
  %v258 = vmax.f32 %v228, 0.0
  %v259 = vmax.f32 %v233, 0.0
  %v260 = vmax.f32 %v236, 0.0
  %v261 = vmax.f32 %v241, 0.0
  %v262 = vmax.f32 %v244, 0.0
  %v263 = vpack.c.bf16 %v248, %v247
  %v264 = vpack.c.bf16 %v250, %v249
  %v265 = vpack.c.bf16 %v252, %v251
  %v266 = vpack.c.bf16 %v254, %v253
  %v267 = vpack.c.bf16 %v256, %v255
  %v268 = vpack.c.bf16 %v258, %v257
  %v269 = vpack.c.bf16 %v260, %v259
  %v270 = vpack.c.bf16 %v262, %v261
  %v279 = vunpack.c.l.b16 %v263
  %v280 = vunpack.c.h.b16 %v263
  %v281 = vunpack.c.l.b16 %v264
  %v282 = vunpack.c.h.b16 %v264
  %v283 = vunpack.c.l.b16 %v265
  %v284 = vunpack.c.h.b16 %v265
  %v285 = vunpack.c.l.b16 %v266
  %v286 = vunpack.c.h.b16 %v266
  %v287 = vunpack.c.l.b16 %v267
  %v288 = vunpack.c.h.b16 %v267
  %v289 = vunpack.c.l.b16 %v268
  %v290 = vunpack.c.h.b16 %v268
  %v291 = vunpack.c.l.b16 %v269
  %v292 = vunpack.c.h.b16 %v269
  %v293 = vunpack.c.l.b16 %v270
  %v294 = vunpack.c.h.b16 %v270
  %v295 = vpack.c.b16 %v279, %v279
  %v296 = vpack.c.b16 %v280, %v280
  %v297 = vpack.c.b16 %v281, %v281
  %v298 = vpack.c.b16 %v282, %v282
  %v299 = vpack.c.b16 %v283, %v283
  %v300 = vpack.c.b16 %v284, %v284
  %v301 = vpack.c.b16 %v285, %v285
  %v302 = vpack.c.b16 %v286, %v286
  %v303 = vpack.c.b16 %v287, %v287
  %v304 = vpack.c.b16 %v288, %v288
  %v305 = vpack.c.b16 %v289, %v289
  %v306 = vpack.c.b16 %v290, %v290
  %v307 = vpack.c.b16 %v291, %v291
  %v308 = vpack.c.b16 %v292, %v292
  %v309 = vpack.c.b16 %v293, %v293
  %v310 = vpack.c.b16 %v294, %v294
  %327 = vst [vmem:[%s3] sm:$0xf] %v295
  %328 = vst [vmem:[%s3 + $0x4] sm:$0xf] %v296
  %329 = vst [vmem:[%s3 + $0x8] sm:$0xf] %v297
  %330 = vst [vmem:[%s3 + $0xc] sm:$0xf] %v298
  %331 = vst [vmem:[%s3 + $0x10] sm:$0xf] %v299
  %332 = vst [vmem:[%s3 + $0x14] sm:$0xf] %v300
  %333 = vst [vmem:[%s3 + $0x18] sm:$0xf] %v301
  %334 = vst [vmem:[%s3 + $0x1c] sm:$0xf] %v302
  %335 = vst [vmem:[%s3 + $0x20] sm:$0xf] %v303
  %336 = vst [vmem:[%s3 + $0x24] sm:$0xf] %v304
  %337 = vst [vmem:[%s3 + $0x28] sm:$0xf] %v305
  %338 = vst [vmem:[%s3 + $0x2c] sm:$0xf] %v306
  %339 = vst [vmem:[%s3 + $0x30] sm:$0xf] %v307
  %340 = vst [vmem:[%s3 + $0x34] sm:$0xf] %v308
  %341 = vst [vmem:[%s3 + $0x38] sm:$0xf] %v309
  %342 = vst [vmem:[%s3 + $0x3c] sm:$0xf] %v310
  // Predicated region
  $region14: #{vae_forward.16} parent=0 // pred_check
    _
  $region15: #{vae_forward.16} parent=0 // pred_check_branch
    %344 = sbr.rel (0) target = $region17
  $region16: #{vae_forward.16} parent=0 // pred_region
    _
  $region17: #{vae_forward.16} parent=0 // pred_fallthru
    _
  // Predicated region
  $region18: #{vae_forward.16} parent=0 // pred_check
    _
  $region19: #{vae_forward.16} parent=0 // pred_check_branch
    %346 = sbr.rel (0) target = $region21
  $region20: #{vae_forward.16} parent=0 // pred_region
    _
  $region21: #{vae_forward.16} parent=0 // pred_fallthru
    _

// kernel: vae_forward.17
$region0: #{vae_forward.17}
  #allocation0 [shape = 'u32[]', space=smem, size = 0x4, offset = 0x4, fixed_abs, tag = 'smem constant byte address 0x4 - core index']
  #allocation1 [shape = 'u32[144,128]{1,0:T(1,128)}', space=vmem, size = 0x12000, scoped, tag = 'internal scratch']
  %s0 = inlined_call_operand.vmem [shape: bf16[512,64], index: 0, kind: input, shape index: {}]
  %s1 = inlined_call_operand.vmem [shape: bf16[64,128], index: 1, kind: input, shape index: {}]
  %s2 = inlined_call_operand.vmem [shape: f32[1,128], index: 2, kind: input, shape index: {}]
  %s3 = inlined_call_operand.vmem [shape: f32[512,128], index: 3, kind: output, shape index: {}]
  %s4 = sld [smem:[#allocation0]]
  $region45: #{vae_forward.17} parent=0
    _
  %s6 = ssub.s32 1, %s4
  %s7 = scalar_select 0, %s6, %s4
  loop: start=0, step=1, limit=4
  $region2: #{vae_forward.17} parent=0 // loop_pre_header
    _
  $region3: #{vae_forward.17} parent=0 // loop_header
    %s9 = sphi 0, %s13
    %p10 = scmp.ge.s32.totalorder %s9, 4
    %s19 = sphi 0, %s21
    %s22 = sphi 0, %s19
    %s23 = sphi 0, %s22
    %s39 = sphi 0, %s23
    %s43 = sphi 0, %s43
    %s45 = sphi 0, %s43
    %s46 = sphi 0, %s45
    %s60 = sphi 0, %s46
    %s64 = sphi 0, %s64
    %s66 = sphi 0, %s64
    %s67 = sphi 0, %s66
    %s81 = sphi 0, %s67
    %s87 = sphi 0, %s89
    %s90 = sphi 0, %s87
    %s91 = sphi 0, %s90
    %s107 = sphi 0, %s91
  $region4: #{vae_forward.17} parent=0 // loop_header_branch
    %12 = sbr.rel (%p10) target = $region8
  $region5: #{vae_forward.17} parent=0 // loop_body
    %s14 = ssub.s32 %s9, 1
    %s15 = ssub.s32 %s9, 2
    %s16 = sadd.s32 %s9, 1
    %s17 = ssub.s32 %s9, %s16
    %p18 = scmp.eq.s32.totalorder %s17, 0
    %s20 = sadd.s32 %s19, 1
    %s21 = scalar_select %p18, %s19, %s20
    %p24 = pneg %p18
    %p25 = scmp.eq.s32.totalorder %s9, 1
    %p26 = por %p24, %p25
    %p27 = scmp.ne.s32.totalorder %s19, %s22
    %p28 = scmp.eq.s32.totalorder %s9, 0
    %p29 = por %p27, %p28
    %p30 = scmp.ne.s32.totalorder %s19, %s22
    %p31 = scmp.eq.s32.totalorder %s14, 1
    %p32 = por %p30, %p31
    %p33 = scmp.ne.s32.totalorder %s22, %s23
    %p34 = scmp.eq.s32.totalorder %s14, 0
    %p35 = por %p33, %p34
    %p36 = scmp.ne.s32.totalorder %s22, %s23
    %p37 = scmp.eq.s32.totalorder %s15, 1
    %p38 = por %p36, %p37
    %p40 = scmp.ne.s32.totalorder %s23, %s39
    %p41 = scmp.eq.s32.totalorder %s15, 0
    %p42 = por %p40, %p41
    %s44 = sadd.s32 %s43, 1
    %p47 = scmp.eq.s32.totalorder %s9, 1
    %p48 = scmp.ne.s32.totalorder %s43, %s45
    %p49 = scmp.eq.s32.totalorder %s9, 0
    %p50 = por %p48, %p49
    %p51 = scmp.ne.s32.totalorder %s43, %s45
    %p52 = scmp.eq.s32.totalorder %s14, 1
    %p53 = por %p51, %p52
    %p54 = scmp.ne.s32.totalorder %s45, %s46
    %p55 = scmp.eq.s32.totalorder %s14, 0
    %p56 = por %p54, %p55
    %p57 = scmp.ne.s32.totalorder %s45, %s46
    %p58 = scmp.eq.s32.totalorder %s15, 1
    %p59 = por %p57, %p58
    %p61 = scmp.ne.s32.totalorder %s46, %s60
    %p62 = scmp.eq.s32.totalorder %s15, 0
    %p63 = por %p61, %p62
    %s65 = sadd.s32 %s64, 1
    %p68 = scmp.eq.s32.totalorder %s9, 1
    %p69 = scmp.ne.s32.totalorder %s64, %s66
    %p70 = scmp.eq.s32.totalorder %s9, 0
    %p71 = por %p69, %p70
    %p72 = scmp.ne.s32.totalorder %s64, %s66
    %p73 = scmp.eq.s32.totalorder %s14, 1
    %p74 = por %p72, %p73
    %p75 = scmp.ne.s32.totalorder %s66, %s67
    %p76 = scmp.eq.s32.totalorder %s14, 0
    %p77 = por %p75, %p76
    %p78 = scmp.ne.s32.totalorder %s66, %s67
    %p79 = scmp.eq.s32.totalorder %s15, 1
    %p80 = por %p78, %p79
    %p82 = scmp.ne.s32.totalorder %s67, %s81
    %p83 = scmp.eq.s32.totalorder %s15, 0
    %p84 = por %p82, %p83
    %s85 = ssub.s32 %s9, %s16
    %p86 = scmp.eq.s32.totalorder %s85, 0
    %s88 = sadd.s32 %s87, 1
    %s89 = scalar_select %p86, %s87, %s88
    %p92 = pneg %p86
    %p93 = scmp.eq.s32.totalorder %s9, 1
    %p94 = por %p92, %p93
    %p95 = scmp.ne.s32.totalorder %s87, %s90
    %p96 = scmp.eq.s32.totalorder %s9, 0
    %p97 = por %p95, %p96
    %p98 = scmp.ne.s32.totalorder %s87, %s90
    %p99 = scmp.eq.s32.totalorder %s14, 1
    %p100 = por %p98, %p99
    %p101 = scmp.ne.s32.totalorder %s90, %s91
    %p102 = scmp.eq.s32.totalorder %s14, 0
    %p103 = por %p101, %p102
    %p104 = scmp.ne.s32.totalorder %s90, %s91
    %p105 = scmp.eq.s32.totalorder %s15, 1
    %p106 = por %p104, %p105
    %p108 = scmp.ne.s32.totalorder %s91, %s107
    %p109 = scmp.eq.s32.totalorder %s15, 0
    %p110 = por %p108, %p109
    %p111 = scmp.le.s32.totalorder 1, %s9
    %p112 = scmp.lt.s32.totalorder %s9, 3
    %p113 = pnand %p111, %p112
    %p114 = pneg %p113
    // Predicated region
    $region9: #{vae_forward.17} parent=5 // pred_check
      _
    $region10: #{vae_forward.17} parent=5 // pred_check_branch
      %116 = sbr.rel (%p113) target = $region12
    $region11: #{vae_forward.17} parent=5 // pred_region
      %s117 = ssub.s32 %s9, 1
      // Predicated region
      $region13: #{vae_forward.17} parent=11 // pred_check
        %p118 = pneg %p56
      $region14: #{vae_forward.17} parent=11 // pred_check_branch
        %120 = sbr.rel (%p118) target = $region16
      $region15: #{vae_forward.17} parent=11 // pred_region
        _
      $region16: #{vae_forward.17} parent=11 // pred_fallthru
        _
      // Predicated region
      $region17: #{vae_forward.17} parent=11 // pred_check
        %p121 = pneg %p77
      $region18: #{vae_forward.17} parent=11 // pred_check_branch
        %123 = sbr.rel (%p121) target = $region20
      $region19: #{vae_forward.17} parent=11 // pred_region
        _
      $region20: #{vae_forward.17} parent=11 // pred_fallthru
        _
    $region12: #{vae_forward.17} parent=5 // pred_fallthru
      _
    %p124 = scmp.lt.s32.totalorder %s9, 2
    // Predicated region
    $region21: #{vae_forward.17} parent=5 // pred_check
      %p125 = pneg %p124
    $region22: #{vae_forward.17} parent=5 // pred_check_branch
      %127 = sbr.rel (%p125) target = $region24
    $region23: #{vae_forward.17} parent=5 // pred_region
      // Predicated region
      $region25: #{vae_forward.17} parent=23 // pred_check
        %p128 = pneg %p29
      $region26: #{vae_forward.17} parent=23 // pred_check_branch
        %130 = sbr.rel (%p128) target = $region28
      $region27: #{vae_forward.17} parent=23 // pred_region
        %s131 = smul.u32 32, %s9
        %p132 = scmp.lt.s32.totalorder %s131, 63
        %s133 = scalar_select %p132, %s131, 63
        %s134 = smul.addr %s133, 4
        %s135 = scalar_lea.vmem %s0, %s134
        %s136 = smul.u32 32, %s9
      $region28: #{vae_forward.17} parent=23 // pred_fallthru
        _
    $region24: #{vae_forward.17} parent=5 // pred_fallthru
      _
    %p137 = scmp.le.s32.totalorder 1, %s9
    %p138 = scmp.lt.s32.totalorder %s9, 3
    %p139 = pnand %p137, %p138
    %p140 = pneg %p139
    // Predicated region
    $region29: #{vae_forward.17} parent=5 // pred_check
      _
    $region30: #{vae_forward.17} parent=5 // pred_check_branch
      %142 = sbr.rel (%p139) target = $region32
    $region31: #{vae_forward.17} parent=5 // pred_region
      %s143 = ssub.s32 %s9, 1
      %s144 = smul.u32 32, %s14
      %p145 = scmp.lt.s32.totalorder %s144, 63
      %s146 = scalar_select %p145, %s144, 63
      %s147 = smul.addr %s146, 4
      %s148 = scalar_lea.vmem %s0, %s147
      %p149 = pneg %p35
      %p150 = pneg %p32
      %p151 = pneg %p56
      %p152 = pneg %p53
      %p153 = pneg %p77
      %p154 = pneg %p74
      %p155 = pneg %p103
      %p156 = pneg %p100
      %s157 = smul.u32 32, %s14
      %p158 = scmp.lt.s32.totalorder %s157, 63
      %s159 = scalar_select %p158, %s157, 63
      %s160 = smul.addr %s159, 8
      %s161 = scalar_lea.vmem %s3, %s160
      %s162 = smul.u32 32, %s14
      %p163 = scmp.lt.s32.totalorder %s162, 63
      %s164 = scalar_select %p163, %s162, 63
      %s165 = smul.addr %s164, 4
      %s166 = scalar_lea.vmem %s0, %s165
      %s167 = smul.u32 32, %s14
      %s168 = smul.u32 32, %s14
      %p169 = scmp.lt.s32.totalorder %s168, 63
      %s170 = scalar_select %p169, %s168, 63
      %s171 = smul.addr %s170, 8
      %s172 = scalar_lea.vmem %s3, %s171
      %s173 = smul.u32 32, %s14
      %v175 = vld [vmem:[%s166] sm:$0xf]
      %v176 = vld [vmem:[%s166 + $0x4] sm:$0xf]
      %v177 = vld [vmem:[%s166 + $0x8] sm:$0xf]
      %v178 = vld [vmem:[%s166 + $0xc] sm:$0xf]
      %v179 = vld [vmem:[%s166 + $0x10] sm:$0xf]
      %v180 = vld [vmem:[%s166 + $0x14] sm:$0xf]
      %v181 = vld [vmem:[%s166 + $0x18] sm:$0xf]
      %v182 = vld [vmem:[%s166 + $0x1c] sm:$0xf]
      %v183 = vld [vmem:[%s166 + $0x20] sm:$0xf]
      %v184 = vld [vmem:[%s166 + $0x24] sm:$0xf]
      %v185 = vld [vmem:[%s166 + $0x28] sm:$0xf]
      %v186 = vld [vmem:[%s166 + $0x2c] sm:$0xf]
      %v187 = vld [vmem:[%s166 + $0x30] sm:$0xf]
      %v188 = vld [vmem:[%s166 + $0x34] sm:$0xf]
      %v189 = vld [vmem:[%s166 + $0x38] sm:$0xf]
      %v190 = vld [vmem:[%s166 + $0x3c] sm:$0xf]
      %v191 = vld [vmem:[%s166 + $0x40] sm:$0xf]
      %v192 = vld [vmem:[%s166 + $0x44] sm:$0xf]
      %v193 = vld [vmem:[%s166 + $0x48] sm:$0xf]
      %v194 = vld [vmem:[%s166 + $0x4c] sm:$0xf]
      %v195 = vld [vmem:[%s166 + $0x50] sm:$0xf]
      %v196 = vld [vmem:[%s166 + $0x54] sm:$0xf]
      %v197 = vld [vmem:[%s166 + $0x58] sm:$0xf]
      %v198 = vld [vmem:[%s166 + $0x5c] sm:$0xf]
      %v199 = vld [vmem:[%s166 + $0x60] sm:$0xf]
      %v200 = vld [vmem:[%s166 + $0x64] sm:$0xf]
      %v201 = vld [vmem:[%s166 + $0x68] sm:$0xf]
      %v202 = vld [vmem:[%s166 + $0x6c] sm:$0xf]
      %v203 = vld [vmem:[%s166 + $0x70] sm:$0xf]
      %v204 = vld [vmem:[%s166 + $0x74] sm:$0xf]
      %v205 = vld [vmem:[%s166 + $0x78] sm:$0xf]
      %v206 = vld [vmem:[%s166 + $0x7c] sm:$0xf]
      %v207 = vld [vmem:[%s1] sm:$0xf]
      %v208 = vld [vmem:[%s1 + $0x4] sm:$0xf]
      %v209 = vld [vmem:[%s1 + $0x8] sm:$0xf]
      %v210 = vld [vmem:[%s1 + $0xc] sm:$0xf]
      %v211 = vld [vmem:[%s1 + $0x10] sm:$0xf]
      %v212 = vld [vmem:[%s1 + $0x14] sm:$0xf]
      %v213 = vld [vmem:[%s1 + $0x18] sm:$0xf]
      %v214 = vld [vmem:[%s1 + $0x1c] sm:$0xf]
      %v215 = vld [vmem:[%s2] sm:$0x1]
      %v217 = vlaneseq
      %v218 = vshrl.u32 %v217, 7
      %v219 = vsub.s32 0, %v218
      %v220 = vrot.slane %v215, %v219
      %v254 = vunpack.c.l.b16 %v175
      %v255 = vunpack.c.l.b16 %v176
      %v256 = vunpack.c.l.b16 %v177
      %v257 = vunpack.c.l.b16 %v178
      %v258 = vunpack.c.l.b16 %v179
      %v259 = vunpack.c.l.b16 %v180
      %v260 = vunpack.c.l.b16 %v181
      %v261 = vunpack.c.l.b16 %v182
      %v262 = vunpack.c.l.b16 %v183
      %v263 = vunpack.c.l.b16 %v184
      %v264 = vunpack.c.l.b16 %v185
      %v265 = vunpack.c.l.b16 %v186
      %v266 = vunpack.c.l.b16 %v187
      %v267 = vunpack.c.l.b16 %v188
      %v268 = vunpack.c.l.b16 %v189
      %v269 = vunpack.c.l.b16 %v190
      %v270 = vunpack.c.l.b16 %v191
      %v271 = vunpack.c.l.b16 %v192
      %v272 = vunpack.c.l.b16 %v193
      %v273 = vunpack.c.l.b16 %v194
      %v274 = vunpack.c.l.b16 %v195
      %v275 = vunpack.c.l.b16 %v196
      %v276 = vunpack.c.l.b16 %v197
      %v277 = vunpack.c.l.b16 %v198
      %v278 = vunpack.c.l.b16 %v199
      %v279 = vunpack.c.l.b16 %v200
      %v280 = vunpack.c.l.b16 %v201
      %v281 = vunpack.c.l.b16 %v202
      %v282 = vunpack.c.l.b16 %v203
      %v283 = vunpack.c.l.b16 %v204
      %v284 = vunpack.c.l.b16 %v205
      %v285 = vunpack.c.l.b16 %v206
      %v286 = vpack.c.b16 %v255, %v254
      %v287 = vpack.c.b16 %v257, %v256
      %v288 = vpack.c.b16 %v259, %v258
      %v289 = vpack.c.b16 %v261, %v260
      %v290 = vpack.c.b16 %v263, %v262
      %v291 = vpack.c.b16 %v265, %v264
      %v292 = vpack.c.b16 %v267, %v266
      %v293 = vpack.c.b16 %v269, %v268
      %v294 = vpack.c.b16 %v271, %v270
      %v295 = vpack.c.b16 %v273, %v272
      %v296 = vpack.c.b16 %v275, %v274
      %v297 = vpack.c.b16 %v277, %v276
      %v298 = vpack.c.b16 %v279, %v278
      %v299 = vpack.c.b16 %v281, %v280
      %v300 = vpack.c.b16 %v283, %v282
      %v301 = vpack.c.b16 %v285, %v284
      %v310 = vunpack.c.l.b16 %v207
      %v311 = vunpack.c.l.b16 %v208
      %v312 = vunpack.c.l.b16 %v209
      %v313 = vunpack.c.l.b16 %v210
      %v314 = vunpack.c.l.b16 %v211
      %v315 = vunpack.c.l.b16 %v212
      %v316 = vunpack.c.l.b16 %v213
      %v317 = vunpack.c.l.b16 %v214
      %v318 = vpack.c.b16 %v311, %v310
      %v319 = vpack.c.b16 %v313, %v312
      %v320 = vpack.c.b16 %v315, %v314
      %v321 = vpack.c.b16 %v317, %v316
      %vm326 = vcmask 523264
      %v328 = vsel %vm326, %v286, 0
      %v331 = vsel %vm326, %v287, 0
      %v334 = vsel %vm326, %v288, 0
      %v337 = vsel %vm326, %v289, 0
      %v340 = vsel %vm326, %v290, 0
      %v343 = vsel %vm326, %v291, 0
      %v346 = vsel %vm326, %v292, 0
      %v349 = vsel %vm326, %v293, 0
      %v352 = vsel %vm326, %v294, 0
      %v355 = vsel %vm326, %v295, 0
      %v358 = vsel %vm326, %v296, 0
      %v361 = vsel %vm326, %v297, 0
      %v364 = vsel %vm326, %v298, 0
      %v367 = vsel %vm326, %v299, 0
      %v370 = vsel %vm326, %v300, 0
      %v373 = vsel %vm326, %v301, 0
      %375 = vmatprep.subr.bf16.mxu0 0
      %376 = vmatpush1.bf16.msra.mxu0 0
      %377 = vmatprep.subr.bf16.mxu0 0
      %378 = vmatpush1.bf16.msra.mxu0 0
      %379 = vmatprep.subr.bf16.mxu0 0
      %380 = vmatpush1.bf16.msra.mxu0 0
      %381 = vmatprep.subr.bf16.mxu0 0
      %382 = vmatpush1.bf16.msra.mxu0 0
      %383 = vmatprep.subr.bf16.mxu0 0
      %384 = vmatpush1.bf16.msra.mxu0 %v321
      %385 = vmatprep.subr.bf16.mxu0 0
      %386 = vmatpush1.bf16.msra.mxu0 %v320
      %387 = vmatprep.subr.bf16.mxu0 0
      %388 = vmatpush1.bf16.msra.mxu0 %v319
      %389 = vmatprep.subr.bf16.mxu0 0
      %390 = vmatpush1.bf16.msra.mxu0 %v318
      %391 = vmatprep.subr.bf16.mxu0 0
      %392 = vmatpush2.bf16.msra.mxu0 0
      %393 = vmatprep.subr.bf16.mxu0 0
      %394 = vmatpush2.bf16.msra.mxu0 0
      %395 = vmatprep.subr.bf16.mxu0 0
      %396 = vmatpush2.bf16.msra.mxu0 0
      %397 = vmatprep.subr.bf16.mxu0 0
      %398 = vmatpush2.bf16.msra.mxu0 0
      %399 = vmatprep.subr.bf16.mxu0 0
      %400 = vmatpush2.bf16.msra.mxu0 0
      %401 = vmatprep.subr.bf16.mxu0 0
      %402 = vmatpush2.bf16.msra.mxu0 0
      %403 = vmatprep.subr.bf16.mxu0 0
      %404 = vmatpush2.bf16.msra.mxu0 0
      %405 = vmatprep.subr.bf16.mxu0 0
      %406 = vmatpush2.bf16.msra.mxu0 0
      %407 = vmatprep.mubr.bf16.mxu0 0
      %408 = vmatmul.mubr.bf16.gmra.mxu0 %v328
      %v409 = vpop.f32.mrf.mxu0
      %v410 = vadd.f32 %v220, %v409
      %v411 = vpop.f32.mrf.mxu0
      %v412 = vpop.f32.mrf.mxu0
      %v413 = vadd.f32 %v220, %v412
      %v414 = vpop.f32.mrf.mxu0
      %415 = vmatprep.mubr.bf16.mxu0 0
      %416 = vmatmul.mubr.bf16.gmra.mxu0 %v331
      %v417 = vpop.f32.mrf.mxu0
      %v418 = vadd.f32 %v220, %v417
      %v419 = vpop.f32.mrf.mxu0
      %v420 = vpop.f32.mrf.mxu0
      %v421 = vadd.f32 %v220, %v420
      %v422 = vpop.f32.mrf.mxu0
      %423 = vmatprep.mubr.bf16.mxu0 0
      %424 = vmatmul.mubr.bf16.gmra.mxu0 %v334
      %v425 = vpop.f32.mrf.mxu0
      %v426 = vadd.f32 %v220, %v425
      %v427 = vpop.f32.mrf.mxu0
      %v428 = vpop.f32.mrf.mxu0
      %v429 = vadd.f32 %v220, %v428
      %v430 = vpop.f32.mrf.mxu0
      %431 = vmatprep.mubr.bf16.mxu0 0
      %432 = vmatmul.mubr.bf16.gmra.mxu0 %v337
      %v433 = vpop.f32.mrf.mxu0
      %v434 = vadd.f32 %v220, %v433
      %v435 = vpop.f32.mrf.mxu0
      %v436 = vpop.f32.mrf.mxu0
      %v437 = vadd.f32 %v220, %v436
      %v438 = vpop.f32.mrf.mxu0
      %439 = vmatprep.mubr.bf16.mxu0 0
      %440 = vmatmul.mubr.bf16.gmra.mxu0 %v340
      %v441 = vpop.f32.mrf.mxu0
      %v442 = vadd.f32 %v220, %v441
      %v443 = vpop.f32.mrf.mxu0
      %v444 = vpop.f32.mrf.mxu0
      %v445 = vadd.f32 %v220, %v444
      %v446 = vpop.f32.mrf.mxu0
      %447 = vmatprep.mubr.bf16.mxu0 0
      %448 = vmatmul.mubr.bf16.gmra.mxu0 %v343
      %v449 = vpop.f32.mrf.mxu0
      %v450 = vadd.f32 %v220, %v449
      %v451 = vpop.f32.mrf.mxu0
      %v452 = vpop.f32.mrf.mxu0
      %v453 = vadd.f32 %v220, %v452
      %v454 = vpop.f32.mrf.mxu0
      %455 = vmatprep.mubr.bf16.mxu0 0
      %456 = vmatmul.mubr.bf16.gmra.mxu0 %v346
      %v457 = vpop.f32.mrf.mxu0
      %v458 = vadd.f32 %v220, %v457
      %v459 = vpop.f32.mrf.mxu0
      %v460 = vpop.f32.mrf.mxu0
      %v461 = vadd.f32 %v220, %v460
      %v462 = vpop.f32.mrf.mxu0
      %463 = vmatprep.mubr.bf16.mxu0 0
      %464 = vmatmul.mubr.bf16.gmra.mxu0 %v349
      %v465 = vpop.f32.mrf.mxu0
      %v466 = vadd.f32 %v220, %v465
      %v467 = vpop.f32.mrf.mxu0
      %v468 = vpop.f32.mrf.mxu0
      %v469 = vadd.f32 %v220, %v468
      %v470 = vpop.f32.mrf.mxu0
      %471 = vmatprep.mubr.bf16.mxu0 0
      %472 = vmatmul.mubr.bf16.gmra.mxu0 %v352
      %v473 = vpop.f32.mrf.mxu0
      %v474 = vadd.f32 %v220, %v473
      %v475 = vpop.f32.mrf.mxu0
      %v476 = vpop.f32.mrf.mxu0
      %v477 = vadd.f32 %v220, %v476
      %v478 = vpop.f32.mrf.mxu0
      %479 = vmatprep.mubr.bf16.mxu0 0
      %480 = vmatmul.mubr.bf16.gmra.mxu0 %v355
      %v481 = vpop.f32.mrf.mxu0
      %v482 = vadd.f32 %v220, %v481
      %v483 = vpop.f32.mrf.mxu0
      %v484 = vpop.f32.mrf.mxu0
      %v485 = vadd.f32 %v220, %v484
      %v486 = vpop.f32.mrf.mxu0
      %487 = vmatprep.mubr.bf16.mxu0 0
      %488 = vmatmul.mubr.bf16.gmra.mxu0 %v358
      %v489 = vpop.f32.mrf.mxu0
      %v490 = vadd.f32 %v220, %v489
      %v491 = vpop.f32.mrf.mxu0
      %v492 = vpop.f32.mrf.mxu0
      %v493 = vadd.f32 %v220, %v492
      %v494 = vpop.f32.mrf.mxu0
      %495 = vmatprep.mubr.bf16.mxu0 0
      %496 = vmatmul.mubr.bf16.gmra.mxu0 %v361
      %v497 = vpop.f32.mrf.mxu0
      %v498 = vadd.f32 %v220, %v497
      %v499 = vpop.f32.mrf.mxu0
      %v500 = vpop.f32.mrf.mxu0
      %v501 = vadd.f32 %v220, %v500
      %v502 = vpop.f32.mrf.mxu0
      %503 = vmatprep.mubr.bf16.mxu0 0
      %504 = vmatmul.mubr.bf16.gmra.mxu0 %v364
      %v505 = vpop.f32.mrf.mxu0
      %v506 = vadd.f32 %v220, %v505
      %v507 = vpop.f32.mrf.mxu0
      %v508 = vpop.f32.mrf.mxu0
      %v509 = vadd.f32 %v220, %v508
      %v510 = vpop.f32.mrf.mxu0
      %511 = vmatprep.mubr.bf16.mxu0 0
      %512 = vmatmul.mubr.bf16.gmra.mxu0 %v367
      %v513 = vpop.f32.mrf.mxu0
      %v514 = vadd.f32 %v220, %v513
      %v515 = vpop.f32.mrf.mxu0
      %v516 = vpop.f32.mrf.mxu0
      %v517 = vadd.f32 %v220, %v516
      %v518 = vpop.f32.mrf.mxu0
      %519 = vmatprep.mubr.bf16.mxu0 0
      %520 = vmatmul.mubr.bf16.gmra.mxu0 %v370
      %v521 = vpop.f32.mrf.mxu0
      %v522 = vadd.f32 %v220, %v521
      %v523 = vpop.f32.mrf.mxu0
      %v524 = vpop.f32.mrf.mxu0
      %v525 = vadd.f32 %v220, %v524
      %v526 = vpop.f32.mrf.mxu0
      %527 = vmatprep.mubr.bf16.mxu0 0
      %528 = vmatmul.mubr.bf16.gmra.mxu0 %v373
      %v529 = vpop.f32.mrf.mxu0
      %v530 = vadd.f32 %v220, %v529
      %v531 = vpop.f32.mrf.mxu0
      %v532 = vpop.f32.mrf.mxu0
      %v533 = vadd.f32 %v220, %v532
      %v534 = vpop.f32.mrf.mxu0
      %535 = vdwg.mxu0
      %536 = vst [vmem:[%s172] sm:$0xff] %v410
      %537 = vst [vmem:[%s172 + $0x8] sm:$0xff] %v413
      %538 = vst [vmem:[%s172 + $0x10] sm:$0xff] %v418
      %539 = vst [vmem:[%s172 + $0x18] sm:$0xff] %v421
      %540 = vst [vmem:[%s172 + $0x20] sm:$0xff] %v426
      %541 = vst [vmem:[%s172 + $0x28] sm:$0xff] %v429
      %542 = vst [vmem:[%s172 + $0x30] sm:$0xff] %v434
      %543 = vst [vmem:[%s172 + $0x38] sm:$0xff] %v437
      %544 = vst [vmem:[%s172 + $0x40] sm:$0xff] %v442
      %545 = vst [vmem:[%s172 + $0x48] sm:$0xff] %v445
      %546 = vst [vmem:[%s172 + $0x50] sm:$0xff] %v450
      %547 = vst [vmem:[%s172 + $0x58] sm:$0xff] %v453
      %548 = vst [vmem:[%s172 + $0x60] sm:$0xff] %v458
      %549 = vst [vmem:[%s172 + $0x68] sm:$0xff] %v461
      %550 = vst [vmem:[%s172 + $0x70] sm:$0xff] %v466
      %551 = vst [vmem:[%s172 + $0x78] sm:$0xff] %v469
      %552 = vst [vmem:[%s172 + $0x80] sm:$0xff] %v474
      %553 = vst [vmem:[%s172 + $0x88] sm:$0xff] %v477
      %554 = vst [vmem:[%s172 + $0x90] sm:$0xff] %v482
      %555 = vst [vmem:[%s172 + $0x98] sm:$0xff] %v485
      %556 = vst [vmem:[%s172 + $0xa0] sm:$0xff] %v490
      %557 = vst [vmem:[%s172 + $0xa8] sm:$0xff] %v493
      %558 = vst [vmem:[%s172 + $0xb0] sm:$0xff] %v498
      %559 = vst [vmem:[%s172 + $0xb8] sm:$0xff] %v501
      %560 = vst [vmem:[%s172 + $0xc0] sm:$0xff] %v506
      %561 = vst [vmem:[%s172 + $0xc8] sm:$0xff] %v509
      %562 = vst [vmem:[%s172 + $0xd0] sm:$0xff] %v514
      %563 = vst [vmem:[%s172 + $0xd8] sm:$0xff] %v517
      %564 = vst [vmem:[%s172 + $0xe0] sm:$0xff] %v522
      %565 = vst [vmem:[%s172 + $0xe8] sm:$0xff] %v525
      %566 = vst [vmem:[%s172 + $0xf0] sm:$0xff] %v530
      %567 = vst [vmem:[%s172 + $0xf8] sm:$0xff] %v533
      %s568 = smul.u32 32, %s14
      %p569 = scmp.lt.s32.totalorder %s568, 63
      %s570 = scalar_select %p569, %s568, 63
      %s571 = smul.addr %s570, 8
      %s572 = scalar_lea.vmem %s3, %s571
      // Predicated region
      $region33: #{vae_forward.17} parent=31 // pred_check
        %p573 = pneg %p100
      $region34: #{vae_forward.17} parent=31 // pred_check_branch
        %575 = sbr.rel (%p573) target = $region36
      $region35: #{vae_forward.17} parent=31 // pred_region
        %s576 = smul.u32 32, %s14
      $region36: #{vae_forward.17} parent=31 // pred_fallthru
        _
    $region32: #{vae_forward.17} parent=5 // pred_fallthru
      _
    %p577 = scmp.le.s32.totalorder 2, %s9
    // Predicated region
    $region37: #{vae_forward.17} parent=5 // pred_check
      %p578 = pneg %p577
    $region38: #{vae_forward.17} parent=5 // pred_check_branch
      %580 = sbr.rel (%p578) target = $region40
    $region39: #{vae_forward.17} parent=5 // pred_region
      %s581 = ssub.s32 %s9, 2
      // Predicated region
      $region41: #{vae_forward.17} parent=39 // pred_check
        %p582 = pneg %p106
      $region42: #{vae_forward.17} parent=39 // pred_check_branch
        %584 = sbr.rel (%p582) target = $region44
      $region43: #{vae_forward.17} parent=39 // pred_region
        %s585 = smul.u32 32, %s15
        %p586 = scmp.lt.s32.totalorder %s585, 63
        %s587 = scalar_select %p586, %s585, 63
        %s588 = smul.addr %s587, 8
        %s589 = scalar_lea.vmem %s3, %s588
      $region44: #{vae_forward.17} parent=39 // pred_fallthru
        _
    $region40: #{vae_forward.17} parent=5 // pred_fallthru
      _
  $region6: #{vae_forward.17} parent=0 // loop_footer
    %s13 = sadd.s32 1, %s9
  $region7: #{vae_forward.17} parent=0 // loop_footer_branch
    %8 = sbr.rel target = $region3
  $region8: #{vae_forward.17} parent=0 // loop_exit
    _

</llo_original>
